<compile_context>
chip_gen: v7x
topology: tpu7x:2x2x1
jax: 0.10.0
libtpu: 0.0.40
codegen_flags: <defaults>
</compile_context>

<pallas_src>
import functools

import jax
import jax.numpy as jnp
from jax import lax
from jax.experimental import pallas as pl
from jax.experimental.pallas import tpu as pltpu
import numpy as np


# ------------------------ generation-aware budgets ---------------------------

def _tpu_config():
    """(vmem_limit_bytes, matmul_tile_cap) for the local TPU generation.

    v5e/v6e: 128 MiB VMEM per TensorCore -> large scoped budget + 1024 tiles.
    v7x:      64 MiB per TensorCore       -> ~20% headroom + 512 tiles.
    Falls back to the conservative (v7x-safe) setting if the query fails.
    """
    vmem_phys = 64 * 1024 * 1024
    try:
        vmem_phys = int(pltpu.get_tpu_info().vmem_capacity_bytes)
    except Exception:
        pass
    if vmem_phys >= 96 * 1024 * 1024:
        return min(int(vmem_phys * 0.85), 108 * 1024 * 1024), 1024
    return min(int(vmem_phys * 0.80), 52 * 1024 * 1024), 512


_VMEM_LIMIT, _TILE_CAP = _tpu_config()


# --------------------- fused 1x1-conv (matmul) kernels -----------------------

def _mm_kernel_single(x_ref, w_ref, b_ref, o_ref, *, relu):
    """Single-K-step: o = [relu](x @ w + bias).  No accumulator scratch."""
    y = jnp.dot(x_ref[...], w_ref[...], preferred_element_type=jnp.float32)
    y = y + b_ref[...]
    if relu:
        y = jnp.maximum(y, 0.0)
    o_ref[...] = y.astype(o_ref.dtype)


def _mm_res_kernel_single(x_ref, w_ref, b_ref, r_ref, o_ref, *, relu):
    """Single-K-step with residual: o = [relu](x @ w + bias + residual)."""
    y = jnp.dot(x_ref[...], w_ref[...], preferred_element_type=jnp.float32)
    y = y + b_ref[...] + r_ref[...].astype(jnp.float32)
    if relu:
        y = jnp.maximum(y, 0.0)
    o_ref[...] = y.astype(o_ref.dtype)


def _mm_kernel_multi(x_ref, w_ref, b_ref, o_ref, acc_ref, *, relu):
    """K-tiled: acc += x @ w over the K grid axis; epilogue on the last step."""
    @pl.when(pl.program_id(2) == 0)
    def _():
        acc_ref[...] = jnp.zeros_like(acc_ref)

    acc_ref[...] += jnp.dot(x_ref[...], w_ref[...],
                            preferred_element_type=jnp.float32)

    @pl.when(pl.program_id(2) == pl.num_programs(2) - 1)
    def _():
        y = acc_ref[...] + b_ref[...]
        if relu:
            y = jnp.maximum(y, 0.0)
        o_ref[...] = y.astype(o_ref.dtype)


def _mm_res_kernel_multi(x_ref, w_ref, b_ref, r_ref, o_ref, acc_ref, *, relu):
    """K-tiled with residual add in the epilogue (relu flag honored)."""
    @pl.when(pl.program_id(2) == 0)
    def _():
        acc_ref[...] = jnp.zeros_like(acc_ref)

    acc_ref[...] += jnp.dot(x_ref[...], w_ref[...],
                            preferred_element_type=jnp.float32)

    @pl.when(pl.program_id(2) == pl.num_programs(2) - 1)
    def _():
        y = acc_ref[...] + b_ref[...] + r_ref[...].astype(jnp.float32)
        if relu:
            y = jnp.maximum(y, 0.0)
        o_ref[...] = y.astype(o_ref.dtype)


def _pick_tk(k, cap):
    """K (contraction) tile.  Single step when K fits (removes accumulator
    traffic entirely); otherwise an exact divisor (partial K blocks would
    corrupt the contraction)."""
    if k <= 2048:
        return k
    for t in (cap, 1024, 512, 256, 128):
        if t <= cap and k % t == 0:
            return t
    return k  # huge non-divisible K: single step; tm is shrunk by the caller


def matmul_bias(x2d, w_scaled, bias, *, relu, residual=None, compute_dtype=None):
    """Fused (x @ w_scaled) + bias [+ residual] [relu].

    BN scale is pre-folded into w_scaled by the caller.  M/N may use partial
    (cdiv) blocks -- rows/cols are independent and OOB output is masked on the
    write -- so no jnp.pad copies are made.  K collapses to a single grid step
    whenever it fits, which is always the case for ResNet 1x1 convs."""
    M, K = x2d.shape
    K2, N = w_scaled.shape
    assert K == K2
    cap = _TILE_CAP

    tm = M if M <= cap else cap          # partial blocks OK (masked writes)
    tn = N if N <= cap else cap          # cap is a multiple of 128
    tk = _pick_tk(K, cap)

    if tk == K and K > 2048 and M > cap:
        # Full-K fallback for unusual channel counts: keep blocks inside the
        # scoped-VMEM budget (double-buffered inputs + output).
        while tm > 256 and 2 * 4 * (tm * K + K * tn + tm * tn) > _VMEM_LIMIT:
            tm //= 2

    gm, gn, gk = pl.cdiv(M, tm), pl.cdiv(N, tn), pl.cdiv(K, tk)

    xq = x2d.astype(compute_dtype) if compute_dtype is not None else x2d
    wq = (w_scaled.astype(compute_dtype) if compute_dtype is not None
          else w_scaled)
    b2 = bias.reshape(1, N).astype(jnp.float32)

    if gk == 1:
        grid = (gm, gn)
        in_specs = [
            pl.BlockSpec((tm, K), lambda i, j: (i, 0)),
            pl.BlockSpec((K, tn), lambda i, j: (0, j)),
            pl.BlockSpec((1, tn), lambda i, j: (0, j)),
        ]
        out_spec = pl.BlockSpec((tm, tn), lambda i, j: (i, j))
        args = [xq, wq, b2]
        scratch = []
        if residual is not None:
            in_specs.append(pl.BlockSpec((tm, tn), lambda i, j: (i, j)))
            args.append(residual)
            kernel = functools.partial(_mm_res_kernel_single, relu=relu)
        else:
            kernel = functools.partial(_mm_kernel_single, relu=relu)
        sem = ("parallel", "parallel")
    else:
        grid = (gm, gn, gk)
        in_specs = [
            pl.BlockSpec((tm, tk), lambda i, j, k: (i, k)),
            pl.BlockSpec((tk, tn), lambda i, j, k: (k, j)),
            pl.BlockSpec((1, tn), lambda i, j, k: (0, j)),
        ]
        out_spec = pl.BlockSpec((tm, tn), lambda i, j, k: (i, j))
        args = [xq, wq, b2]
        scratch = [pltpu.VMEM((tm, tn), jnp.float32)]
        if residual is not None:
            in_specs.append(pl.BlockSpec((tm, tn), lambda i, j, k: (i, j)))
            args.append(residual)
            kernel = functools.partial(_mm_res_kernel_multi, relu=relu)
        else:
            kernel = functools.partial(_mm_kernel_multi, relu=relu)
        sem = ("parallel", "parallel", "arbitrary")

    return pl.pallas_call(
        kernel,
        out_shape=jax.ShapeDtypeStruct((M, N), x2d.dtype),
        grid=grid,
        in_specs=in_specs,
        out_specs=out_spec,
        scratch_shapes=scratch,
        compiler_params=pltpu.CompilerParams(
            dimension_semantics=sem, vmem_limit_bytes=_VMEM_LIMIT),
    )(*args)


# -------------------- fused 3x3-conv + BN + ReLU kernel ----------------------

def _conv3x3_kernel(x_ref, w_ref, b_ref, o_ref, *, stride, Ho, Wo, C):
    """3x3 conv (+bias+relu) for one image and one output-channel block.

    x_ref : (1, Hp//s, s, Wp//s, s*C) -- bitcast-reshaped zero-padded plane.
            Tap (dy, dx) is a unit-stride window of phase (dy%s, dx%s):
            rows [dy//s, dy//s+Ho), cols [dx//s, dx//s+Wo), lanes
            [(dx%s)*C, (dx%s+1)*C).  No strided loads, no XLA phase planes.
    w_ref : (9, C, tco)    b_ref : (1, tco)    o_ref : (1, Ho*Wo, tco)
    The 9 taps accumulate into an f32 value chain; the first tap stores
    directly (no zero-init, no scratch RMW)."""
    s = stride
    acc = None
    for dy in range(3):
        qy, ry = divmod(dy, s)
        for dx in range(3):
            qx, rx = divmod(dx, s)
            xt = x_ref[0, qy:qy + Ho, ry, qx:qx + Wo, rx * C:(rx + 1) * C]
            xt = xt.reshape(Ho * Wo, C)
            d = jnp.dot(xt, w_ref[3 * dy + dx],
                        preferred_element_type=jnp.float32)
            acc = d if acc is None else acc + d
    y = jnp.maximum(acc + b_ref[...], 0.0)
    # NOTE: with Co < 128 (early ResNet stages) this store is lane-masked;
    # acceptable here since the kernel is bound by the 9 small matmuls.
    o_ref[...] = y[None].astype(o_ref.dtype)


def conv3x3_bn_relu(x_nhwc, w_hwio_scaled, bias, stride, *, compute_dtype=None):
    """3x3 conv (pad=1, stride) + folded-BN bias + ReLU -> (N, Ho*Wo, Co)."""
    N, H, W, C = x_nhwc.shape
    Co = w_hwio_scaled.shape[-1]
    s = stride
    Ho = (H - 1) // s + 1
    Wo = (W - 1) // s + 1

    # Zero-pad by 1 (conv padding) and round H/W up to a multiple of the
    # stride so the (h, w) -> (h//s, h%s, w//s, (w%s)*C) regrouping is a pure
    # row-major (bitcast) reshape: no phase-plane materialization in HBM.
    Hp = pl.cdiv(H + 2, s) * s
    Wp = pl.cdiv(W + 2, s) * s
    xp = jnp.pad(x_nhwc, ((0, 0), (1, Hp - H - 1), (1, Wp - W - 1), (0, 0)))
    xr = xp.reshape(N, Hp // s, s, Wp // s, s * C)   # free: row-major regroup

    w9 = w_hwio_scaled.reshape(9, C, Co)
    b2 = bias.reshape(1, Co).astype(jnp.float32)
    if compute_dtype is not None:
        xr = xr.astype(compute_dtype)
        w9 = w9.astype(compute_dtype)

    # Output channels as a second "parallel" grid axis: dual-TC sharding when
    # N is small/odd (v7x) and a cap on the per-step VMEM footprint.
    if Co <= 512:
        tco = Co
    elif Co % 512 == 0:
        tco = 512
    elif Co % 256 == 0:
        tco = 256
    elif Co % 128 == 0:
        tco = 128
    else:
        tco = Co
    nco = Co // tco

    kernel = functools.partial(_conv3x3_kernel, stride=s, Ho=Ho, Wo=Wo, C=C)
    return pl.pallas_call(
        kernel,
        out_shape=jax.ShapeDtypeStruct((N, Ho * Wo, Co), x_nhwc.dtype),
        grid=(N, nco),
        in_specs=[
            pl.BlockSpec((1, Hp // s, s, Wp // s, s * C),
                         lambda n, j: (n, 0, 0, 0, 0)),
            pl.BlockSpec((9, C, tco), lambda n, j: (0, 0, j)),
            pl.BlockSpec((1, tco), lambda n, j: (0, j)),
        ],
        out_specs=pl.BlockSpec((1, Ho * Wo, tco), lambda n, j: (n, 0, j)),
        compiler_params=pltpu.CompilerParams(
            dimension_semantics=("parallel", "parallel"),
            vmem_limit_bytes=_VMEM_LIMIT),
    )(xr, w9, b2)


# ----------------- strided 1x1 shortcut (projection) kernel ------------------

def _shortcut_kernel(x_ref, w_ref, b_ref, o_ref, *, Ho, Wo, C):
    """Strided 1x1 projection + folded-BN bias for one image.

    x_ref : (1, Ho, 1, Wo, s*C) -- the BlockSpec selects only the row-phase-0
            planes of the bitcast-reshaped input (strided DMA); the lane slice
            [:C] keeps the col-phase-0 channels.  No xs materialization."""
    xv = x_ref[0, :, 0, :, :C].reshape(Ho * Wo, C)
    y = jnp.dot(xv, w_ref[...], preferred_element_type=jnp.float32)
    y = y + b_ref[...]
    o_ref[...] = y[None].astype(o_ref.dtype)


def shortcut_proj(x_nhwc, w_scaled, bias, stride, *, compute_dtype=None):
    """Shortcut 1x1 conv (stride) + folded BN -> (N*Ho*Wo, Cexp), no ReLU."""
    N, H, W, C = x_nhwc.shape
    Cexp = w_scaled.shape[-1]
    s = stride
    Ho = (H - 1) // s + 1
    Wo = (W - 1) // s + 1

    if s == 1:  # unstrided projection: one big fused matmul
        return matmul_bias(x_nhwc.reshape(N * H * W, C), w_scaled, bias,
                           relu=False, compute_dtype=compute_dtype)

    Hc, Wc = Ho * s, Wo * s
    xp = x_nhwc
    if Hc != H or Wc != W:  # align to the stride for the bitcast regroup
        xp = jnp.pad(x_nhwc, ((0, 0), (0, Hc - H), (0, Wc - W), (0, 0)))
    xr = xp.reshape(N, Ho, s, Wo, s * C)             # free: row-major regroup

    wq = w_scaled
    if compute_dtype is not None:
        xr = xr.astype(compute_dtype)
        wq = wq.astype(compute_dtype)
    b2 = bias.reshape(1, Cexp).astype(jnp.float32)

    out = pl.pallas_call(
        functools.partial(_shortcut_kernel, Ho=Ho, Wo=Wo, C=C),
        out_shape=jax.ShapeDtypeStruct((N, Ho * Wo, Cexp), x_nhwc.dtype),
        grid=(N,),
        in_specs=[
            pl.BlockSpec((1, Ho, 1, Wo, s * C), lambda n: (n, 0, 0, 0, 0)),
            pl.BlockSpec((C, Cexp), lambda n: (0, 0)),
            pl.BlockSpec((1, Cexp), lambda n: (0, 0)),
        ],
        out_specs=pl.BlockSpec((1, Ho * Wo, Cexp), lambda n: (n, 0, 0)),
        compiler_params=pltpu.CompilerParams(
            dimension_semantics=("parallel",),
            vmem_limit_bytes=_VMEM_LIMIT),
    )(xr, wq, b2)
    return out.reshape(N * Ho * Wo, Cexp)


# --------------------------- BottleNeck forward -----------------------------

def bottleneck_forward(x_nchw, p, stride, compute_dtype=None):
    """Matches BottleNeck.forward (expansion=4), eval-mode BN.

    compute_dtype=jnp.bfloat16 is the recommended production setting on
    v6e/v7x (halves HBM traffic, ~2x MXU throughput; f32 accumulation kept);
    the default stays f32 so the rtol=1e-4 reference check passes."""
    x = jnp.transpose(x_nchw, (0, 2, 3, 1))   # NCHW -> NHWC (boundary glue)
    N, H, W, Cin = x.shape
    Cm = p["w1"].shape[1]
    Cexp = p["w3"].shape[1]
    Ho = (H - 1) // stride + 1
    Wo = (W - 1) // stride + 1

    # Fold BN scale into the conv weight columns (bias-only epilogue).
    w1s = p["w1"] * p["s1"][None, :]
    w2s = p["w2"] * p["s2"][None, None, None, :]
    w3s = p["w3"] * p["s3"][None, :]

    # conv1 (1x1) + bn1 + relu
    out1 = matmul_bias(x.reshape(N * H * W, Cin), w1s, p["b1"], relu=True,
                       compute_dtype=compute_dtype)
    out1 = out1.reshape(N, H, W, Cm)

    # conv2 (3x3, stride, pad=1) + bn2 + relu  (in-kernel 9-tap accumulation)
    out2 = conv3x3_bn_relu(out1, w2s, p["b2"], stride,
                           compute_dtype=compute_dtype)      # (N, Ho*Wo, Cm)
    out2 = out2.reshape(N * Ho * Wo, Cm)

    # shortcut: strided 1x1 conv + BN (projection) or identity
    if stride != 1 or Cin != Cexp:
        wss = p["ws"] * p["ss"][None, :]
        short = shortcut_proj(x, wss, p["bs"], stride,
                              compute_dtype=compute_dtype)   # (N*Ho*Wo, Cexp)
    else:
        short = x.reshape(N * Ho * Wo, Cin)

    # conv3 (1x1) + bn3 + residual add + final relu : fully fused kernel
    out3 = matmul_bias(out2, w3s, p["b3"], relu=True, residual=short,
                       compute_dtype=compute_dtype)

    out = out3.reshape(N, Ho, Wo, Cexp)
    return jnp.transpose(out, (0, 3, 1, 2))   # NHWC -> NCHW (boundary glue)


# ------------------------- reference (pure JAX/XLA) --------------------------

def ref_forward(x_nchw, p, stride):
    dn = ("NCHW", "HWIO", "NCHW")

    def bn(y, s, b):
        return y * s[None, :, None, None] + b[None, :, None, None]

    o = jax.nn.relu(bn(
        lax.conv_general_dilated(x_nchw, p["w1"][None, None], (1, 1), "VALID",
                                 dimension_numbers=dn), p["s1"], p["b1"]))
    o = jax.nn.relu(bn(
        lax.conv_general_dilated(o, p["w2"], (stride, stride),
                                 ((1, 1), (1, 1)), dimension_numbers=dn),
        p["s2"], p["b2"]))
    o = bn(
        lax.conv_general_dilated(o, p["w3"][None, None], (1, 1), "VALID",
                                 dimension_numbers=dn), p["s3"], p["b3"])
    if stride != 1 or x_nchw.shape[1] != p["w3"].shape[1]:
        sc = bn(
            lax.conv_general_dilated(x_nchw, p["ws"][None, None],
                                     (stride, stride), "VALID",
                                     dimension_numbers=dn), p["ss"], p["bs"])
    else:
        sc = x_nchw
    return jax.nn.relu(o + sc)


# ------------------------------ param init ----------------------------------

def _fold_bn(gamma, beta, mean, var, eps=1e-5):
    scale = gamma / jnp.sqrt(var + eps)
    bias = beta - mean * scale
    return scale, bias


def _bn_params(key, c):
    k1, k2, k3, k4 = jax.random.split(key, 4)
    gamma = jax.random.uniform(k1, (c,), minval=0.5, maxval=1.5)
    beta = 0.1 * jax.random.normal(k2, (c,))
    mean = 0.1 * jax.random.normal(k3, (c,))
    var = jax.random.uniform(k4, (c,), minval=0.5, maxval=1.5)
    return _fold_bn(gamma, beta, mean, var)


def make_params(key, in_channels, out_channels, stride, expansion=4):
    cexp = out_channels * expansion
    ks = jax.random.split(key, 8)
    p = {}
    p["w1"] = (jax.random.normal(ks[0], (in_channels, out_channels))
               / np.sqrt(in_channels)).astype(jnp.float32)
    p["s1"], p["b1"] = _bn_params(ks[1], out_channels)
    p["w2"] = (jax.random.normal(ks[2], (3, 3, out_channels, out_channels))
               / np.sqrt(9 * out_channels)).astype(jnp.float32)  # HWIO
    p["s2"], p["b2"] = _bn_params(ks[3], out_channels)
    p["w3"] = (jax.random.normal(ks[4], (out_channels, cexp))
               / np.sqrt(out_channels)).astype(jnp.float32)
    p["s3"], p["b3"] = _bn_params(ks[5], cexp)
    if stride != 1 or in_channels != cexp:
        p["ws"] = (jax.random.normal(ks[6], (in_channels, cexp))
                   / np.sqrt(in_channels)).astype(jnp.float32)
        p["ss"], p["bs"] = _bn_params(ks[7], cexp)
    return p


# --------------------------------- main --------------------------------------

if __name__ == "__main__":
    in_channels, out_channels, stride = 4, 4, 2
    N, H, W = 2, 16, 16

    key = jax.random.PRNGKey(0)
    kx, kp = jax.random.split(key)
    x = jax.random.normal(kx, (N, in_channels, H, W), dtype=jnp.float32)
    params = make_params(kp, in_channels, out_channels, stride)

    fwd = jax.jit(bottleneck_forward, static_argnums=(2,))
    out = jax.block_until_ready(fwd(x, params, stride))

    ref = jax.block_until_ready(ref_forward(x, params, stride))
    assert out.shape == ref.shape, (out.shape, ref.shape)
    np.testing.assert_allclose(np.asarray(out), np.asarray(ref),
                               rtol=1e-4, atol=1e-4)

    print("KERNEL_OK")
</pallas_src>

<mosaic_0001>
module attributes {stable_mosaic.version = 11 : i64} {
  func.func @_shortcut_kernel(%arg0: i32, %arg1: memref<1x8x1x8x8xf32, #tpu.memory_space<vmem>>, %arg2: memref<4x16xf32, #tpu.memory_space<vmem>>, %arg3: memref<1x16xf32, #tpu.memory_space<vmem>>, %arg4: memref<1x64x16xf32, #tpu.memory_space<vmem>>) attributes {dimension_semantics = [#tpu.dimension_semantics<parallel>], iteration_bounds = array<i64: 2>, scalar_prefetch = 0 : i64, scratch_operands = 0 : i64, tpu.core_type = #tpu.core_type<tc>, window_params = [{transform_indices = @transform_0, window_bounds = array<i64: 1, 8, 1, 8, 8>}, {pipeline_mode = #tpu.pipeline_mode<synchronous>, transform_indices = @transform_1, window_bounds = array<i64: 4, 16>}, {pipeline_mode = #tpu.pipeline_mode<synchronous>, transform_indices = @transform_2, window_bounds = array<i64: 1, 16>}, {transform_indices = @transform_3, window_bounds = array<i64: 1, 64, 16>}]} {
    %c0 = arith.constant 0 : index
    %c0_0 = arith.constant 0 : index
    %c0_1 = arith.constant 0 : index
    %c0_2 = arith.constant 0 : index
    %c0_3 = arith.constant 0 : index
    %0 = vector.load %arg1[%c0, %c0_0, %c0_1, %c0_2, %c0_3] : memref<1x8x1x8x8xf32, #tpu.memory_space<vmem>>, vector<1x8x1x8x4xf32>
    %1 = vector.shape_cast %0 : vector<1x8x1x8x4xf32> to vector<8x8x4xf32>
    %2 = vector.shape_cast %1 : vector<8x8x4xf32> to vector<64x4xf32>
    %c0_4 = arith.constant 0 : index
    %c0_5 = arith.constant 0 : index
    %3 = vector.load %arg2[%c0_4, %c0_5] : memref<4x16xf32, #tpu.memory_space<vmem>>, vector<4x16xf32>
    %cst = arith.constant dense<0.000000e+00> : vector<64x16xf32>
    %4 = tpu.matmul %2, %3, %cst {dimension_numbers = #tpu.dot_dimension_numbers<[1], [0], [0], [1], [0, 0, 1, 1], [], []>} : vector<64x4xf32>, vector<4x16xf32>, vector<64x16xf32> -> vector<64x16xf32>
    %c0_6 = arith.constant 0 : index
    %c0_7 = arith.constant 0 : index
    %5 = vector.load %arg3[%c0_6, %c0_7] : memref<1x16xf32, #tpu.memory_space<vmem>>, vector<1x16xf32>
    %6 = vector.broadcast %5 : vector<1x16xf32> to vector<64x16xf32>
    %7 = arith.addf %4, %6 : vector<64x16xf32>
    %8 = vector.shape_cast %7 : vector<64x16xf32> to vector<1x64x16xf32>
    %c0_8 = arith.constant 0 : index
    %c0_9 = arith.constant 0 : index
    %c0_10 = arith.constant 0 : index
    %9 = vector.load %arg4[%c0_8, %c0_9, %c0_10] : memref<1x64x16xf32, #tpu.memory_space<vmem>>, vector<1x64x16xf32>
    tpu.vector_store %arg4[%c0_8, %c0_9, %c0_10], %8 {strides = array<i32>} : memref<1x64x16xf32, #tpu.memory_space<vmem>>, vector<1x64x16xf32>,
    return
  }
  func.func @transform_0(%arg0: i32) -> (i32, i32, i32, i32, i32) {
    %c0_i32 = arith.constant 0 : i32
    %c0_i32_0 = arith.constant 0 : i32
    %c0_i32_1 = arith.constant 0 : i32
    %c0_i32_2 = arith.constant 0 : i32
    %c0_i32_3 = arith.constant 0 : i32
    return %arg0, %c0_i32, %c0_i32_0, %c0_i32_1, %c0_i32_2 : i32, i32, i32, i32, i32
  }
  func.func @transform_1(%arg0: i32) -> (i32, i32) {
    %c0_i32 = arith.constant 0 : i32
    %c0_i32_0 = arith.constant 0 : i32
    %c0_i32_1 = arith.constant 0 : i32
    return %c0_i32, %c0_i32_0 : i32, i32
  }
  func.func @transform_2(%arg0: i32) -> (i32, i32) {
    %c0_i32 = arith.constant 0 : i32
    %c0_i32_0 = arith.constant 0 : i32
    %c0_i32_1 = arith.constant 0 : i32
    return %c0_i32, %c0_i32_0 : i32, i32
  }
  func.func @transform_3(%arg0: i32) -> (i32, i32, i32) {
    %c0_i32 = arith.constant 0 : i32
    %c0_i32_0 = arith.constant 0 : i32
    %c0_i32_1 = arith.constant 0 : i32
    return %arg0, %c0_i32, %c0_i32_0 : i32, i32, i32
  }
}

module attributes {stable_mosaic.version = 11 : i64} {
  func.func @_mm_kernel_single(%arg0: i32, %arg1: i32, %arg2: memref<512x4xf32, #tpu.memory_space<vmem>>, %arg3: memref<4x4xf32, #tpu.memory_space<vmem>>, %arg4: memref<1x4xf32, #tpu.memory_space<vmem>>, %arg5: memref<512x4xf32, #tpu.memory_space<vmem>>) attributes {dimension_semantics = [#tpu.dimension_semantics<parallel>, #tpu.dimension_semantics<parallel>], iteration_bounds = array<i64: 1, 1>, scalar_prefetch = 0 : i64, scratch_operands = 0 : i64, tpu.core_type = #tpu.core_type<tc>, window_params = [{transform_indices = @transform_0, window_bounds = array<i64: 512, 4>}, {transform_indices = @transform_1, window_bounds = array<i64: 4, 4>}, {transform_indices = @transform_2, window_bounds = array<i64: 1, 4>}, {transform_indices = @transform_3, window_bounds = array<i64: 512, 4>}]} {
    %c0 = arith.constant 0 : index
    %c0_0 = arith.constant 0 : index
    %0 = vector.load %arg2[%c0, %c0_0] : memref<512x4xf32, #tpu.memory_space<vmem>>, vector<512x4xf32>
    %c0_1 = arith.constant 0 : index
    %c0_2 = arith.constant 0 : index
    %1 = vector.load %arg3[%c0_1, %c0_2] : memref<4x4xf32, #tpu.memory_space<vmem>>, vector<4x4xf32>
    %cst = arith.constant dense<0.000000e+00> : vector<512x4xf32>
    %2 = tpu.matmul %0, %1, %cst {dimension_numbers = #tpu.dot_dimension_numbers<[1], [0], [0], [1], [0, 0, 1, 1], [], []>} : vector<512x4xf32>, vector<4x4xf32>, vector<512x4xf32> -> vector<512x4xf32>
    %c0_3 = arith.constant 0 : index
    %c0_4 = arith.constant 0 : index
    %3 = vector.load %arg4[%c0_3, %c0_4] : memref<1x4xf32, #tpu.memory_space<vmem>>, vector<1x4xf32>
    %4 = vector.broadcast %3 : vector<1x4xf32> to vector<512x4xf32>
    %5 = arith.addf %2, %4 : vector<512x4xf32>
    %cst_5 = arith.constant 0.000000e+00 : f32
    %6 = vector.broadcast %cst_5 : f32 to vector<512x4xf32>
    %7 = arith.maximumf %5, %6 : vector<512x4xf32>
    %c0_6 = arith.constant 0 : index
    %c0_7 = arith.constant 0 : index
    %8 = vector.load %arg5[%c0_6, %c0_7] : memref<512x4xf32, #tpu.memory_space<vmem>>, vector<512x4xf32>
    tpu.vector_store %arg5[%c0_6, %c0_7], %7 {strides = array<i32>} : memref<512x4xf32, #tpu.memory_space<vmem>>, vector<512x4xf32>,
    return
  }
  func.func @transform_0(%arg0: i32, %arg1: i32) -> (i32, i32) {
    %c0_i32 = arith.constant 0 : i32
    %c0_i32_0 = arith.constant 0 : i32
    return %arg0, %c0_i32 : i32, i32
  }
  func.func @transform_1(%arg0: i32, %arg1: i32) -> (i32, i32) {
    %c0_i32 = arith.constant 0 : i32
    %c0_i32_0 = arith.constant 0 : i32
    return %c0_i32, %arg1 : i32, i32
  }
  func.func @transform_2(%arg0: i32, %arg1: i32) -> (i32, i32) {
    %c0_i32 = arith.constant 0 : i32
    %c0_i32_0 = arith.constant 0 : i32
    return %c0_i32, %arg1 : i32, i32
  }
  func.func @transform_3(%arg0: i32, %arg1: i32) -> (i32, i32) {
    %c0_i32 = arith.constant 0 : i32
    return %arg0, %arg1 : i32, i32
  }
}

module attributes {stable_mosaic.version = 11 : i64} {
  func.func @_conv3x3_kernel(%arg0: i32, %arg1: i32, %arg2: memref<1x9x2x9x8xf32, #tpu.memory_space<vmem>>, %arg3: memref<9x4x4xf32, #tpu.memory_space<vmem>>, %arg4: memref<1x4xf32, #tpu.memory_space<vmem>>, %arg5: memref<1x64x4xf32, #tpu.memory_space<vmem>>) attributes {dimension_semantics = [#tpu.dimension_semantics<parallel>, #tpu.dimension_semantics<parallel>], iteration_bounds = array<i64: 2, 1>, scalar_prefetch = 0 : i64, scratch_operands = 0 : i64, tpu.core_type = #tpu.core_type<tc>, window_params = [{transform_indices = @transform_0, window_bounds = array<i64: 1, 9, 2, 9, 8>}, {transform_indices = @transform_1, window_bounds = array<i64: 9, 4, 4>}, {transform_indices = @transform_2, window_bounds = array<i64: 1, 4>}, {transform_indices = @transform_3, window_bounds = array<i64: 1, 64, 4>}]} {
    %c0 = arith.constant 0 : index
    %c0_0 = arith.constant 0 : index
    %c0_1 = arith.constant 0 : index
    %c0_2 = arith.constant 0 : index
    %c0_3 = arith.constant 0 : index
    %0 = vector.load %arg2[%c0, %c0_0, %c0_1, %c0_2, %c0_3] : memref<1x9x2x9x8xf32, #tpu.memory_space<vmem>>, vector<1x8x1x8x4xf32>
    %1 = vector.shape_cast %0 : vector<1x8x1x8x4xf32> to vector<8x8x4xf32>
    %2 = vector.shape_cast %1 : vector<8x8x4xf32> to vector<64x4xf32>
    %c0_4 = arith.constant 0 : index
    %c0_5 = arith.constant 0 : index
    %c0_6 = arith.constant 0 : index
    %3 = vector.load %arg3[%c0_4, %c0_5, %c0_6] : memref<9x4x4xf32, #tpu.memory_space<vmem>>, vector<1x4x4xf32>
    %4 = vector.shape_cast %3 : vector<1x4x4xf32> to vector<4x4xf32>
    %cst = arith.constant dense<0.000000e+00> : vector<64x4xf32>
    %5 = tpu.matmul %2, %4, %cst {dimension_numbers = #tpu.dot_dimension_numbers<[1], [0], [0], [1], [0, 0, 1, 1], [], []>} : vector<64x4xf32>, vector<4x4xf32>, vector<64x4xf32> -> vector<64x4xf32>
    %c0_7 = arith.constant 0 : index
    %c0_8 = arith.constant 0 : index
    %c0_9 = arith.constant 0 : index
    %c0_10 = arith.constant 0 : index
    %c4 = arith.constant 4 : index
    %6 = vector.load %arg2[%c0_7, %c0_8, %c0_9, %c0_10, %c4] : memref<1x9x2x9x8xf32, #tpu.memory_space<vmem>>, vector<1x8x1x8x4xf32>
    %7 = vector.shape_cast %6 : vector<1x8x1x8x4xf32> to vector<8x8x4xf32>
    %8 = vector.shape_cast %7 : vector<8x8x4xf32> to vector<64x4xf32>
    %c1 = arith.constant 1 : index
    %c0_11 = arith.constant 0 : index
    %c0_12 = arith.constant 0 : index
    %9 = vector.load %arg3[%c1, %c0_11, %c0_12] : memref<9x4x4xf32, #tpu.memory_space<vmem>>, vector<1x4x4xf32>
    %10 = vector.shape_cast %9 : vector<1x4x4xf32> to vector<4x4xf32>
    %cst_13 = arith.constant dense<0.000000e+00> : vector<64x4xf32>
    %11 = tpu.matmul %8, %10, %cst_13 {dimension_numbers = #tpu.dot_dimension_numbers<[1], [0], [0], [1], [0, 0, 1, 1], [], []>} : vector<64x4xf32>, vector<4x4xf32>, vector<64x4xf32> -> vector<64x4xf32>
    %12 = arith.addf %5, %11 : vector<64x4xf32>
    %c0_14 = arith.constant 0 : index
    %c0_15 = arith.constant 0 : index
    %c0_16 = arith.constant 0 : index
    %c1_17 = arith.constant 1 : index
    %c0_18 = arith.constant 0 : index
    %13 = vector.load %arg2[%c0_14, %c0_15, %c0_16, %c1_17, %c0_18] : memref<1x9x2x9x8xf32, #tpu.memory_space<vmem>>, vector<1x8x1x8x4xf32>
    %14 = vector.shape_cast %13 : vector<1x8x1x8x4xf32> to vector<8x8x4xf32>
    %15 = vector.shape_cast %14 : vector<8x8x4xf32> to vector<64x4xf32>
    %c2 = arith.constant 2 : index
    %c0_19 = arith.constant 0 : index
    %c0_20 = arith.constant 0 : index
    %16 = vector.load %arg3[%c2, %c0_19, %c0_20] : memref<9x4x4xf32, #tpu.memory_space<vmem>>, vector<1x4x4xf32>
    %17 = vector.shape_cast %16 : vector<1x4x4xf32> to vector<4x4xf32>
    %cst_21 = arith.constant dense<0.000000e+00> : vector<64x4xf32>
    %18 = tpu.matmul %15, %17, %cst_21 {dimension_numbers = #tpu.dot_dimension_numbers<[1], [0], [0], [1], [0, 0, 1, 1], [], []>} : vector<64x4xf32>, vector<4x4xf32>, vector<64x4xf32> -> vector<64x4xf32>
    %19 = arith.addf %12, %18 : vector<64x4xf32>
    %c0_22 = arith.constant 0 : index
    %c0_23 = arith.constant 0 : index
    %c1_24 = arith.constant 1 : index
    %c0_25 = arith.constant 0 : index
    %c0_26 = arith.constant 0 : index
    %20 = vector.load %arg2[%c0_22, %c0_23, %c1_24, %c0_25, %c0_26] : memref<1x9x2x9x8xf32, #tpu.memory_space<vmem>>, vector<1x8x1x8x4xf32>
    %21 = vector.shape_cast %20 : vector<1x8x1x8x4xf32> to vector<8x8x4xf32>
    %22 = vector.shape_cast %21 : vector<8x8x4xf32> to vector<64x4xf32>
    %c3 = arith.constant 3 : index
    %c0_27 = arith.constant 0 : index
    %c0_28 = arith.constant 0 : index
    %23 = vector.load %arg3[%c3, %c0_27, %c0_28] : memref<9x4x4xf32, #tpu.memory_space<vmem>>, vector<1x4x4xf32>
    %24 = vector.shape_cast %23 : vector<1x4x4xf32> to vector<4x4xf32>
    %cst_29 = arith.constant dense<0.000000e+00> : vector<64x4xf32>
    %25 = tpu.matmul %22, %24, %cst_29 {dimension_numbers = #tpu.dot_dimension_numbers<[1], [0], [0], [1], [0, 0, 1, 1], [], []>} : vector<64x4xf32>, vector<4x4xf32>, vector<64x4xf32> -> vector<64x4xf32>
    %26 = arith.addf %19, %25 : vector<64x4xf32>
    %c0_30 = arith.constant 0 : index
    %c0_31 = arith.constant 0 : index
    %c1_32 = arith.constant 1 : index
    %c0_33 = arith.constant 0 : index
    %c4_34 = arith.constant 4 : index
    %27 = vector.load %arg2[%c0_30, %c0_31, %c1_32, %c0_33, %c4_34] : memref<1x9x2x9x8xf32, #tpu.memory_space<vmem>>, vector<1x8x1x8x4xf32>
    %28 = vector.shape_cast %27 : vector<1x8x1x8x4xf32> to vector<8x8x4xf32>
    %29 = vector.shape_cast %28 : vector<8x8x4xf32> to vector<64x4xf32>
    %c4_35 = arith.constant 4 : index
    %c0_36 = arith.constant 0 : index
    %c0_37 = arith.constant 0 : index
    %30 = vector.load %arg3[%c4_35, %c0_36, %c0_37] : memref<9x4x4xf32, #tpu.memory_space<vmem>>, vector<1x4x4xf32>
    %31 = vector.shape_cast %30 : vector<1x4x4xf32> to vector<4x4xf32>
    %cst_38 = arith.constant dense<0.000000e+00> : vector<64x4xf32>
    %32 = tpu.matmul %29, %31, %cst_38 {dimension_numbers = #tpu.dot_dimension_numbers<[1], [0], [0], [1], [0, 0, 1, 1], [], []>} : vector<64x4xf32>, vector<4x4xf32>, vector<64x4xf32> -> vector<64x4xf32>
    %33 = arith.addf %26, %32 : vector<64x4xf32>
    %c0_39 = arith.constant 0 : index
    %c0_40 = arith.constant 0 : index
    %c1_41 = arith.constant 1 : index
    %c1_42 = arith.constant 1 : index
    %c0_43 = arith.constant 0 : index
    %34 = vector.load %arg2[%c0_39, %c0_40, %c1_41, %c1_42, %c0_43] : memref<1x9x2x9x8xf32, #tpu.memory_space<vmem>>, vector<1x8x1x8x4xf32>
    %35 = vector.shape_cast %34 : vector<1x8x1x8x4xf32> to vector<8x8x4xf32>
    %36 = vector.shape_cast %35 : vector<8x8x4xf32> to vector<64x4xf32>
    %c5 = arith.constant 5 : index
    %c0_44 = arith.constant 0 : index
    %c0_45 = arith.constant 0 : index
    %37 = vector.load %arg3[%c5, %c0_44, %c0_45] : memref<9x4x4xf32, #tpu.memory_space<vmem>>, vector<1x4x4xf32>
    %38 = vector.shape_cast %37 : vector<1x4x4xf32> to vector<4x4xf32>
    %cst_46 = arith.constant dense<0.000000e+00> : vector<64x4xf32>
    %39 = tpu.matmul %36, %38, %cst_46 {dimension_numbers = #tpu.dot_dimension_numbers<[1], [0], [0], [1], [0, 0, 1, 1], [], []>} : vector<64x4xf32>, vector<4x4xf32>, vector<64x4xf32> -> vector<64x4xf32>
    %40 = arith.addf %33, %39 : vector<64x4xf32>
    %c0_47 = arith.constant 0 : index
    %c1_48 = arith.constant 1 : index
    %c0_49 = arith.constant 0 : index
    %c0_50 = arith.constant 0 : index
    %c0_51 = arith.constant 0 : index
    %41 = vector.load %arg2[%c0_47, %c1_48, %c0_49, %c0_50, %c0_51] : memref<1x9x2x9x8xf32, #tpu.memory_space<vmem>>, vector<1x8x1x8x4xf32>
    %42 = vector.shape_cast %41 : vector<1x8x1x8x4xf32> to vector<8x8x4xf32>
    %43 = vector.shape_cast %42 : vector<8x8x4xf32> to vector<64x4xf32>
    %c6 = arith.constant 6 : index
    %c0_52 = arith.constant 0 : index
    %c0_53 = arith.constant 0 : index
    %44 = vector.load %arg3[%c6, %c0_52, %c0_53] : memref<9x4x4xf32, #tpu.memory_space<vmem>>, vector<1x4x4xf32>
    %45 = vector.shape_cast %44 : vector<1x4x4xf32> to vector<4x4xf32>
    %cst_54 = arith.constant dense<0.000000e+00> : vector<64x4xf32>
    %46 = tpu.matmul %43, %45, %cst_54 {dimension_numbers = #tpu.dot_dimension_numbers<[1], [0], [0], [1], [0, 0, 1, 1], [], []>} : vector<64x4xf32>, vector<4x4xf32>, vector<64x4xf32> -> vector<64x4xf32>
    %47 = arith.addf %40, %46 : vector<64x4xf32>
    %c0_55 = arith.constant 0 : index
    %c1_56 = arith.constant 1 : index
    %c0_57 = arith.constant 0 : index
    %c0_58 = arith.constant 0 : index
    %c4_59 = arith.constant 4 : index
    %48 = vector.load %arg2[%c0_55, %c1_56, %c0_57, %c0_58, %c4_59] : memref<1x9x2x9x8xf32, #tpu.memory_space<vmem>>, vector<1x8x1x8x4xf32>
    %49 = vector.shape_cast %48 : vector<1x8x1x8x4xf32> to vector<8x8x4xf32>
    %50 = vector.shape_cast %49 : vector<8x8x4xf32> to vector<64x4xf32>
    %c7 = arith.constant 7 : index
    %c0_60 = arith.constant 0 : index
    %c0_61 = arith.constant 0 : index
    %51 = vector.load %arg3[%c7, %c0_60, %c0_61] : memref<9x4x4xf32, #tpu.memory_space<vmem>>, vector<1x4x4xf32>
    %52 = vector.shape_cast %51 : vector<1x4x4xf32> to vector<4x4xf32>
    %cst_62 = arith.constant dense<0.000000e+00> : vector<64x4xf32>
    %53 = tpu.matmul %50, %52, %cst_62 {dimension_numbers = #tpu.dot_dimension_numbers<[1], [0], [0], [1], [0, 0, 1, 1], [], []>} : vector<64x4xf32>, vector<4x4xf32>, vector<64x4xf32> -> vector<64x4xf32>
    %54 = arith.addf %47, %53 : vector<64x4xf32>
    %c0_63 = arith.constant 0 : index
    %c1_64 = arith.constant 1 : index
    %c0_65 = arith.constant 0 : index
    %c1_66 = arith.constant 1 : index
    %c0_67 = arith.constant 0 : index
    %55 = vector.load %arg2[%c0_63, %c1_64, %c0_65, %c1_66, %c0_67] : memref<1x9x2x9x8xf32, #tpu.memory_space<vmem>>, vector<1x8x1x8x4xf32>
    %56 = vector.shape_cast %55 : vector<1x8x1x8x4xf32> to vector<8x8x4xf32>
    %57 = vector.shape_cast %56 : vector<8x8x4xf32> to vector<64x4xf32>
    %c8 = arith.constant 8 : index
    %c0_68 = arith.constant 0 : index
    %c0_69 = arith.constant 0 : index
    %58 = vector.load %arg3[%c8, %c0_68, %c0_69] : memref<9x4x4xf32, #tpu.memory_space<vmem>>, vector<1x4x4xf32>
    %59 = vector.shape_cast %58 : vector<1x4x4xf32> to vector<4x4xf32>
    %cst_70 = arith.constant dense<0.000000e+00> : vector<64x4xf32>
    %60 = tpu.matmul %57, %59, %cst_70 {dimension_numbers = #tpu.dot_dimension_numbers<[1], [0], [0], [1], [0, 0, 1, 1], [], []>} : vector<64x4xf32>, vector<4x4xf32>, vector<64x4xf32> -> vector<64x4xf32>
    %61 = arith.addf %54, %60 : vector<64x4xf32>
    %c0_71 = arith.constant 0 : index
    %c0_72 = arith.constant 0 : index
    %62 = vector.load %arg4[%c0_71, %c0_72] : memref<1x4xf32, #tpu.memory_space<vmem>>, vector<1x4xf32>
    %63 = vector.broadcast %62 : vector<1x4xf32> to vector<64x4xf32>
    %64 = arith.addf %61, %63 : vector<64x4xf32>
    %cst_73 = arith.constant 0.000000e+00 : f32
    %65 = vector.broadcast %cst_73 : f32 to vector<64x4xf32>
    %66 = arith.maximumf %64, %65 : vector<64x4xf32>
    %67 = vector.shape_cast %66 : vector<64x4xf32> to vector<1x64x4xf32>
    %c0_74 = arith.constant 0 : index
    %c0_75 = arith.constant 0 : index
    %c0_76 = arith.constant 0 : index
    %68 = vector.load %arg5[%c0_74, %c0_75, %c0_76] : memref<1x64x4xf32, #tpu.memory_space<vmem>>, vector<1x64x4xf32>
    tpu.vector_store %arg5[%c0_74, %c0_75, %c0_76], %67 {strides = array<i32>} : memref<1x64x4xf32, #tpu.memory_space<vmem>>, vector<1x64x4xf32>,
    return
  }
  func.func @transform_0(%arg0: i32, %arg1: i32) -> (i32, i32, i32, i32, i32) {
    %c0_i32 = arith.constant 0 : i32
    %c0_i32_0 = arith.constant 0 : i32
    %c0_i32_1 = arith.constant 0 : i32
    %c0_i32_2 = arith.constant 0 : i32
    %c0_i32_3 = arith.constant 0 : i32
    return %arg0, %c0_i32, %c0_i32_0, %c0_i32_1, %c0_i32_2 : i32, i32, i32, i32, i32
  }
  func.func @transform_1(%arg0: i32, %arg1: i32) -> (i32, i32, i32) {
    %c0_i32 = arith.constant 0 : i32
    %c0_i32_0 = arith.constant 0 : i32
    %c0_i32_1 = arith.constant 0 : i32
    return %c0_i32, %c0_i32_0, %arg1 : i32, i32, i32
  }
  func.func @transform_2(%arg0: i32, %arg1: i32) -> (i32, i32) {
    %c0_i32 = arith.constant 0 : i32
    %c0_i32_0 = arith.constant 0 : i32
    return %c0_i32, %arg1 : i32, i32
  }
  func.func @transform_3(%arg0: i32, %arg1: i32) -> (i32, i32, i32) {
    %c0_i32 = arith.constant 0 : i32
    %c0_i32_0 = arith.constant 0 : i32
    return %arg0, %c0_i32, %arg1 : i32, i32, i32
  }
}

module attributes {stable_mosaic.version = 11 : i64} {
  func.func @_mm_res_kernel_single(%arg0: i32, %arg1: i32, %arg2: memref<128x4xf32, #tpu.memory_space<vmem>>, %arg3: memref<4x16xf32, #tpu.memory_space<vmem>>, %arg4: memref<1x16xf32, #tpu.memory_space<vmem>>, %arg5: memref<128x16xf32, #tpu.memory_space<vmem>>, %arg6: memref<128x16xf32, #tpu.memory_space<vmem>>) attributes {dimension_semantics = [#tpu.dimension_semantics<parallel>, #tpu.dimension_semantics<parallel>], iteration_bounds = array<i64: 1, 1>, scalar_prefetch = 0 : i64, scratch_operands = 0 : i64, tpu.core_type = #tpu.core_type<tc>, window_params = [{transform_indices = @transform_0, window_bounds = array<i64: 128, 4>}, {transform_indices = @transform_1, window_bounds = array<i64: 4, 16>}, {transform_indices = @transform_2, window_bounds = array<i64: 1, 16>}, {transform_indices = @transform_3, window_bounds = array<i64: 128, 16>}, {transform_indices = @transform_4, window_bounds = array<i64: 128, 16>}]} {
    %c0 = arith.constant 0 : index
    %c0_0 = arith.constant 0 : index
    %0 = vector.load %arg2[%c0, %c0_0] : memref<128x4xf32, #tpu.memory_space<vmem>>, vector<128x4xf32>
    %c0_1 = arith.constant 0 : index
    %c0_2 = arith.constant 0 : index
    %1 = vector.load %arg3[%c0_1, %c0_2] : memref<4x16xf32, #tpu.memory_space<vmem>>, vector<4x16xf32>
    %cst = arith.constant dense<0.000000e+00> : vector<128x16xf32>
    %2 = tpu.matmul %0, %1, %cst {dimension_numbers = #tpu.dot_dimension_numbers<[1], [0], [0], [1], [0, 0, 1, 1], [], []>} : vector<128x4xf32>, vector<4x16xf32>, vector<128x16xf32> -> vector<128x16xf32>
    %c0_3 = arith.constant 0 : index
    %c0_4 = arith.constant 0 : index
    %3 = vector.load %arg4[%c0_3, %c0_4] : memref<1x16xf32, #tpu.memory_space<vmem>>, vector<1x16xf32>
    %4 = vector.broadcast %3 : vector<1x16xf32> to vector<128x16xf32>
    %5 = arith.addf %2, %4 : vector<128x16xf32>
    %c0_5 = arith.constant 0 : index
    %c0_6 = arith.constant 0 : index
    %6 = vector.load %arg5[%c0_5, %c0_6] : memref<128x16xf32, #tpu.memory_space<vmem>>, vector<128x16xf32>
    %7 = arith.addf %5, %6 : vector<128x16xf32>
    %cst_7 = arith.constant 0.000000e+00 : f32
    %8 = vector.broadcast %cst_7 : f32 to vector<128x16xf32>
    %9 = arith.maximumf %7, %8 : vector<128x16xf32>
    %c0_8 = arith.constant 0 : index
    %c0_9 = arith.constant 0 : index
    %10 = vector.load %arg6[%c0_8, %c0_9] : memref<128x16xf32, #tpu.memory_space<vmem>>, vector<128x16xf32>
    tpu.vector_store %arg6[%c0_8, %c0_9], %9 {strides = array<i32>} : memref<128x16xf32, #tpu.memory_space<vmem>>, vector<128x16xf32>,
    return
  }
  func.func @transform_0(%arg0: i32, %arg1: i32) -> (i32, i32) {
    %c0_i32 = arith.constant 0 : i32
    %c0_i32_0 = arith.constant 0 : i32
    return %arg0, %c0_i32 : i32, i32
  }
  func.func @transform_1(%arg0: i32, %arg1: i32) -> (i32, i32) {
    %c0_i32 = arith.constant 0 : i32
    %c0_i32_0 = arith.constant 0 : i32
    return %c0_i32, %arg1 : i32, i32
  }
  func.func @transform_2(%arg0: i32, %arg1: i32) -> (i32, i32) {
    %c0_i32 = arith.constant 0 : i32
    %c0_i32_0 = arith.constant 0 : i32
    return %c0_i32, %arg1 : i32, i32
  }
  func.func @transform_3(%arg0: i32, %arg1: i32) -> (i32, i32) {
    %c0_i32 = arith.constant 0 : i32
    return %arg0, %arg1 : i32, i32
  }
  func.func @transform_4(%arg0: i32, %arg1: i32) -> (i32, i32) {
    %c0_i32 = arith.constant 0 : i32
    return %arg0, %arg1 : i32, i32
  }
}

</mosaic_0001>

<llo_original>
// kernel: bottleneck_forward.6
$region0: #{bottleneck_forward.6}
  #allocation0 [shape = 'u32[]', space=smem, size = 0x4, offset = 0x4, fixed_abs, tag = 'smem constant byte address 0x4 - core index']
  #allocation1 [shape = 'u32[144,128]{1,0:T(1,128)}', space=vmem, size = 0x12000, scoped, tag = 'internal scratch']
  %s0 = inlined_call_operand.vmem [shape: f32[2,8,2,8,8], index: 0, kind: input, shape index: {}]
  %s1 = inlined_call_operand.vmem [shape: f32[4,16], index: 1, kind: input, shape index: {}]
  %s2 = inlined_call_operand.vmem [shape: f32[1,16], index: 2, kind: input, shape index: {}]
  %s3 = inlined_call_operand.vmem [shape: f32[2,64,16], index: 3, kind: output, shape index: {}]
  %s4 = sld [smem:[#allocation0]]
  $region83: #{bottleneck_forward.6} parent=0
    _
  %s6 = ssub.s32 1, %s4
  %s7 = scalar_select 0, %s6, %s4
  $region1: #{bottleneck_forward.6} parent=0
    #allocation2 [shape = 'u8[65536]{0}', space=vmem, size = 0x10000, scoped, tag = 'input window, operand 0']
    loop: start=0, step=1, limit=4
    $region2: #{bottleneck_forward.6} parent=1 // loop_pre_header
      _
    $region3: #{bottleneck_forward.6} parent=1 // loop_header
      %s9 = sphi 0, %s13
      %p10 = scmp.ge.s32.totalorder %s9, 4
      %s19 = sphi 0, %s21
      %s22 = sphi 0, %s19
      %s23 = sphi 0, %s22
      %s39 = sphi 0, %s23
      %s43 = sphi 0, %s43
      %s45 = sphi 0, %s43
      %s46 = sphi 0, %s45
      %s60 = sphi 0, %s46
      %s64 = sphi 0, %s64
      %s66 = sphi 0, %s64
      %s67 = sphi 0, %s66
      %s81 = sphi 0, %s67
      %s87 = sphi 0, %s89
      %s90 = sphi 0, %s87
      %s91 = sphi 0, %s90
      %s107 = sphi 0, %s91
    $region4: #{bottleneck_forward.6} parent=1 // loop_header_branch
      %12 = sbr.rel (%p10) target = $region8
    $region5: #{bottleneck_forward.6} parent=1 // loop_body
      %s14 = ssub.s32 %s9, 1
      %s15 = ssub.s32 %s9, 2
      %s16 = sadd.s32 %s9, 1
      %s17 = ssub.s32 %s9, %s16
      %p18 = scmp.eq.s32.totalorder %s17, 0
      %s20 = sadd.s32 %s19, 1
      %s21 = scalar_select %p18, %s19, %s20
      %p24 = pneg %p18
      %p25 = scmp.eq.s32.totalorder %s9, 1
      %p26 = por %p24, %p25
      %p27 = scmp.ne.s32.totalorder %s19, %s22
      %p28 = scmp.eq.s32.totalorder %s9, 0
      %p29 = por %p27, %p28
      %p30 = scmp.ne.s32.totalorder %s19, %s22
      %p31 = scmp.eq.s32.totalorder %s14, 1
      %p32 = por %p30, %p31
      %p33 = scmp.ne.s32.totalorder %s22, %s23
      %p34 = scmp.eq.s32.totalorder %s14, 0
      %p35 = por %p33, %p34
      %p36 = scmp.ne.s32.totalorder %s22, %s23
      %p37 = scmp.eq.s32.totalorder %s15, 1
      %p38 = por %p36, %p37
      %p40 = scmp.ne.s32.totalorder %s23, %s39
      %p41 = scmp.eq.s32.totalorder %s15, 0
      %p42 = por %p40, %p41
      %s44 = sadd.s32 %s43, 1
      %p47 = scmp.eq.s32.totalorder %s9, 1
      %p48 = scmp.ne.s32.totalorder %s43, %s45
      %p49 = scmp.eq.s32.totalorder %s9, 0
      %p50 = por %p48, %p49
      %p51 = scmp.ne.s32.totalorder %s43, %s45
      %p52 = scmp.eq.s32.totalorder %s14, 1
      %p53 = por %p51, %p52
      %p54 = scmp.ne.s32.totalorder %s45, %s46
      %p55 = scmp.eq.s32.totalorder %s14, 0
      %p56 = por %p54, %p55
      %p57 = scmp.ne.s32.totalorder %s45, %s46
      %p58 = scmp.eq.s32.totalorder %s15, 1
      %p59 = por %p57, %p58
      %p61 = scmp.ne.s32.totalorder %s46, %s60
      %p62 = scmp.eq.s32.totalorder %s15, 0
      %p63 = por %p61, %p62
      %s65 = sadd.s32 %s64, 1
      %p68 = scmp.eq.s32.totalorder %s9, 1
      %p69 = scmp.ne.s32.totalorder %s64, %s66
      %p70 = scmp.eq.s32.totalorder %s9, 0
      %p71 = por %p69, %p70
      %p72 = scmp.ne.s32.totalorder %s64, %s66
      %p73 = scmp.eq.s32.totalorder %s14, 1
      %p74 = por %p72, %p73
      %p75 = scmp.ne.s32.totalorder %s66, %s67
      %p76 = scmp.eq.s32.totalorder %s14, 0
      %p77 = por %p75, %p76
      %p78 = scmp.ne.s32.totalorder %s66, %s67
      %p79 = scmp.eq.s32.totalorder %s15, 1
      %p80 = por %p78, %p79
      %p82 = scmp.ne.s32.totalorder %s67, %s81
      %p83 = scmp.eq.s32.totalorder %s15, 0
      %p84 = por %p82, %p83
      %s85 = ssub.s32 %s9, %s16
      %p86 = scmp.eq.s32.totalorder %s85, 0
      %s88 = sadd.s32 %s87, 1
      %s89 = scalar_select %p86, %s87, %s88
      %p92 = pneg %p86
      %p93 = scmp.eq.s32.totalorder %s9, 1
      %p94 = por %p92, %p93
      %p95 = scmp.ne.s32.totalorder %s87, %s90
      %p96 = scmp.eq.s32.totalorder %s9, 0
      %p97 = por %p95, %p96
      %p98 = scmp.ne.s32.totalorder %s87, %s90
      %p99 = scmp.eq.s32.totalorder %s14, 1
      %p100 = por %p98, %p99
      %p101 = scmp.ne.s32.totalorder %s90, %s91
      %p102 = scmp.eq.s32.totalorder %s14, 0
      %p103 = por %p101, %p102
      %p104 = scmp.ne.s32.totalorder %s90, %s91
      %p105 = scmp.eq.s32.totalorder %s15, 1
      %p106 = por %p104, %p105
      %p108 = scmp.ne.s32.totalorder %s91, %s107
      %p109 = scmp.eq.s32.totalorder %s15, 0
      %p110 = por %p108, %p109
      %p111 = scmp.le.s32.totalorder 1, %s9
      %p112 = scmp.lt.s32.totalorder %s9, 3
      %p113 = pnand %p111, %p112
      %p114 = pneg %p113
      // Predicated region
      $region9: #{bottleneck_forward.6} parent=5 // pred_check
        _
      $region10: #{bottleneck_forward.6} parent=5 // pred_check_branch
        %116 = sbr.rel (%p113) target = $region12
      $region11: #{bottleneck_forward.6} parent=5 // pred_region
        %s117 = ssub.s32 %s9, 1
        // Predicated region
        $region13: #{bottleneck_forward.6} parent=11 // pred_check
          %p118 = pneg %p56
        $region14: #{bottleneck_forward.6} parent=11 // pred_check_branch
          %120 = sbr.rel (%p118) target = $region16
        $region15: #{bottleneck_forward.6} parent=11 // pred_region
          _
        $region16: #{bottleneck_forward.6} parent=11 // pred_fallthru
          _
        // Predicated region
        $region17: #{bottleneck_forward.6} parent=11 // pred_check
          %p121 = pneg %p77
        $region18: #{bottleneck_forward.6} parent=11 // pred_check_branch
          %123 = sbr.rel (%p121) target = $region20
        $region19: #{bottleneck_forward.6} parent=11 // pred_region
          _
        $region20: #{bottleneck_forward.6} parent=11 // pred_fallthru
          _
      $region12: #{bottleneck_forward.6} parent=5 // pred_fallthru
        _
      %p124 = scmp.lt.s32.totalorder %s9, 2
      // Predicated region
      $region21: #{bottleneck_forward.6} parent=5 // pred_check
        %p125 = pneg %p124
      $region22: #{bottleneck_forward.6} parent=5 // pred_check_branch
        %127 = sbr.rel (%p125) target = $region24
      $region23: #{bottleneck_forward.6} parent=5 // pred_region
        // Predicated region
        $region25: #{bottleneck_forward.6} parent=23 // pred_check
          %p128 = pneg %p29
        $region26: #{bottleneck_forward.6} parent=23 // pred_check_branch
          %130 = sbr.rel (%p128) target = $region28
        $region27: #{bottleneck_forward.6} parent=23 // pred_region
          %s131 = sand.u32 %s19, 1
          %s132 = sand.u32 %s19, 1
          %s133 = smul.addr %s132, 64
          %s134 = scalar_lea.vmem [#allocation2], %s133
          %s135 = smul.addr %s9, 16
          %s136 = smul.addr %s135, 8
          %s137 = scalar_lea.vmem %s0, %s136
          // Predicated region
          $region29: #{bottleneck_forward.6} parent=27 // pred_check
            _
          $region30: #{bottleneck_forward.6} parent=27 // pred_check_branch
            %139 = sbr.rel (0) target = $region32
          $region31: #{bottleneck_forward.6} parent=27 // pred_region
            // Predicated region
            $region33: #{bottleneck_forward.6} parent=31 // pred_check
              _
            $region34: #{bottleneck_forward.6} parent=31 // pred_check_branch
              %141 = sbr.rel (0) target = $region36
            $region35: #{bottleneck_forward.6} parent=31 // pred_region
              // Predicated region
              $region48: #{bottleneck_forward.6} parent=35 // pred_check
                _
              $region49: #{bottleneck_forward.6} parent=35 // pred_check_branch
                %170 = sbr.rel (0) target = $region51
              $region50: #{bottleneck_forward.6} parent=35 // pred_region
                loop: start=0, step=1, limit=1
                $region52: #{bottleneck_forward.6} parent=50 // loop_pre_header
                  _
                $region53: #{bottleneck_forward.6} parent=50 // loop_header
                  %s172 = sphi 0, %s176
                  %p173 = scmp.ge.s32.totalorder %s172, 1
                  %s177 = sphi %s137, %s137
                  %s178 = sphi %s134, %s134
                $region54: #{bottleneck_forward.6} parent=50 // loop_header_branch
                  %175 = sbr.rel (%p173) target = $region58
                $region55: #{bottleneck_forward.6} parent=50 // loop_body
                  %v179 = vld [vmem:[%s177] sm:$0xff]
                  %180 = vst [vmem:[%s178] sm:$0xff] %v179
                  %v181 = vld [vmem:[%s177 + $0x10] sm:$0xff]
                  %182 = vst [vmem:[%s178 + $0x8] sm:$0xff] %v181
                  %v183 = vld [vmem:[%s177 + $0x20] sm:$0xff]
                  %184 = vst [vmem:[%s178 + $0x10] sm:$0xff] %v183
                  %v185 = vld [vmem:[%s177 + $0x30] sm:$0xff]
                  %186 = vst [vmem:[%s178 + $0x18] sm:$0xff] %v185
                  %v187 = vld [vmem:[%s177 + $0x40] sm:$0xff]
                  %188 = vst [vmem:[%s178 + $0x20] sm:$0xff] %v187
                  %v189 = vld [vmem:[%s177 + $0x50] sm:$0xff]
                  %190 = vst [vmem:[%s178 + $0x28] sm:$0xff] %v189
                  %v191 = vld [vmem:[%s177 + $0x60] sm:$0xff]
                  %192 = vst [vmem:[%s178 + $0x30] sm:$0xff] %v191
                  %v193 = vld [vmem:[%s177 + $0x70] sm:$0xff]
                  %194 = vst [vmem:[%s178 + $0x38] sm:$0xff] %v193
                $region56: #{bottleneck_forward.6} parent=50 // loop_footer
                  %s176 = sadd.s32 1, %s172
                $region57: #{bottleneck_forward.6} parent=50 // loop_footer_branch
                  %171 = sbr.rel target = $region53
                $region58: #{bottleneck_forward.6} parent=50 // loop_exit
                  _
              $region51: #{bottleneck_forward.6} parent=35 // pred_fallthru
                _
              // Predicated region
              $region59: #{bottleneck_forward.6} parent=35 // pred_check
                _
              $region60: #{bottleneck_forward.6} parent=35 // pred_check_branch
                %196 = sbr.rel target = $region62
              $region61: #{bottleneck_forward.6} parent=35 // pred_region
                _
              $region62: #{bottleneck_forward.6} parent=35 // pred_fallthru
                _
            $region36: #{bottleneck_forward.6} parent=31 // pred_fallthru
              _
            // Predicated region
            $region37: #{bottleneck_forward.6} parent=31 // pred_check
              _
            $region38: #{bottleneck_forward.6} parent=31 // pred_check_branch
              %143 = sbr.rel target = $region40
            $region39: #{bottleneck_forward.6} parent=31 // pred_region
              loop: start=0, step=1, limit=1
              $region41: #{bottleneck_forward.6} parent=39 // loop_pre_header
                _
              $region42: #{bottleneck_forward.6} parent=39 // loop_header
                %s146 = sphi 0, %s150
                %p147 = scmp.ge.s32.totalorder %s146, 1
                %s151 = sphi %s137, %s137
                %s152 = sphi %s134, %s134
              $region43: #{bottleneck_forward.6} parent=39 // loop_header_branch
                %149 = sbr.rel (%p147) target = $region47
              $region44: #{bottleneck_forward.6} parent=39 // loop_body
                %v153 = vld [vmem:[%s151] sm:$0xff]
                %154 = vst [vmem:[%s152] sm:$0xff] %v153
                %v155 = vld [vmem:[%s151 + $0x10] sm:$0xff]
                %156 = vst [vmem:[%s152 + $0x8] sm:$0xff] %v155
                %v157 = vld [vmem:[%s151 + $0x20] sm:$0xff]
                %158 = vst [vmem:[%s152 + $0x10] sm:$0xff] %v157
                %v159 = vld [vmem:[%s151 + $0x30] sm:$0xff]
                %160 = vst [vmem:[%s152 + $0x18] sm:$0xff] %v159
                %v161 = vld [vmem:[%s151 + $0x40] sm:$0xff]
                %162 = vst [vmem:[%s152 + $0x20] sm:$0xff] %v161
                %v163 = vld [vmem:[%s151 + $0x50] sm:$0xff]
                %164 = vst [vmem:[%s152 + $0x28] sm:$0xff] %v163
                %v165 = vld [vmem:[%s151 + $0x60] sm:$0xff]
                %166 = vst [vmem:[%s152 + $0x30] sm:$0xff] %v165
                %v167 = vld [vmem:[%s151 + $0x70] sm:$0xff]
                %168 = vst [vmem:[%s152 + $0x38] sm:$0xff] %v167
              $region45: #{bottleneck_forward.6} parent=39 // loop_footer
                %s150 = sadd.s32 1, %s146
              $region46: #{bottleneck_forward.6} parent=39 // loop_footer_branch
                %145 = sbr.rel target = $region42
              $region47: #{bottleneck_forward.6} parent=39 // loop_exit
                _
            $region40: #{bottleneck_forward.6} parent=31 // pred_fallthru
              _
          $region32: #{bottleneck_forward.6} parent=27 // pred_fallthru
            _
          %197 = vnop
        $region28: #{bottleneck_forward.6} parent=23 // pred_fallthru
          _
      $region24: #{bottleneck_forward.6} parent=5 // pred_fallthru
        _
      %p198 = scmp.le.s32.totalorder 1, %s9
      %p199 = scmp.lt.s32.totalorder %s9, 3
      %p200 = pnand %p198, %p199
      %p201 = pneg %p200
      // Predicated region
      $region63: #{bottleneck_forward.6} parent=5 // pred_check
        _
      $region64: #{bottleneck_forward.6} parent=5 // pred_check_branch
        %203 = sbr.rel (%p200) target = $region66
      $region65: #{bottleneck_forward.6} parent=5 // pred_region
        %s204 = ssub.s32 %s9, 1
        %s205 = sand.u32 %s22, 1
        %s206 = sand.u32 %s22, 1
        %s207 = smul.addr %s206, 64
        %s208 = scalar_lea.vmem [#allocation2], %s207
        // Predicated region
        $region67: #{bottleneck_forward.6} parent=65 // pred_check
          %p209 = pneg %p35
        $region68: #{bottleneck_forward.6} parent=65 // pred_check_branch
          %211 = sbr.rel (%p209) target = $region70
        $region69: #{bottleneck_forward.6} parent=65 // pred_region
          _
        $region70: #{bottleneck_forward.6} parent=65 // pred_fallthru
          _
        %s212 = sand.u32 %s22, 1
        %s213 = sand.u32 %s22, 1
        %s214 = smul.addr %s213, 64
        %s215 = scalar_lea.vmem [#allocation2], %s214
        %p216 = pneg %p35
        %p217 = pneg %p32
        %p218 = pneg %p56
        %p219 = pneg %p53
        %p220 = pneg %p77
        %p221 = pneg %p74
        %p222 = pneg %p103
        %p223 = pneg %p100
        %p224 = scmp.lt.s32.totalorder %s14, 1
        %s225 = scalar_select %p224, %s14, 1
        %s226 = smul.addr %s225, 8
        %s227 = smul.addr %s226, 8
        %s228 = scalar_lea.vmem %s3, %s227
        %p229 = scmp.lt.s32.totalorder %s14, 1
        %s230 = scalar_select %p229, %s14, 1
        %s231 = smul.addr %s230, 8
        %s232 = smul.addr %s231, 8
        %s233 = scalar_lea.vmem %s3, %s232
        %v234 = vld [vmem:[%s208] sm:$0xff]
        %v235 = vld [vmem:[%s208 + $0x8] sm:$0xff]
        %v236 = vld [vmem:[%s208 + $0x10] sm:$0xff]
        %v237 = vld [vmem:[%s208 + $0x18] sm:$0xff]
        %v238 = vld [vmem:[%s208 + $0x20] sm:$0xff]
        %v239 = vld [vmem:[%s208 + $0x28] sm:$0xff]
        %v240 = vld [vmem:[%s208 + $0x30] sm:$0xff]
        %v241 = vld [vmem:[%s208 + $0x38] sm:$0xff]
        %v242 = vld [vmem:[%s1] sm:$0xf]
        %v243 = vld [vmem:[%s2] sm:$0x1]
        %v245 = vlaneseq
        %v246 = vshrl.u32 %v245, 7
        %v247 = vsub.s32 0, %v246
        %v248 = vrot.slane %v243, %v247
        %vm250 = vcmask 31744
        %v252 = vsel %vm250, %v234, 0
        %v255 = vsel %vm250, %v235, 0
        %v258 = vsel %vm250, %v236, 0
        %v261 = vsel %vm250, %v237, 0
        %v264 = vsel %vm250, %v238, 0
        %v267 = vsel %vm250, %v239, 0
        %v270 = vsel %vm250, %v240, 0
        %v273 = vsel %vm250, %v241, 0
        %vm275 = vcmask 1043456
        %v277 = vsel %vm275, %v242, 0
        %279 = vmatprep.subr.mxu0 0.0
        %280 = vmatpush1.msra.mxu0 %v277
        %281 = vmatprep.subr.mxu0 0.0
        %282 = vmatpush1.msra.mxu0 0.0
        %283 = vmatprep.subr.mxu0 0.0
        %284 = vmatpush1.msra.mxu0 0.0
        %285 = vmatprep.subr.mxu0 0.0
        %286 = vmatpush1.msra.mxu0 0.0
        %287 = vmatprep.subr.mxu0 0.0
        %288 = vmatpush1.msra.mxu0 0.0
        %289 = vmatprep.subr.mxu0 0.0
        %290 = vmatpush1.msra.mxu0 0.0
        %291 = vmatprep.subr.mxu0 0.0
        %292 = vmatpush1.msra.mxu0 0.0
        %293 = vmatprep.subr.mxu0 0.0
        %294 = vmatpush1.msra.mxu0 0.0
        %295 = vmatprep.subr.mxu0 0.0
        %296 = vmatpush1.msra.mxu0 0.0
        %297 = vmatprep.subr.mxu0 0.0
        %298 = vmatpush1.msra.mxu0 0.0
        %299 = vmatprep.subr.mxu0 0.0
        %300 = vmatpush1.msra.mxu0 0.0
        %301 = vmatprep.subr.mxu0 0.0
        %302 = vmatpush1.msra.mxu0 0.0
        %303 = vmatprep.subr.mxu0 0.0
        %304 = vmatpush1.msra.mxu0 0.0
        %305 = vmatprep.subr.mxu0 0.0
        %306 = vmatpush1.msra.mxu0 0.0
        %307 = vmatprep.subr.mxu0 0.0
        %308 = vmatpush1.msra.mxu0 0.0
        %309 = vmatprep.subr.mxu0 0.0
        %310 = vmatpush1.msra.mxu0 0.0
        %311 = vmatprep.subr.mxu0 0.0
        %312 = vmatpush1.msra.mxu0 0.0
        %313 = vmatprep.subr.mxu0 0.0
        %314 = vmatpush1.msra.mxu0 0.0
        %315 = vmatprep.subr.mxu0 0.0
        %316 = vmatpush1.msra.mxu0 0.0
        %317 = vmatprep.subr.mxu0 0.0
        %318 = vmatpush1.msra.mxu0 0.0
        %319 = vmatprep.subr.mxu0 0.0
        %320 = vmatpush1.msra.mxu0 0.0
        %321 = vmatprep.subr.mxu0 0.0
        %322 = vmatpush1.msra.mxu0 0.0
        %323 = vmatprep.subr.mxu0 0.0
        %324 = vmatpush1.msra.mxu0 0.0
        %325 = vmatprep.subr.mxu0 0.0
        %326 = vmatpush1.msra.mxu0 0.0
        %327 = vmatprep.subr.mxu0 0.0
        %328 = vmatpush1.msra.mxu0 0.0
        %329 = vmatprep.subr.mxu0 0.0
        %330 = vmatpush1.msra.mxu0 0.0
        %331 = vmatprep.subr.mxu0 0.0
        %332 = vmatpush1.msra.mxu0 0.0
        %333 = vmatprep.subr.mxu0 0.0
        %334 = vmatpush1.msra.mxu0 0.0
        %335 = vmatprep.subr.mxu0 0.0
        %336 = vmatpush1.msra.mxu0 0.0
        %337 = vmatprep.subr.mxu0 0.0
        %338 = vmatpush1.msra.mxu0 0.0
        %339 = vmatprep.subr.mxu0 0.0
        %340 = vmatpush1.msra.mxu0 0.0
        %341 = vmatprep.subr.mxu0 0.0
        %342 = vmatpush1.msra.mxu0 0.0
        %343 = vmatprep.mubr.f32.mxu0 0.0
        %344 = vmatmul.mubr.f32.gmra.mrb[0].mxu0 %v252
        %v345 = vpop.f32.mrb[0].mxu0
        %v346 = vadd.f32 %v248, %v345
        %v347 = vpop.f32.mrb[0].mxu0
        %348 = vmatprep.mubr.f32.mxu0 0.0
        %349 = vmatmul.mubr.f32.gmra.mrb[0].mxu0 %v255
        %v350 = vpop.f32.mrb[0].mxu0
        %v351 = vadd.f32 %v248, %v350
        %v352 = vpop.f32.mrb[0].mxu0
        %353 = vmatprep.mubr.f32.mxu0 0.0
        %354 = vmatmul.mubr.f32.gmra.mrb[0].mxu0 %v258
        %v355 = vpop.f32.mrb[0].mxu0
        %v356 = vadd.f32 %v248, %v355
        %v357 = vpop.f32.mrb[0].mxu0
        %358 = vmatprep.mubr.f32.mxu0 0.0
        %359 = vmatmul.mubr.f32.gmra.mrb[0].mxu0 %v261
        %v360 = vpop.f32.mrb[0].mxu0
        %v361 = vadd.f32 %v248, %v360
        %v362 = vpop.f32.mrb[0].mxu0
        %363 = vmatprep.mubr.f32.mxu0 0.0
        %364 = vmatmul.mubr.f32.gmra.mrb[0].mxu0 %v264
        %v365 = vpop.f32.mrb[0].mxu0
        %v366 = vadd.f32 %v248, %v365
        %v367 = vpop.f32.mrb[0].mxu0
        %368 = vmatprep.mubr.f32.mxu0 0.0
        %369 = vmatmul.mubr.f32.gmra.mrb[0].mxu0 %v267
        %v370 = vpop.f32.mrb[0].mxu0
        %v371 = vadd.f32 %v248, %v370
        %v372 = vpop.f32.mrb[0].mxu0
        %373 = vmatprep.mubr.f32.mxu0 0.0
        %374 = vmatmul.mubr.f32.gmra.mrb[0].mxu0 %v270
        %v375 = vpop.f32.mrb[0].mxu0
        %v376 = vadd.f32 %v248, %v375
        %v377 = vpop.f32.mrb[0].mxu0
        %378 = vmatprep.mubr.f32.mxu0 0.0
        %379 = vmatmul.mubr.f32.gmra.mrb[0].mxu0 %v273
        %v380 = vpop.f32.mrb[0].mxu0
        %v381 = vadd.f32 %v248, %v380
        %v382 = vpop.f32.mrb[0].mxu0
        %383 = vdwg.mxu0
        %vm384 = vcmask 130048
        %385 = vst.msk [vmem:[%s233] sm:$0xff] %vm384, %v346
        %386 = vst.msk [vmem:[%s233 + $0x8] sm:$0xff] %vm384, %v351
        %387 = vst.msk [vmem:[%s233 + $0x10] sm:$0xff] %vm384, %v356
        %388 = vst.msk [vmem:[%s233 + $0x18] sm:$0xff] %vm384, %v361
        %389 = vst.msk [vmem:[%s233 + $0x20] sm:$0xff] %vm384, %v366
        %390 = vst.msk [vmem:[%s233 + $0x28] sm:$0xff] %vm384, %v371
        %391 = vst.msk [vmem:[%s233 + $0x30] sm:$0xff] %vm384, %v376
        %392 = vst.msk [vmem:[%s233 + $0x38] sm:$0xff] %vm384, %v381
        %p393 = scmp.lt.s32.totalorder %s14, 1
        %s394 = scalar_select %p393, %s14, 1
        %s395 = smul.addr %s394, 8
        %s396 = smul.addr %s395, 8
        %s397 = scalar_lea.vmem %s3, %s396
        // Predicated region
        $region71: #{bottleneck_forward.6} parent=65 // pred_check
          %p398 = pneg %p100
        $region72: #{bottleneck_forward.6} parent=65 // pred_check_branch
          %400 = sbr.rel (%p398) target = $region74
        $region73: #{bottleneck_forward.6} parent=65 // pred_region
          _
        $region74: #{bottleneck_forward.6} parent=65 // pred_fallthru
          _
      $region66: #{bottleneck_forward.6} parent=5 // pred_fallthru
        _
      %p401 = scmp.le.s32.totalorder 2, %s9
      // Predicated region
      $region75: #{bottleneck_forward.6} parent=5 // pred_check
        %p402 = pneg %p401
      $region76: #{bottleneck_forward.6} parent=5 // pred_check_branch
        %404 = sbr.rel (%p402) target = $region78
      $region77: #{bottleneck_forward.6} parent=5 // pred_region
        %s405 = ssub.s32 %s9, 2
        // Predicated region
        $region79: #{bottleneck_forward.6} parent=77 // pred_check
          %p406 = pneg %p106
        $region80: #{bottleneck_forward.6} parent=77 // pred_check_branch
          %408 = sbr.rel (%p406) target = $region82
        $region81: #{bottleneck_forward.6} parent=77 // pred_region
          %p409 = scmp.lt.s32.totalorder %s15, 1
          %s410 = scalar_select %p409, %s15, 1
          %s411 = smul.addr %s410, 8
          %s412 = smul.addr %s411, 8
          %s413 = scalar_lea.vmem %s3, %s412
        $region82: #{bottleneck_forward.6} parent=77 // pred_fallthru
          _
      $region78: #{bottleneck_forward.6} parent=5 // pred_fallthru
        _
    $region6: #{bottleneck_forward.6} parent=1 // loop_footer
      %s13 = sadd.s32 1, %s9
    $region7: #{bottleneck_forward.6} parent=1 // loop_footer_branch
      %8 = sbr.rel target = $region3
    $region8: #{bottleneck_forward.6} parent=1 // loop_exit
      _

// kernel: bottleneck_forward.4
$region0: #{bottleneck_forward.4}
  #allocation0 [shape = 'u32[]', space=smem, size = 0x4, offset = 0x4, fixed_abs, tag = 'smem constant byte address 0x4 - core index']
  #allocation1 [shape = 'u32[144,128]{1,0:T(1,128)}', space=vmem, size = 0x12000, scoped, tag = 'internal scratch']
  %s0 = inlined_call_operand.vmem [shape: f32[512,4], index: 0, kind: input, shape index: {}]
  %s1 = inlined_call_operand.vmem [shape: f32[4,4], index: 1, kind: input, shape index: {}]
  %s2 = inlined_call_operand.vmem [shape: f32[1,4], index: 2, kind: input, shape index: {}]
  %s3 = inlined_call_operand.vmem [shape: f32[512,4], index: 3, kind: output, shape index: {}]
  %s4 = sld [smem:[#allocation0]]
  $region22: #{bottleneck_forward.4} parent=0
    _
  %s6 = ssub.s32 1, %s4
  %s7 = scalar_select 0, %s6, %s4
  // Predicated region
  $region2: #{bottleneck_forward.4} parent=0 // pred_check
    _
  $region3: #{bottleneck_forward.4} parent=0 // pred_check_branch
    %9 = sbr.rel (0) target = $region5
  $region4: #{bottleneck_forward.4} parent=0 // pred_region
    _
  $region5: #{bottleneck_forward.4} parent=0 // pred_fallthru
    _
  // Predicated region
  $region6: #{bottleneck_forward.4} parent=0 // pred_check
    _
  $region7: #{bottleneck_forward.4} parent=0 // pred_check_branch
    %11 = sbr.rel (0) target = $region9
  $region8: #{bottleneck_forward.4} parent=0 // pred_region
    _
  $region9: #{bottleneck_forward.4} parent=0 // pred_fallthru
    _
  // Predicated region
  $region10: #{bottleneck_forward.4} parent=0 // pred_check
    _
  $region11: #{bottleneck_forward.4} parent=0 // pred_check_branch
    %13 = sbr.rel (0) target = $region13
  $region12: #{bottleneck_forward.4} parent=0 // pred_region
    _
  $region13: #{bottleneck_forward.4} parent=0 // pred_fallthru
    _
  %v14 = vld [vmem:[%s0] sm:$0xff]
  %v15 = vld [vmem:[%s0 + $0x8] sm:$0xff]
  %v16 = vld [vmem:[%s0 + $0x10] sm:$0xff]
  %v17 = vld [vmem:[%s0 + $0x18] sm:$0xff]
  %v18 = vld [vmem:[%s0 + $0x20] sm:$0xff]
  %v19 = vld [vmem:[%s0 + $0x28] sm:$0xff]
  %v20 = vld [vmem:[%s0 + $0x30] sm:$0xff]
  %v21 = vld [vmem:[%s0 + $0x38] sm:$0xff]
  %v22 = vld [vmem:[%s0 + $0x40] sm:$0xff]
  %v23 = vld [vmem:[%s0 + $0x48] sm:$0xff]
  %v24 = vld [vmem:[%s0 + $0x50] sm:$0xff]
  %v25 = vld [vmem:[%s0 + $0x58] sm:$0xff]
  %v26 = vld [vmem:[%s0 + $0x60] sm:$0xff]
  %v27 = vld [vmem:[%s0 + $0x68] sm:$0xff]
  %v28 = vld [vmem:[%s0 + $0x70] sm:$0xff]
  %v29 = vld [vmem:[%s0 + $0x78] sm:$0xff]
  %v30 = vld [vmem:[%s0 + $0x80] sm:$0xff]
  %v31 = vld [vmem:[%s0 + $0x88] sm:$0xff]
  %v32 = vld [vmem:[%s0 + $0x90] sm:$0xff]
  %v33 = vld [vmem:[%s0 + $0x98] sm:$0xff]
  %v34 = vld [vmem:[%s0 + $0xa0] sm:$0xff]
  %v35 = vld [vmem:[%s0 + $0xa8] sm:$0xff]
  %v36 = vld [vmem:[%s0 + $0xb0] sm:$0xff]
  %v37 = vld [vmem:[%s0 + $0xb8] sm:$0xff]
  %v38 = vld [vmem:[%s0 + $0xc0] sm:$0xff]
  %v39 = vld [vmem:[%s0 + $0xc8] sm:$0xff]
  %v40 = vld [vmem:[%s0 + $0xd0] sm:$0xff]
  %v41 = vld [vmem:[%s0 + $0xd8] sm:$0xff]
  %v42 = vld [vmem:[%s0 + $0xe0] sm:$0xff]
  %v43 = vld [vmem:[%s0 + $0xe8] sm:$0xff]
  %v44 = vld [vmem:[%s0 + $0xf0] sm:$0xff]
  %v45 = vld [vmem:[%s0 + $0xf8] sm:$0xff]
  %v46 = vld [vmem:[%s0 + $0x100] sm:$0xff]
  %v47 = vld [vmem:[%s0 + $0x108] sm:$0xff]
  %v48 = vld [vmem:[%s0 + $0x110] sm:$0xff]
  %v49 = vld [vmem:[%s0 + $0x118] sm:$0xff]
  %v50 = vld [vmem:[%s0 + $0x120] sm:$0xff]
  %v51 = vld [vmem:[%s0 + $0x128] sm:$0xff]
  %v52 = vld [vmem:[%s0 + $0x130] sm:$0xff]
  %v53 = vld [vmem:[%s0 + $0x138] sm:$0xff]
  %v54 = vld [vmem:[%s0 + $0x140] sm:$0xff]
  %v55 = vld [vmem:[%s0 + $0x148] sm:$0xff]
  %v56 = vld [vmem:[%s0 + $0x150] sm:$0xff]
  %v57 = vld [vmem:[%s0 + $0x158] sm:$0xff]
  %v58 = vld [vmem:[%s0 + $0x160] sm:$0xff]
  %v59 = vld [vmem:[%s0 + $0x168] sm:$0xff]
  %v60 = vld [vmem:[%s0 + $0x170] sm:$0xff]
  %v61 = vld [vmem:[%s0 + $0x178] sm:$0xff]
  %v62 = vld [vmem:[%s0 + $0x180] sm:$0xff]
  %v63 = vld [vmem:[%s0 + $0x188] sm:$0xff]
  %v64 = vld [vmem:[%s0 + $0x190] sm:$0xff]
  %v65 = vld [vmem:[%s0 + $0x198] sm:$0xff]
  %v66 = vld [vmem:[%s0 + $0x1a0] sm:$0xff]
  %v67 = vld [vmem:[%s0 + $0x1a8] sm:$0xff]
  %v68 = vld [vmem:[%s0 + $0x1b0] sm:$0xff]
  %v69 = vld [vmem:[%s0 + $0x1b8] sm:$0xff]
  %v70 = vld [vmem:[%s0 + $0x1c0] sm:$0xff]
  %v71 = vld [vmem:[%s0 + $0x1c8] sm:$0xff]
  %v72 = vld [vmem:[%s0 + $0x1d0] sm:$0xff]
  %v73 = vld [vmem:[%s0 + $0x1d8] sm:$0xff]
  %v74 = vld [vmem:[%s0 + $0x1e0] sm:$0xff]
  %v75 = vld [vmem:[%s0 + $0x1e8] sm:$0xff]
  %v76 = vld [vmem:[%s0 + $0x1f0] sm:$0xff]
  %v77 = vld [vmem:[%s0 + $0x1f8] sm:$0xff]
  %v78 = vld [vmem:[%s1] sm:$0xf]
  %v79 = vld [vmem:[%s2] sm:$0x1]
  %v81 = vlaneseq
  %v82 = vshrl.u32 %v81, 7
  %v83 = vsub.s32 0, %v82
  %v84 = vrot.slane %v79, %v83
  %vm86 = vcmask 31744
  %v88 = vsel %vm86, %v14, 0
  %v91 = vsel %vm86, %v15, 0
  %v94 = vsel %vm86, %v16, 0
  %v97 = vsel %vm86, %v17, 0
  %v100 = vsel %vm86, %v18, 0
  %v103 = vsel %vm86, %v19, 0
  %v106 = vsel %vm86, %v20, 0
  %v109 = vsel %vm86, %v21, 0
  %v112 = vsel %vm86, %v22, 0
  %v115 = vsel %vm86, %v23, 0
  %v118 = vsel %vm86, %v24, 0
  %v121 = vsel %vm86, %v25, 0
  %v124 = vsel %vm86, %v26, 0
  %v127 = vsel %vm86, %v27, 0
  %v130 = vsel %vm86, %v28, 0
  %v133 = vsel %vm86, %v29, 0
  %v136 = vsel %vm86, %v30, 0
  %v139 = vsel %vm86, %v31, 0
  %v142 = vsel %vm86, %v32, 0
  %v145 = vsel %vm86, %v33, 0
  %v148 = vsel %vm86, %v34, 0
  %v151 = vsel %vm86, %v35, 0
  %v154 = vsel %vm86, %v36, 0
  %v157 = vsel %vm86, %v37, 0
  %v160 = vsel %vm86, %v38, 0
  %v163 = vsel %vm86, %v39, 0
  %v166 = vsel %vm86, %v40, 0
  %v169 = vsel %vm86, %v41, 0
  %v172 = vsel %vm86, %v42, 0
  %v175 = vsel %vm86, %v43, 0
  %v178 = vsel %vm86, %v44, 0
  %v181 = vsel %vm86, %v45, 0
  %v184 = vsel %vm86, %v46, 0
  %v187 = vsel %vm86, %v47, 0
  %v190 = vsel %vm86, %v48, 0
  %v193 = vsel %vm86, %v49, 0
  %v196 = vsel %vm86, %v50, 0
  %v199 = vsel %vm86, %v51, 0
  %v202 = vsel %vm86, %v52, 0
  %v205 = vsel %vm86, %v53, 0
  %v208 = vsel %vm86, %v54, 0
  %v211 = vsel %vm86, %v55, 0
  %v214 = vsel %vm86, %v56, 0
  %v217 = vsel %vm86, %v57, 0
  %v220 = vsel %vm86, %v58, 0
  %v223 = vsel %vm86, %v59, 0
  %v226 = vsel %vm86, %v60, 0
  %v229 = vsel %vm86, %v61, 0
  %v232 = vsel %vm86, %v62, 0
  %v235 = vsel %vm86, %v63, 0
  %v238 = vsel %vm86, %v64, 0
  %v241 = vsel %vm86, %v65, 0
  %v244 = vsel %vm86, %v66, 0
  %v247 = vsel %vm86, %v67, 0
  %v250 = vsel %vm86, %v68, 0
  %v253 = vsel %vm86, %v69, 0
  %v256 = vsel %vm86, %v70, 0
  %v259 = vsel %vm86, %v71, 0
  %v262 = vsel %vm86, %v72, 0
  %v265 = vsel %vm86, %v73, 0
  %v268 = vsel %vm86, %v74, 0
  %v271 = vsel %vm86, %v75, 0
  %v274 = vsel %vm86, %v76, 0
  %v277 = vsel %vm86, %v77, 0
  %vm279 = vcmask 1043456
  %v281 = vsel %vm279, %v78, 0
  %283 = vmatprep.subr.mxu0 0.0
  %284 = vmatpush1.msra.mxu0 %v281
  %285 = vmatprep.subr.mxu0 0.0
  %286 = vmatpush1.msra.mxu0 0.0
  %287 = vmatprep.subr.mxu0 0.0
  %288 = vmatpush1.msra.mxu0 0.0
  %289 = vmatprep.subr.mxu0 0.0
  %290 = vmatpush1.msra.mxu0 0.0
  %291 = vmatprep.subr.mxu0 0.0
  %292 = vmatpush1.msra.mxu0 0.0
  %293 = vmatprep.subr.mxu0 0.0
  %294 = vmatpush1.msra.mxu0 0.0
  %295 = vmatprep.subr.mxu0 0.0
  %296 = vmatpush1.msra.mxu0 0.0
  %297 = vmatprep.subr.mxu0 0.0
  %298 = vmatpush1.msra.mxu0 0.0
  %299 = vmatprep.subr.mxu0 0.0
  %300 = vmatpush1.msra.mxu0 0.0
  %301 = vmatprep.subr.mxu0 0.0
  %302 = vmatpush1.msra.mxu0 0.0
  %303 = vmatprep.subr.mxu0 0.0
  %304 = vmatpush1.msra.mxu0 0.0
  %305 = vmatprep.subr.mxu0 0.0
  %306 = vmatpush1.msra.mxu0 0.0
  %307 = vmatprep.subr.mxu0 0.0
  %308 = vmatpush1.msra.mxu0 0.0
  %309 = vmatprep.subr.mxu0 0.0
  %310 = vmatpush1.msra.mxu0 0.0
  %311 = vmatprep.subr.mxu0 0.0
  %312 = vmatpush1.msra.mxu0 0.0
  %313 = vmatprep.subr.mxu0 0.0
  %314 = vmatpush1.msra.mxu0 0.0
  %315 = vmatprep.subr.mxu0 0.0
  %316 = vmatpush1.msra.mxu0 0.0
  %317 = vmatprep.subr.mxu0 0.0
  %318 = vmatpush1.msra.mxu0 0.0
  %319 = vmatprep.subr.mxu0 0.0
  %320 = vmatpush1.msra.mxu0 0.0
  %321 = vmatprep.subr.mxu0 0.0
  %322 = vmatpush1.msra.mxu0 0.0
  %323 = vmatprep.subr.mxu0 0.0
  %324 = vmatpush1.msra.mxu0 0.0
  %325 = vmatprep.subr.mxu0 0.0
  %326 = vmatpush1.msra.mxu0 0.0
  %327 = vmatprep.subr.mxu0 0.0
  %328 = vmatpush1.msra.mxu0 0.0
  %329 = vmatprep.subr.mxu0 0.0
  %330 = vmatpush1.msra.mxu0 0.0
  %331 = vmatprep.subr.mxu0 0.0
  %332 = vmatpush1.msra.mxu0 0.0
  %333 = vmatprep.subr.mxu0 0.0
  %334 = vmatpush1.msra.mxu0 0.0
  %335 = vmatprep.subr.mxu0 0.0
  %336 = vmatpush1.msra.mxu0 0.0
  %337 = vmatprep.subr.mxu0 0.0
  %338 = vmatpush1.msra.mxu0 0.0
  %339 = vmatprep.subr.mxu0 0.0
  %340 = vmatpush1.msra.mxu0 0.0
  %341 = vmatprep.subr.mxu0 0.0
  %342 = vmatpush1.msra.mxu0 0.0
  %343 = vmatprep.subr.mxu0 0.0
  %344 = vmatpush1.msra.mxu0 0.0
  %345 = vmatprep.subr.mxu0 0.0
  %346 = vmatpush1.msra.mxu0 0.0
  %347 = vmatprep.mubr.f32.mxu0 0.0
  %348 = vmatmul.mubr.f32.gmra.mrb[0].mxu0 %v88
  %v349 = vpop.f32.mrb[0].mxu0
  %v350 = vadd.f32 %v84, %v349
  %v351 = vpop.f32.mrb[0].mxu0
  %352 = vmatprep.mubr.f32.mxu0 0.0
  %353 = vmatmul.mubr.f32.gmra.mrb[0].mxu0 %v91
  %v354 = vpop.f32.mrb[0].mxu0
  %v355 = vadd.f32 %v84, %v354
  %v356 = vpop.f32.mrb[0].mxu0
  %357 = vmatprep.mubr.f32.mxu0 0.0
  %358 = vmatmul.mubr.f32.gmra.mrb[0].mxu0 %v94
  %v359 = vpop.f32.mrb[0].mxu0
  %v360 = vadd.f32 %v84, %v359
  %v361 = vpop.f32.mrb[0].mxu0
  %362 = vmatprep.mubr.f32.mxu0 0.0
  %363 = vmatmul.mubr.f32.gmra.mrb[0].mxu0 %v97
  %v364 = vpop.f32.mrb[0].mxu0
  %v365 = vadd.f32 %v84, %v364
  %v366 = vpop.f32.mrb[0].mxu0
  %367 = vmatprep.mubr.f32.mxu0 0.0
  %368 = vmatmul.mubr.f32.gmra.mrb[0].mxu0 %v100
  %v369 = vpop.f32.mrb[0].mxu0
  %v370 = vadd.f32 %v84, %v369
  %v371 = vpop.f32.mrb[0].mxu0
  %372 = vmatprep.mubr.f32.mxu0 0.0
  %373 = vmatmul.mubr.f32.gmra.mrb[0].mxu0 %v103
  %v374 = vpop.f32.mrb[0].mxu0
  %v375 = vadd.f32 %v84, %v374
  %v376 = vpop.f32.mrb[0].mxu0
  %377 = vmatprep.mubr.f32.mxu0 0.0
  %378 = vmatmul.mubr.f32.gmra.mrb[0].mxu0 %v106
  %v379 = vpop.f32.mrb[0].mxu0
  %v380 = vadd.f32 %v84, %v379
  %v381 = vpop.f32.mrb[0].mxu0
  %382 = vmatprep.mubr.f32.mxu0 0.0
  %383 = vmatmul.mubr.f32.gmra.mrb[0].mxu0 %v109
  %v384 = vpop.f32.mrb[0].mxu0
  %v385 = vadd.f32 %v84, %v384
  %v386 = vpop.f32.mrb[0].mxu0
  %387 = vmatprep.mubr.f32.mxu0 0.0
  %388 = vmatmul.mubr.f32.gmra.mrb[0].mxu0 %v112
  %v389 = vpop.f32.mrb[0].mxu0
  %v390 = vadd.f32 %v84, %v389
  %v391 = vpop.f32.mrb[0].mxu0
  %392 = vmatprep.mubr.f32.mxu0 0.0
  %393 = vmatmul.mubr.f32.gmra.mrb[0].mxu0 %v115
  %v394 = vpop.f32.mrb[0].mxu0
  %v395 = vadd.f32 %v84, %v394
  %v396 = vpop.f32.mrb[0].mxu0
  %397 = vmatprep.mubr.f32.mxu0 0.0
  %398 = vmatmul.mubr.f32.gmra.mrb[0].mxu0 %v118
  %v399 = vpop.f32.mrb[0].mxu0
  %v400 = vadd.f32 %v84, %v399
  %v401 = vpop.f32.mrb[0].mxu0
  %402 = vmatprep.mubr.f32.mxu0 0.0
  %403 = vmatmul.mubr.f32.gmra.mrb[0].mxu0 %v121
  %v404 = vpop.f32.mrb[0].mxu0
  %v405 = vadd.f32 %v84, %v404
  %v406 = vpop.f32.mrb[0].mxu0
  %407 = vmatprep.mubr.f32.mxu0 0.0
  %408 = vmatmul.mubr.f32.gmra.mrb[0].mxu0 %v124
  %v409 = vpop.f32.mrb[0].mxu0
  %v410 = vadd.f32 %v84, %v409
  %v411 = vpop.f32.mrb[0].mxu0
  %412 = vmatprep.mubr.f32.mxu0 0.0
  %413 = vmatmul.mubr.f32.gmra.mrb[0].mxu0 %v127
  %v414 = vpop.f32.mrb[0].mxu0
  %v415 = vadd.f32 %v84, %v414
  %v416 = vpop.f32.mrb[0].mxu0
  %417 = vmatprep.mubr.f32.mxu0 0.0
  %418 = vmatmul.mubr.f32.gmra.mrb[0].mxu0 %v130
  %v419 = vpop.f32.mrb[0].mxu0
  %v420 = vadd.f32 %v84, %v419
  %v421 = vpop.f32.mrb[0].mxu0
  %422 = vmatprep.mubr.f32.mxu0 0.0
  %423 = vmatmul.mubr.f32.gmra.mrb[0].mxu0 %v133
  %v424 = vpop.f32.mrb[0].mxu0
  %v425 = vadd.f32 %v84, %v424
  %v426 = vpop.f32.mrb[0].mxu0
  %427 = vmatprep.mubr.f32.mxu0 0.0
  %428 = vmatmul.mubr.f32.gmra.mrb[0].mxu0 %v136
  %v429 = vpop.f32.mrb[0].mxu0
  %v430 = vadd.f32 %v84, %v429
  %v431 = vpop.f32.mrb[0].mxu0
  %432 = vmatprep.mubr.f32.mxu0 0.0
  %433 = vmatmul.mubr.f32.gmra.mrb[0].mxu0 %v139
  %v434 = vpop.f32.mrb[0].mxu0
  %v435 = vadd.f32 %v84, %v434
  %v436 = vpop.f32.mrb[0].mxu0
  %437 = vmatprep.mubr.f32.mxu0 0.0
  %438 = vmatmul.mubr.f32.gmra.mrb[0].mxu0 %v142
  %v439 = vpop.f32.mrb[0].mxu0
  %v440 = vadd.f32 %v84, %v439
  %v441 = vpop.f32.mrb[0].mxu0
  %442 = vmatprep.mubr.f32.mxu0 0.0
  %443 = vmatmul.mubr.f32.gmra.mrb[0].mxu0 %v145
  %v444 = vpop.f32.mrb[0].mxu0
  %v445 = vadd.f32 %v84, %v444
  %v446 = vpop.f32.mrb[0].mxu0
  %447 = vmatprep.mubr.f32.mxu0 0.0
  %448 = vmatmul.mubr.f32.gmra.mrb[0].mxu0 %v148
  %v449 = vpop.f32.mrb[0].mxu0
  %v450 = vadd.f32 %v84, %v449
  %v451 = vpop.f32.mrb[0].mxu0
  %452 = vmatprep.mubr.f32.mxu0 0.0
  %453 = vmatmul.mubr.f32.gmra.mrb[0].mxu0 %v151
  %v454 = vpop.f32.mrb[0].mxu0
  %v455 = vadd.f32 %v84, %v454
  %v456 = vpop.f32.mrb[0].mxu0
  %457 = vmatprep.mubr.f32.mxu0 0.0
  %458 = vmatmul.mubr.f32.gmra.mrb[0].mxu0 %v154
  %v459 = vpop.f32.mrb[0].mxu0
  %v460 = vadd.f32 %v84, %v459
  %v461 = vpop.f32.mrb[0].mxu0
  %462 = vmatprep.mubr.f32.mxu0 0.0
  %463 = vmatmul.mubr.f32.gmra.mrb[0].mxu0 %v157
  %v464 = vpop.f32.mrb[0].mxu0
  %v465 = vadd.f32 %v84, %v464
  %v466 = vpop.f32.mrb[0].mxu0
  %467 = vmatprep.mubr.f32.mxu0 0.0
  %468 = vmatmul.mubr.f32.gmra.mrb[0].mxu0 %v160
  %v469 = vpop.f32.mrb[0].mxu0
  %v470 = vadd.f32 %v84, %v469
  %v471 = vpop.f32.mrb[0].mxu0
  %472 = vmatprep.mubr.f32.mxu0 0.0
  %473 = vmatmul.mubr.f32.gmra.mrb[0].mxu0 %v163
  %v474 = vpop.f32.mrb[0].mxu0
  %v475 = vadd.f32 %v84, %v474
  %v476 = vpop.f32.mrb[0].mxu0
  %477 = vmatprep.mubr.f32.mxu0 0.0
  %478 = vmatmul.mubr.f32.gmra.mrb[0].mxu0 %v166
  %v479 = vpop.f32.mrb[0].mxu0
  %v480 = vadd.f32 %v84, %v479
  %v481 = vpop.f32.mrb[0].mxu0
  %482 = vmatprep.mubr.f32.mxu0 0.0
  %483 = vmatmul.mubr.f32.gmra.mrb[0].mxu0 %v169
  %v484 = vpop.f32.mrb[0].mxu0
  %v485 = vadd.f32 %v84, %v484
  %v486 = vpop.f32.mrb[0].mxu0
  %487 = vmatprep.mubr.f32.mxu0 0.0
  %488 = vmatmul.mubr.f32.gmra.mrb[0].mxu0 %v172
  %v489 = vpop.f32.mrb[0].mxu0
  %v490 = vadd.f32 %v84, %v489
  %v491 = vpop.f32.mrb[0].mxu0
  %492 = vmatprep.mubr.f32.mxu0 0.0
  %493 = vmatmul.mubr.f32.gmra.mrb[0].mxu0 %v175
  %v494 = vpop.f32.mrb[0].mxu0
  %v495 = vadd.f32 %v84, %v494
  %v496 = vpop.f32.mrb[0].mxu0
  %497 = vmatprep.mubr.f32.mxu0 0.0
  %498 = vmatmul.mubr.f32.gmra.mrb[0].mxu0 %v178
  %v499 = vpop.f32.mrb[0].mxu0
  %v500 = vadd.f32 %v84, %v499
  %v501 = vpop.f32.mrb[0].mxu0
  %502 = vmatprep.mubr.f32.mxu0 0.0
  %503 = vmatmul.mubr.f32.gmra.mrb[0].mxu0 %v181
  %v504 = vpop.f32.mrb[0].mxu0
  %v505 = vadd.f32 %v84, %v504
  %v506 = vpop.f32.mrb[0].mxu0
  %507 = vmatprep.mubr.f32.mxu0 0.0
  %508 = vmatmul.mubr.f32.gmra.mrb[0].mxu0 %v184
  %v509 = vpop.f32.mrb[0].mxu0
  %v510 = vadd.f32 %v84, %v509
  %v511 = vpop.f32.mrb[0].mxu0
  %512 = vmatprep.mubr.f32.mxu0 0.0
  %513 = vmatmul.mubr.f32.gmra.mrb[0].mxu0 %v187
  %v514 = vpop.f32.mrb[0].mxu0
  %v515 = vadd.f32 %v84, %v514
  %v516 = vpop.f32.mrb[0].mxu0
  %517 = vmatprep.mubr.f32.mxu0 0.0
  %518 = vmatmul.mubr.f32.gmra.mrb[0].mxu0 %v190
  %v519 = vpop.f32.mrb[0].mxu0
  %v520 = vadd.f32 %v84, %v519
  %v521 = vpop.f32.mrb[0].mxu0
  %522 = vmatprep.mubr.f32.mxu0 0.0
  %523 = vmatmul.mubr.f32.gmra.mrb[0].mxu0 %v193
  %v524 = vpop.f32.mrb[0].mxu0
  %v525 = vadd.f32 %v84, %v524
  %v526 = vpop.f32.mrb[0].mxu0
  %527 = vmatprep.mubr.f32.mxu0 0.0
  %528 = vmatmul.mubr.f32.gmra.mrb[0].mxu0 %v196
  %v529 = vpop.f32.mrb[0].mxu0
  %v530 = vadd.f32 %v84, %v529
  %v531 = vpop.f32.mrb[0].mxu0
  %532 = vmatprep.mubr.f32.mxu0 0.0
  %533 = vmatmul.mubr.f32.gmra.mrb[0].mxu0 %v199
  %v534 = vpop.f32.mrb[0].mxu0
  %v535 = vadd.f32 %v84, %v534
  %v536 = vpop.f32.mrb[0].mxu0
  %537 = vmatprep.mubr.f32.mxu0 0.0
  %538 = vmatmul.mubr.f32.gmra.mrb[0].mxu0 %v202
  %v539 = vpop.f32.mrb[0].mxu0
  %v540 = vadd.f32 %v84, %v539
  %v541 = vpop.f32.mrb[0].mxu0
  %542 = vmatprep.mubr.f32.mxu0 0.0
  %543 = vmatmul.mubr.f32.gmra.mrb[0].mxu0 %v205
  %v544 = vpop.f32.mrb[0].mxu0
  %v545 = vadd.f32 %v84, %v544
  %v546 = vpop.f32.mrb[0].mxu0
  %547 = vmatprep.mubr.f32.mxu0 0.0
  %548 = vmatmul.mubr.f32.gmra.mrb[0].mxu0 %v208
  %v549 = vpop.f32.mrb[0].mxu0
  %v550 = vadd.f32 %v84, %v549
  %v551 = vpop.f32.mrb[0].mxu0
  %552 = vmatprep.mubr.f32.mxu0 0.0
  %553 = vmatmul.mubr.f32.gmra.mrb[0].mxu0 %v211
  %v554 = vpop.f32.mrb[0].mxu0
  %v555 = vadd.f32 %v84, %v554
  %v556 = vpop.f32.mrb[0].mxu0
  %557 = vmatprep.mubr.f32.mxu0 0.0
  %558 = vmatmul.mubr.f32.gmra.mrb[0].mxu0 %v214
  %v559 = vpop.f32.mrb[0].mxu0
  %v560 = vadd.f32 %v84, %v559
  %v561 = vpop.f32.mrb[0].mxu0
  %562 = vmatprep.mubr.f32.mxu0 0.0
  %563 = vmatmul.mubr.f32.gmra.mrb[0].mxu0 %v217
  %v564 = vpop.f32.mrb[0].mxu0
  %v565 = vadd.f32 %v84, %v564
  %v566 = vpop.f32.mrb[0].mxu0
  %567 = vmatprep.mubr.f32.mxu0 0.0
  %568 = vmatmul.mubr.f32.gmra.mrb[0].mxu0 %v220
  %v569 = vpop.f32.mrb[0].mxu0
  %v570 = vadd.f32 %v84, %v569
  %v571 = vpop.f32.mrb[0].mxu0
  %572 = vmatprep.mubr.f32.mxu0 0.0
  %573 = vmatmul.mubr.f32.gmra.mrb[0].mxu0 %v223
  %v574 = vpop.f32.mrb[0].mxu0
  %v575 = vadd.f32 %v84, %v574
  %v576 = vpop.f32.mrb[0].mxu0
  %577 = vmatprep.mubr.f32.mxu0 0.0
  %578 = vmatmul.mubr.f32.gmra.mrb[0].mxu0 %v226
  %v579 = vpop.f32.mrb[0].mxu0
  %v580 = vadd.f32 %v84, %v579
  %v581 = vpop.f32.mrb[0].mxu0
  %582 = vmatprep.mubr.f32.mxu0 0.0
  %583 = vmatmul.mubr.f32.gmra.mrb[0].mxu0 %v229
  %v584 = vpop.f32.mrb[0].mxu0
  %v585 = vadd.f32 %v84, %v584
  %v586 = vpop.f32.mrb[0].mxu0
  %587 = vmatprep.mubr.f32.mxu0 0.0
  %588 = vmatmul.mubr.f32.gmra.mrb[0].mxu0 %v232
  %v589 = vpop.f32.mrb[0].mxu0
  %v590 = vadd.f32 %v84, %v589
  %v591 = vpop.f32.mrb[0].mxu0
  %592 = vmatprep.mubr.f32.mxu0 0.0
  %593 = vmatmul.mubr.f32.gmra.mrb[0].mxu0 %v235
  %v594 = vpop.f32.mrb[0].mxu0
  %v595 = vadd.f32 %v84, %v594
  %v596 = vpop.f32.mrb[0].mxu0
  %597 = vmatprep.mubr.f32.mxu0 0.0
  %598 = vmatmul.mubr.f32.gmra.mrb[0].mxu0 %v238
  %v599 = vpop.f32.mrb[0].mxu0
  %v600 = vadd.f32 %v84, %v599
  %v601 = vpop.f32.mrb[0].mxu0
  %602 = vmatprep.mubr.f32.mxu0 0.0
  %603 = vmatmul.mubr.f32.gmra.mrb[0].mxu0 %v241
  %v604 = vpop.f32.mrb[0].mxu0
  %v605 = vadd.f32 %v84, %v604
  %v606 = vpop.f32.mrb[0].mxu0
  %607 = vmatprep.mubr.f32.mxu0 0.0
  %608 = vmatmul.mubr.f32.gmra.mrb[0].mxu0 %v244
  %v609 = vpop.f32.mrb[0].mxu0
  %v610 = vadd.f32 %v84, %v609
  %v611 = vpop.f32.mrb[0].mxu0
  %612 = vmatprep.mubr.f32.mxu0 0.0
  %613 = vmatmul.mubr.f32.gmra.mrb[0].mxu0 %v247
  %v614 = vpop.f32.mrb[0].mxu0
  %v615 = vadd.f32 %v84, %v614
  %v616 = vpop.f32.mrb[0].mxu0
  %617 = vmatprep.mubr.f32.mxu0 0.0
  %618 = vmatmul.mubr.f32.gmra.mrb[0].mxu0 %v250
  %v619 = vpop.f32.mrb[0].mxu0
  %v620 = vadd.f32 %v84, %v619
  %v621 = vpop.f32.mrb[0].mxu0
  %622 = vmatprep.mubr.f32.mxu0 0.0
  %623 = vmatmul.mubr.f32.gmra.mrb[0].mxu0 %v253
  %v624 = vpop.f32.mrb[0].mxu0
  %v625 = vadd.f32 %v84, %v624
  %v626 = vpop.f32.mrb[0].mxu0
  %627 = vmatprep.mubr.f32.mxu0 0.0
  %628 = vmatmul.mubr.f32.gmra.mrb[0].mxu0 %v256
  %v629 = vpop.f32.mrb[0].mxu0
  %v630 = vadd.f32 %v84, %v629
  %v631 = vpop.f32.mrb[0].mxu0
  %632 = vmatprep.mubr.f32.mxu0 0.0
  %633 = vmatmul.mubr.f32.gmra.mrb[0].mxu0 %v259
  %v634 = vpop.f32.mrb[0].mxu0
  %v635 = vadd.f32 %v84, %v634
  %v636 = vpop.f32.mrb[0].mxu0
  %637 = vmatprep.mubr.f32.mxu0 0.0
  %638 = vmatmul.mubr.f32.gmra.mrb[0].mxu0 %v262
  %v639 = vpop.f32.mrb[0].mxu0
  %v640 = vadd.f32 %v84, %v639
  %v641 = vpop.f32.mrb[0].mxu0
  %642 = vmatprep.mubr.f32.mxu0 0.0
  %643 = vmatmul.mubr.f32.gmra.mrb[0].mxu0 %v265
  %v644 = vpop.f32.mrb[0].mxu0
  %v645 = vadd.f32 %v84, %v644
  %v646 = vpop.f32.mrb[0].mxu0
  %647 = vmatprep.mubr.f32.mxu0 0.0
  %648 = vmatmul.mubr.f32.gmra.mrb[0].mxu0 %v268
  %v649 = vpop.f32.mrb[0].mxu0
  %v650 = vadd.f32 %v84, %v649
  %v651 = vpop.f32.mrb[0].mxu0
  %652 = vmatprep.mubr.f32.mxu0 0.0
  %653 = vmatmul.mubr.f32.gmra.mrb[0].mxu0 %v271
  %v654 = vpop.f32.mrb[0].mxu0
  %v655 = vadd.f32 %v84, %v654
  %v656 = vpop.f32.mrb[0].mxu0
  %657 = vmatprep.mubr.f32.mxu0 0.0
  %658 = vmatmul.mubr.f32.gmra.mrb[0].mxu0 %v274
  %v659 = vpop.f32.mrb[0].mxu0
  %v660 = vadd.f32 %v84, %v659
  %v661 = vpop.f32.mrb[0].mxu0
  %662 = vmatprep.mubr.f32.mxu0 0.0
  %663 = vmatmul.mubr.f32.gmra.mrb[0].mxu0 %v277
  %v664 = vpop.f32.mrb[0].mxu0
  %v665 = vadd.f32 %v84, %v664
  %v666 = vpop.f32.mrb[0].mxu0
  %667 = vdwg.mxu0
  %v668 = vmax.f32 %v350, 0.0
  %v669 = vmax.f32 %v355, 0.0
  %v670 = vmax.f32 %v360, 0.0
  %v671 = vmax.f32 %v365, 0.0
  %v672 = vmax.f32 %v370, 0.0
  %v673 = vmax.f32 %v375, 0.0
  %v674 = vmax.f32 %v380, 0.0
  %v675 = vmax.f32 %v385, 0.0
  %v676 = vmax.f32 %v390, 0.0
  %v677 = vmax.f32 %v395, 0.0
  %v678 = vmax.f32 %v400, 0.0
  %v679 = vmax.f32 %v405, 0.0
  %v680 = vmax.f32 %v410, 0.0
  %v681 = vmax.f32 %v415, 0.0
  %v682 = vmax.f32 %v420, 0.0
  %v683 = vmax.f32 %v425, 0.0
  %v684 = vmax.f32 %v430, 0.0
  %v685 = vmax.f32 %v435, 0.0
  %v686 = vmax.f32 %v440, 0.0
  %v687 = vmax.f32 %v445, 0.0
  %v688 = vmax.f32 %v450, 0.0
  %v689 = vmax.f32 %v455, 0.0
  %v690 = vmax.f32 %v460, 0.0
  %v691 = vmax.f32 %v465, 0.0
  %v692 = vmax.f32 %v470, 0.0
  %v693 = vmax.f32 %v475, 0.0
  %v694 = vmax.f32 %v480, 0.0
  %v695 = vmax.f32 %v485, 0.0
  %v696 = vmax.f32 %v490, 0.0
  %v697 = vmax.f32 %v495, 0.0
  %v698 = vmax.f32 %v500, 0.0
  %v699 = vmax.f32 %v505, 0.0
  %v700 = vmax.f32 %v510, 0.0
  %v701 = vmax.f32 %v515, 0.0
  %v702 = vmax.f32 %v520, 0.0
  %v703 = vmax.f32 %v525, 0.0
  %v704 = vmax.f32 %v530, 0.0
  %v705 = vmax.f32 %v535, 0.0
  %v706 = vmax.f32 %v540, 0.0
  %v707 = vmax.f32 %v545, 0.0
  %v708 = vmax.f32 %v550, 0.0
  %v709 = vmax.f32 %v555, 0.0
  %v710 = vmax.f32 %v560, 0.0
  %v711 = vmax.f32 %v565, 0.0
  %v712 = vmax.f32 %v570, 0.0
  %v713 = vmax.f32 %v575, 0.0
  %v714 = vmax.f32 %v580, 0.0
  %v715 = vmax.f32 %v585, 0.0
  %v716 = vmax.f32 %v590, 0.0
  %v717 = vmax.f32 %v595, 0.0
  %v718 = vmax.f32 %v600, 0.0
  %v719 = vmax.f32 %v605, 0.0
  %v720 = vmax.f32 %v610, 0.0
  %v721 = vmax.f32 %v615, 0.0
  %v722 = vmax.f32 %v620, 0.0
  %v723 = vmax.f32 %v625, 0.0
  %v724 = vmax.f32 %v630, 0.0
  %v725 = vmax.f32 %v635, 0.0
  %v726 = vmax.f32 %v640, 0.0
  %v727 = vmax.f32 %v645, 0.0
  %v728 = vmax.f32 %v650, 0.0
  %v729 = vmax.f32 %v655, 0.0
  %v730 = vmax.f32 %v660, 0.0
  %v731 = vmax.f32 %v665, 0.0
  %732 = vst.msk [vmem:[%s3] sm:$0xff] %vm86, %v668
  %733 = vst.msk [vmem:[%s3 + $0x8] sm:$0xff] %vm86, %v669
  %734 = vst.msk [vmem:[%s3 + $0x10] sm:$0xff] %vm86, %v670
  %735 = vst.msk [vmem:[%s3 + $0x18] sm:$0xff] %vm86, %v671
  %736 = vst.msk [vmem:[%s3 + $0x20] sm:$0xff] %vm86, %v672
  %737 = vst.msk [vmem:[%s3 + $0x28] sm:$0xff] %vm86, %v673
  %738 = vst.msk [vmem:[%s3 + $0x30] sm:$0xff] %vm86, %v674
  %739 = vst.msk [vmem:[%s3 + $0x38] sm:$0xff] %vm86, %v675
  %740 = vst.msk [vmem:[%s3 + $0x40] sm:$0xff] %vm86, %v676
  %741 = vst.msk [vmem:[%s3 + $0x48] sm:$0xff] %vm86, %v677
  %742 = vst.msk [vmem:[%s3 + $0x50] sm:$0xff] %vm86, %v678
  %743 = vst.msk [vmem:[%s3 + $0x58] sm:$0xff] %vm86, %v679
  %744 = vst.msk [vmem:[%s3 + $0x60] sm:$0xff] %vm86, %v680
  %745 = vst.msk [vmem:[%s3 + $0x68] sm:$0xff] %vm86, %v681
  %746 = vst.msk [vmem:[%s3 + $0x70] sm:$0xff] %vm86, %v682
  %747 = vst.msk [vmem:[%s3 + $0x78] sm:$0xff] %vm86, %v683
  %748 = vst.msk [vmem:[%s3 + $0x80] sm:$0xff] %vm86, %v684
  %749 = vst.msk [vmem:[%s3 + $0x88] sm:$0xff] %vm86, %v685
  %750 = vst.msk [vmem:[%s3 + $0x90] sm:$0xff] %vm86, %v686
  %751 = vst.msk [vmem:[%s3 + $0x98] sm:$0xff] %vm86, %v687
  %752 = vst.msk [vmem:[%s3 + $0xa0] sm:$0xff] %vm86, %v688
  %753 = vst.msk [vmem:[%s3 + $0xa8] sm:$0xff] %vm86, %v689
  %754 = vst.msk [vmem:[%s3 + $0xb0] sm:$0xff] %vm86, %v690
  %755 = vst.msk [vmem:[%s3 + $0xb8] sm:$0xff] %vm86, %v691
  %756 = vst.msk [vmem:[%s3 + $0xc0] sm:$0xff] %vm86, %v692
  %757 = vst.msk [vmem:[%s3 + $0xc8] sm:$0xff] %vm86, %v693
  %758 = vst.msk [vmem:[%s3 + $0xd0] sm:$0xff] %vm86, %v694
  %759 = vst.msk [vmem:[%s3 + $0xd8] sm:$0xff] %vm86, %v695
  %760 = vst.msk [vmem:[%s3 + $0xe0] sm:$0xff] %vm86, %v696
  %761 = vst.msk [vmem:[%s3 + $0xe8] sm:$0xff] %vm86, %v697
  %762 = vst.msk [vmem:[%s3 + $0xf0] sm:$0xff] %vm86, %v698
  %763 = vst.msk [vmem:[%s3 + $0xf8] sm:$0xff] %vm86, %v699
  %764 = vst.msk [vmem:[%s3 + $0x100] sm:$0xff] %vm86, %v700
  %765 = vst.msk [vmem:[%s3 + $0x108] sm:$0xff] %vm86, %v701
  %766 = vst.msk [vmem:[%s3 + $0x110] sm:$0xff] %vm86, %v702
  %767 = vst.msk [vmem:[%s3 + $0x118] sm:$0xff] %vm86, %v703
  %768 = vst.msk [vmem:[%s3 + $0x120] sm:$0xff] %vm86, %v704
  %769 = vst.msk [vmem:[%s3 + $0x128] sm:$0xff] %vm86, %v705
  %770 = vst.msk [vmem:[%s3 + $0x130] sm:$0xff] %vm86, %v706
  %771 = vst.msk [vmem:[%s3 + $0x138] sm:$0xff] %vm86, %v707
  %772 = vst.msk [vmem:[%s3 + $0x140] sm:$0xff] %vm86, %v708
  %773 = vst.msk [vmem:[%s3 + $0x148] sm:$0xff] %vm86, %v709
  %774 = vst.msk [vmem:[%s3 + $0x150] sm:$0xff] %vm86, %v710
  %775 = vst.msk [vmem:[%s3 + $0x158] sm:$0xff] %vm86, %v711
  %776 = vst.msk [vmem:[%s3 + $0x160] sm:$0xff] %vm86, %v712
  %777 = vst.msk [vmem:[%s3 + $0x168] sm:$0xff] %vm86, %v713
  %778 = vst.msk [vmem:[%s3 + $0x170] sm:$0xff] %vm86, %v714
  %779 = vst.msk [vmem:[%s3 + $0x178] sm:$0xff] %vm86, %v715
  %780 = vst.msk [vmem:[%s3 + $0x180] sm:$0xff] %vm86, %v716
  %781 = vst.msk [vmem:[%s3 + $0x188] sm:$0xff] %vm86, %v717
  %782 = vst.msk [vmem:[%s3 + $0x190] sm:$0xff] %vm86, %v718
  %783 = vst.msk [vmem:[%s3 + $0x198] sm:$0xff] %vm86, %v719
  %784 = vst.msk [vmem:[%s3 + $0x1a0] sm:$0xff] %vm86, %v720
  %785 = vst.msk [vmem:[%s3 + $0x1a8] sm:$0xff] %vm86, %v721
  %786 = vst.msk [vmem:[%s3 + $0x1b0] sm:$0xff] %vm86, %v722
  %787 = vst.msk [vmem:[%s3 + $0x1b8] sm:$0xff] %vm86, %v723
  %788 = vst.msk [vmem:[%s3 + $0x1c0] sm:$0xff] %vm86, %v724
  %789 = vst.msk [vmem:[%s3 + $0x1c8] sm:$0xff] %vm86, %v725
  %790 = vst.msk [vmem:[%s3 + $0x1d0] sm:$0xff] %vm86, %v726
  %791 = vst.msk [vmem:[%s3 + $0x1d8] sm:$0xff] %vm86, %v727
  %792 = vst.msk [vmem:[%s3 + $0x1e0] sm:$0xff] %vm86, %v728
  %793 = vst.msk [vmem:[%s3 + $0x1e8] sm:$0xff] %vm86, %v729
  %794 = vst.msk [vmem:[%s3 + $0x1f0] sm:$0xff] %vm86, %v730
  %795 = vst.msk [vmem:[%s3 + $0x1f8] sm:$0xff] %vm86, %v731
  // Predicated region
  $region14: #{bottleneck_forward.4} parent=0 // pred_check
    _
  $region15: #{bottleneck_forward.4} parent=0 // pred_check_branch
    %797 = sbr.rel (0) target = $region17
  $region16: #{bottleneck_forward.4} parent=0 // pred_region
    _
  $region17: #{bottleneck_forward.4} parent=0 // pred_fallthru
    _
  // Predicated region
  $region18: #{bottleneck_forward.4} parent=0 // pred_check
    _
  $region19: #{bottleneck_forward.4} parent=0 // pred_check_branch
    %799 = sbr.rel (0) target = $region21
  $region20: #{bottleneck_forward.4} parent=0 // pred_region
    _
  $region21: #{bottleneck_forward.4} parent=0 // pred_fallthru
    _

// kernel: bottleneck_forward.7
$region0: #{bottleneck_forward.7}
  #allocation0 [shape = 'u32[]', space=smem, size = 0x4, offset = 0x4, fixed_abs, tag = 'smem constant byte address 0x4 - core index']
  #allocation1 [shape = 'u32[144,128]{1,0:T(1,128)}', space=vmem, size = 0x12000, scoped, tag = 'internal scratch']
  %s0 = inlined_call_operand.vmem [shape: f32[128,4], index: 0, kind: input, shape index: {}]
  %s1 = inlined_call_operand.vmem [shape: f32[4,16], index: 1, kind: input, shape index: {}]
  %s2 = inlined_call_operand.vmem [shape: f32[1,16], index: 2, kind: input, shape index: {}]
  %s3 = inlined_call_operand.vmem [shape: f32[128,16], index: 3, kind: input, shape index: {}]
  %s4 = inlined_call_operand.hbm [shape: f32[128,16], index: 4, kind: output, shape index: {}]
  %s5 = sld [smem:[#allocation0]]
  $region26: #{bottleneck_forward.7} parent=0
    _
  %s7 = ssub.s32 1, %s5
  %s8 = scalar_select 0, %s7, %s5
  $region1: #{bottleneck_forward.7} parent=0
    #allocation2 [shape = 'u8[65536]{0}', space=vmem, size = 0x10000, scoped, tag = 'output window, operand 0, single buffered']
    #allocation3 [shape = 's32[1]{0}', space=sflag, size = 0x4, scoped, tag = 'scoped memory for bottleneck_forward.7']
    %9 = vsyncpa [#allocation3], 0
    // Predicated region
    $region2: #{bottleneck_forward.7} parent=1 // pred_check
      _
    $region3: #{bottleneck_forward.7} parent=1 // pred_check_branch
      %11 = sbr.rel (0) target = $region5
    $region4: #{bottleneck_forward.7} parent=1 // pred_region
      _
    $region5: #{bottleneck_forward.7} parent=1 // pred_fallthru
      _
    // Predicated region
    $region6: #{bottleneck_forward.7} parent=1 // pred_check
      _
    $region7: #{bottleneck_forward.7} parent=1 // pred_check_branch
      %13 = sbr.rel (0) target = $region9
    $region8: #{bottleneck_forward.7} parent=1 // pred_region
      _
    $region9: #{bottleneck_forward.7} parent=1 // pred_fallthru
      _
    // Predicated region
    $region10: #{bottleneck_forward.7} parent=1 // pred_check
      _
    $region11: #{bottleneck_forward.7} parent=1 // pred_check_branch
      %15 = sbr.rel (0) target = $region13
    $region12: #{bottleneck_forward.7} parent=1 // pred_region
      _
    $region13: #{bottleneck_forward.7} parent=1 // pred_fallthru
      _
    // Predicated region
    $region14: #{bottleneck_forward.7} parent=1 // pred_check
      _
    $region15: #{bottleneck_forward.7} parent=1 // pred_check_branch
      %17 = sbr.rel (0) target = $region17
    $region16: #{bottleneck_forward.7} parent=1 // pred_region
      _
    $region17: #{bottleneck_forward.7} parent=1 // pred_fallthru
      _
    %v18 = vld [vmem:[%s0] sm:$0xff]
    %v19 = vld [vmem:[%s0 + $0x8] sm:$0xff]
    %v20 = vld [vmem:[%s0 + $0x10] sm:$0xff]
    %v21 = vld [vmem:[%s0 + $0x18] sm:$0xff]
    %v22 = vld [vmem:[%s0 + $0x20] sm:$0xff]
    %v23 = vld [vmem:[%s0 + $0x28] sm:$0xff]
    %v24 = vld [vmem:[%s0 + $0x30] sm:$0xff]
    %v25 = vld [vmem:[%s0 + $0x38] sm:$0xff]
    %v26 = vld [vmem:[%s0 + $0x40] sm:$0xff]
    %v27 = vld [vmem:[%s0 + $0x48] sm:$0xff]
    %v28 = vld [vmem:[%s0 + $0x50] sm:$0xff]
    %v29 = vld [vmem:[%s0 + $0x58] sm:$0xff]
    %v30 = vld [vmem:[%s0 + $0x60] sm:$0xff]
    %v31 = vld [vmem:[%s0 + $0x68] sm:$0xff]
    %v32 = vld [vmem:[%s0 + $0x70] sm:$0xff]
    %v33 = vld [vmem:[%s0 + $0x78] sm:$0xff]
    %v34 = vld [vmem:[%s1] sm:$0xf]
    %v35 = vld [vmem:[%s2] sm:$0x1]
    %v37 = vlaneseq
    %v38 = vshrl.u32 %v37, 7
    %v39 = vsub.s32 0, %v38
    %v40 = vrot.slane %v35, %v39
    %vm42 = vcmask 31744
    %v44 = vsel %vm42, %v18, 0
    %v47 = vsel %vm42, %v19, 0
    %v50 = vsel %vm42, %v20, 0
    %v53 = vsel %vm42, %v21, 0
    %v56 = vsel %vm42, %v22, 0
    %v59 = vsel %vm42, %v23, 0
    %v62 = vsel %vm42, %v24, 0
    %v65 = vsel %vm42, %v25, 0
    %v68 = vsel %vm42, %v26, 0
    %v71 = vsel %vm42, %v27, 0
    %v74 = vsel %vm42, %v28, 0
    %v77 = vsel %vm42, %v29, 0
    %v80 = vsel %vm42, %v30, 0
    %v83 = vsel %vm42, %v31, 0
    %v86 = vsel %vm42, %v32, 0
    %v89 = vsel %vm42, %v33, 0
    %vm91 = vcmask 1043456
    %v93 = vsel %vm91, %v34, 0
    %95 = vmatprep.subr.mxu0 0.0
    %96 = vmatpush1.msra.mxu0 %v93
    %97 = vmatprep.subr.mxu0 0.0
    %98 = vmatpush1.msra.mxu0 0.0
    %99 = vmatprep.subr.mxu0 0.0
    %100 = vmatpush1.msra.mxu0 0.0
    %101 = vmatprep.subr.mxu0 0.0
    %102 = vmatpush1.msra.mxu0 0.0
    %103 = vmatprep.subr.mxu0 0.0
    %104 = vmatpush1.msra.mxu0 0.0
    %105 = vmatprep.subr.mxu0 0.0
    %106 = vmatpush1.msra.mxu0 0.0
    %107 = vmatprep.subr.mxu0 0.0
    %108 = vmatpush1.msra.mxu0 0.0
    %109 = vmatprep.subr.mxu0 0.0
    %110 = vmatpush1.msra.mxu0 0.0
    %111 = vmatprep.subr.mxu0 0.0
    %112 = vmatpush1.msra.mxu0 0.0
    %113 = vmatprep.subr.mxu0 0.0
    %114 = vmatpush1.msra.mxu0 0.0
    %115 = vmatprep.subr.mxu0 0.0
    %116 = vmatpush1.msra.mxu0 0.0
    %117 = vmatprep.subr.mxu0 0.0
    %118 = vmatpush1.msra.mxu0 0.0
    %119 = vmatprep.subr.mxu0 0.0
    %120 = vmatpush1.msra.mxu0 0.0
    %121 = vmatprep.subr.mxu0 0.0
    %122 = vmatpush1.msra.mxu0 0.0
    %123 = vmatprep.subr.mxu0 0.0
    %124 = vmatpush1.msra.mxu0 0.0
    %125 = vmatprep.subr.mxu0 0.0
    %126 = vmatpush1.msra.mxu0 0.0
    %127 = vmatprep.subr.mxu0 0.0
    %128 = vmatpush1.msra.mxu0 0.0
    %129 = vmatprep.subr.mxu0 0.0
    %130 = vmatpush1.msra.mxu0 0.0
    %131 = vmatprep.subr.mxu0 0.0
    %132 = vmatpush1.msra.mxu0 0.0
    %133 = vmatprep.subr.mxu0 0.0
    %134 = vmatpush1.msra.mxu0 0.0
    %135 = vmatprep.subr.mxu0 0.0
    %136 = vmatpush1.msra.mxu0 0.0
    %137 = vmatprep.subr.mxu0 0.0
    %138 = vmatpush1.msra.mxu0 0.0
    %139 = vmatprep.subr.mxu0 0.0
    %140 = vmatpush1.msra.mxu0 0.0
    %141 = vmatprep.subr.mxu0 0.0
    %142 = vmatpush1.msra.mxu0 0.0
    %143 = vmatprep.subr.mxu0 0.0
    %144 = vmatpush1.msra.mxu0 0.0
    %145 = vmatprep.subr.mxu0 0.0
    %146 = vmatpush1.msra.mxu0 0.0
    %147 = vmatprep.subr.mxu0 0.0
    %148 = vmatpush1.msra.mxu0 0.0
    %149 = vmatprep.subr.mxu0 0.0
    %150 = vmatpush1.msra.mxu0 0.0
    %151 = vmatprep.subr.mxu0 0.0
    %152 = vmatpush1.msra.mxu0 0.0
    %153 = vmatprep.subr.mxu0 0.0
    %154 = vmatpush1.msra.mxu0 0.0
    %155 = vmatprep.subr.mxu0 0.0
    %156 = vmatpush1.msra.mxu0 0.0
    %157 = vmatprep.subr.mxu0 0.0
    %158 = vmatpush1.msra.mxu0 0.0
    %159 = vmatprep.mubr.f32.mxu0 0.0
    %160 = vmatmul.mubr.f32.gmra.mrb[0].mxu0 %v44
    %v161 = vpop.f32.mrb[0].mxu0
    %v162 = vadd.f32 %v40, %v161
    %v163 = vpop.f32.mrb[0].mxu0
    %164 = vmatprep.mubr.f32.mxu0 0.0
    %165 = vmatmul.mubr.f32.gmra.mrb[0].mxu0 %v47
    %v166 = vpop.f32.mrb[0].mxu0
    %v167 = vadd.f32 %v40, %v166
    %v168 = vpop.f32.mrb[0].mxu0
    %169 = vmatprep.mubr.f32.mxu0 0.0
    %170 = vmatmul.mubr.f32.gmra.mrb[0].mxu0 %v50
    %v171 = vpop.f32.mrb[0].mxu0
    %v172 = vadd.f32 %v40, %v171
    %v173 = vpop.f32.mrb[0].mxu0
    %174 = vmatprep.mubr.f32.mxu0 0.0
    %175 = vmatmul.mubr.f32.gmra.mrb[0].mxu0 %v53
    %v176 = vpop.f32.mrb[0].mxu0
    %v177 = vadd.f32 %v40, %v176
    %v178 = vpop.f32.mrb[0].mxu0
    %179 = vmatprep.mubr.f32.mxu0 0.0
    %180 = vmatmul.mubr.f32.gmra.mrb[0].mxu0 %v56
    %v181 = vpop.f32.mrb[0].mxu0
    %v182 = vadd.f32 %v40, %v181
    %v183 = vpop.f32.mrb[0].mxu0
    %184 = vmatprep.mubr.f32.mxu0 0.0
    %185 = vmatmul.mubr.f32.gmra.mrb[0].mxu0 %v59
    %v186 = vpop.f32.mrb[0].mxu0
    %v187 = vadd.f32 %v40, %v186
    %v188 = vpop.f32.mrb[0].mxu0
    %189 = vmatprep.mubr.f32.mxu0 0.0
    %190 = vmatmul.mubr.f32.gmra.mrb[0].mxu0 %v62
    %v191 = vpop.f32.mrb[0].mxu0
    %v192 = vadd.f32 %v40, %v191
    %v193 = vpop.f32.mrb[0].mxu0
    %194 = vmatprep.mubr.f32.mxu0 0.0
    %195 = vmatmul.mubr.f32.gmra.mrb[0].mxu0 %v65
    %v196 = vpop.f32.mrb[0].mxu0
    %v197 = vadd.f32 %v40, %v196
    %v198 = vpop.f32.mrb[0].mxu0
    %199 = vmatprep.mubr.f32.mxu0 0.0
    %200 = vmatmul.mubr.f32.gmra.mrb[0].mxu0 %v68
    %v201 = vpop.f32.mrb[0].mxu0
    %v202 = vadd.f32 %v40, %v201
    %v203 = vpop.f32.mrb[0].mxu0
    %204 = vmatprep.mubr.f32.mxu0 0.0
    %205 = vmatmul.mubr.f32.gmra.mrb[0].mxu0 %v71
    %v206 = vpop.f32.mrb[0].mxu0
    %v207 = vadd.f32 %v40, %v206
    %v208 = vpop.f32.mrb[0].mxu0
    %209 = vmatprep.mubr.f32.mxu0 0.0
    %210 = vmatmul.mubr.f32.gmra.mrb[0].mxu0 %v74
    %v211 = vpop.f32.mrb[0].mxu0
    %v212 = vadd.f32 %v40, %v211
    %v213 = vpop.f32.mrb[0].mxu0
    %214 = vmatprep.mubr.f32.mxu0 0.0
    %215 = vmatmul.mubr.f32.gmra.mrb[0].mxu0 %v77
    %v216 = vpop.f32.mrb[0].mxu0
    %v217 = vadd.f32 %v40, %v216
    %v218 = vpop.f32.mrb[0].mxu0
    %219 = vmatprep.mubr.f32.mxu0 0.0
    %220 = vmatmul.mubr.f32.gmra.mrb[0].mxu0 %v80
    %v221 = vpop.f32.mrb[0].mxu0
    %v222 = vadd.f32 %v40, %v221
    %v223 = vpop.f32.mrb[0].mxu0
    %224 = vmatprep.mubr.f32.mxu0 0.0
    %225 = vmatmul.mubr.f32.gmra.mrb[0].mxu0 %v83
    %v226 = vpop.f32.mrb[0].mxu0
    %v227 = vadd.f32 %v40, %v226
    %v228 = vpop.f32.mrb[0].mxu0
    %229 = vmatprep.mubr.f32.mxu0 0.0
    %230 = vmatmul.mubr.f32.gmra.mrb[0].mxu0 %v86
    %v231 = vpop.f32.mrb[0].mxu0
    %v232 = vadd.f32 %v40, %v231
    %v233 = vpop.f32.mrb[0].mxu0
    %234 = vmatprep.mubr.f32.mxu0 0.0
    %235 = vmatmul.mubr.f32.gmra.mrb[0].mxu0 %v89
    %v236 = vpop.f32.mrb[0].mxu0
    %v237 = vadd.f32 %v40, %v236
    %v238 = vpop.f32.mrb[0].mxu0
    %239 = vdwg.mxu0
    %v240 = vld [vmem:[%s3] sm:$0xff]
    %v241 = vld [vmem:[%s3 + $0x8] sm:$0xff]
    %v242 = vld [vmem:[%s3 + $0x10] sm:$0xff]
    %v243 = vld [vmem:[%s3 + $0x18] sm:$0xff]
    %v244 = vld [vmem:[%s3 + $0x20] sm:$0xff]
    %v245 = vld [vmem:[%s3 + $0x28] sm:$0xff]
    %v246 = vld [vmem:[%s3 + $0x30] sm:$0xff]
    %v247 = vld [vmem:[%s3 + $0x38] sm:$0xff]
    %v248 = vld [vmem:[%s3 + $0x40] sm:$0xff]
    %v249 = vld [vmem:[%s3 + $0x48] sm:$0xff]
    %v250 = vld [vmem:[%s3 + $0x50] sm:$0xff]
    %v251 = vld [vmem:[%s3 + $0x58] sm:$0xff]
    %v252 = vld [vmem:[%s3 + $0x60] sm:$0xff]
    %v253 = vld [vmem:[%s3 + $0x68] sm:$0xff]
    %v254 = vld [vmem:[%s3 + $0x70] sm:$0xff]
    %v255 = vld [vmem:[%s3 + $0x78] sm:$0xff]
    %v256 = vadd.f32 %v162, %v240
    %v257 = vadd.f32 %v167, %v241
    %v258 = vadd.f32 %v172, %v242
    %v259 = vadd.f32 %v177, %v243
    %v260 = vadd.f32 %v182, %v244
    %v261 = vadd.f32 %v187, %v245
    %v262 = vadd.f32 %v192, %v246
    %v263 = vadd.f32 %v197, %v247
    %v264 = vadd.f32 %v202, %v248
    %v265 = vadd.f32 %v207, %v249
    %v266 = vadd.f32 %v212, %v250
    %v267 = vadd.f32 %v217, %v251
    %v268 = vadd.f32 %v222, %v252
    %v269 = vadd.f32 %v227, %v253
    %v270 = vadd.f32 %v232, %v254
    %v271 = vadd.f32 %v237, %v255
    %v272 = vmax.f32 %v256, 0.0
    %v273 = vmax.f32 %v257, 0.0
    %v274 = vmax.f32 %v258, 0.0
    %v275 = vmax.f32 %v259, 0.0
    %v276 = vmax.f32 %v260, 0.0
    %v277 = vmax.f32 %v261, 0.0
    %v278 = vmax.f32 %v262, 0.0
    %v279 = vmax.f32 %v263, 0.0
    %v280 = vmax.f32 %v264, 0.0
    %v281 = vmax.f32 %v265, 0.0
    %v282 = vmax.f32 %v266, 0.0
    %v283 = vmax.f32 %v267, 0.0
    %v284 = vmax.f32 %v268, 0.0
    %v285 = vmax.f32 %v269, 0.0
    %v286 = vmax.f32 %v270, 0.0
    %v287 = vmax.f32 %v271, 0.0
    %vm288 = vcmask 130048
    %289 = vst.msk [vmem:[#allocation2] sm:$0xff] %vm288, %v272
    %290 = vst.msk [vmem:[#allocation2 + $0x8] sm:$0xff] %vm288, %v273
    %291 = vst.msk [vmem:[#allocation2 + $0x10] sm:$0xff] %vm288, %v274
    %292 = vst.msk [vmem:[#allocation2 + $0x18] sm:$0xff] %vm288, %v275
    %293 = vst.msk [vmem:[#allocation2 + $0x20] sm:$0xff] %vm288, %v276
    %294 = vst.msk [vmem:[#allocation2 + $0x28] sm:$0xff] %vm288, %v277
    %295 = vst.msk [vmem:[#allocation2 + $0x30] sm:$0xff] %vm288, %v278
    %296 = vst.msk [vmem:[#allocation2 + $0x38] sm:$0xff] %vm288, %v279
    %297 = vst.msk [vmem:[#allocation2 + $0x40] sm:$0xff] %vm288, %v280
    %298 = vst.msk [vmem:[#allocation2 + $0x48] sm:$0xff] %vm288, %v281
    %299 = vst.msk [vmem:[#allocation2 + $0x50] sm:$0xff] %vm288, %v282
    %300 = vst.msk [vmem:[#allocation2 + $0x58] sm:$0xff] %vm288, %v283
    %301 = vst.msk [vmem:[#allocation2 + $0x60] sm:$0xff] %vm288, %v284
    %302 = vst.msk [vmem:[#allocation2 + $0x68] sm:$0xff] %vm288, %v285
    %303 = vst.msk [vmem:[#allocation2 + $0x70] sm:$0xff] %vm288, %v286
    %304 = vst.msk [vmem:[#allocation2 + $0x78] sm:$0xff] %vm288, %v287
    // Predicated region
    $region18: #{bottleneck_forward.7} parent=1 // pred_check
      _
    $region19: #{bottleneck_forward.7} parent=1 // pred_check_branch
      %306 = sbr.rel (0) target = $region21
    $region20: #{bottleneck_forward.7} parent=1 // pred_region
      %s308 = ssub.s32 2048, 2048
      %309 = vsyncadd [#allocation3], %s308
      %s310 = sshll.u32 [#allocation2], 4
      %s311 = int_to_ptr.vmem [resolvable:$true] %s310
      %316 = dma.vmem_to_hbm [thread:$0]  %s311, 2048, %s4, [#allocation3], 128, 128, 8
    $region21: #{bottleneck_forward.7} parent=1 // pred_fallthru
      _
    // Predicated region
    $region22: #{bottleneck_forward.7} parent=1 // pred_check
      _
    $region23: #{bottleneck_forward.7} parent=1 // pred_check_branch
      %318 = sbr.rel (0) target = $region25
    $region24: #{bottleneck_forward.7} parent=1 // pred_region
      %319 = dma.done [#allocation3], 2048
    $region25: #{bottleneck_forward.7} parent=1 // pred_fallthru
      _
    %320 = vsyncpa [#allocation3], 1

// kernel: bottleneck_forward.5
$region0: #{bottleneck_forward.5}
  #allocation0 [shape = 'u32[]', space=smem, size = 0x4, offset = 0x4, fixed_abs, tag = 'smem constant byte address 0x4 - core index']
  #allocation1 [shape = 'u32[144,128]{1,0:T(1,128)}', space=vmem, size = 0x12000, scoped, tag = 'internal scratch']
  %s0 = inlined_call_operand.vmem [shape: f32[2,9,2,9,8], index: 0, kind: input, shape index: {}]
  %s1 = inlined_call_operand.vmem [shape: f32[9,4,4], index: 1, kind: input, shape index: {}]
  %s2 = inlined_call_operand.vmem [shape: f32[1,4], index: 2, kind: input, shape index: {}]
  %s3 = inlined_call_operand.vmem [shape: f32[2,64,4], index: 3, kind: output, shape index: {}]
  %s4 = sld [smem:[#allocation0]]
  $region45: #{bottleneck_forward.5} parent=0
    _
  %s6 = ssub.s32 1, %s4
  %s7 = scalar_select 0, %s6, %s4
  loop: start=0, step=1, limit=4
  $region2: #{bottleneck_forward.5} parent=0 // loop_pre_header
    _
  $region3: #{bottleneck_forward.5} parent=0 // loop_header
    %s9 = sphi 0, %s13
    %p10 = scmp.ge.s32.totalorder %s9, 4
    %s16 = sphi 0, %s28
    %s17 = sphi 0, %s24
    %s18 = sphi 0, %s16
    %s19 = sphi 0, %s17
    %s20 = sphi 0, %s18
    %s21 = sphi 0, %s19
    %s31 = sphi 0, %s33
    %s34 = sphi 0, %s31
    %s35 = sphi 0, %s34
    %s51 = sphi 0, %s35
    %s57 = sphi 0, %s59
    %s60 = sphi 0, %s57
    %s61 = sphi 0, %s60
    %s77 = sphi 0, %s61
    %s83 = sphi 0, %s85
    %s86 = sphi 0, %s83
    %s87 = sphi 0, %s86
    %s103 = sphi 0, %s87
    %s111 = sphi 0, %s113
    %s114 = sphi 0, %s111
    %s115 = sphi 0, %s114
    %s131 = sphi 0, %s115
  $region4: #{bottleneck_forward.5} parent=0 // loop_header_branch
    %12 = sbr.rel (%p10) target = $region8
  $region5: #{bottleneck_forward.5} parent=0 // loop_body
    %s14 = ssub.s32 %s9, 1
    %s15 = ssub.s32 %s9, 2
    %s22 = sadd.s32 1, %s17
    %p23 = scmp.ge.s32.totalorder %s22, 1
    %s24 = scalar_select %p23, 0, %s22
    %s25 = sadd.s32 1, %s16
    %s26 = scalar_select %p23, %s25, %s16
    %p27 = scmp.ge.s32.totalorder %s26, 2
    %s28 = scalar_select %p27, 0, %s26
    %s29 = ssub.s32 %s16, %s28
    %p30 = scmp.eq.s32.totalorder %s29, 0
    %s32 = sadd.s32 %s31, 1
    %s33 = scalar_select %p30, %s31, %s32
    %p36 = pneg %p30
    %p37 = scmp.eq.s32.totalorder %s9, 1
    %p38 = por %p36, %p37
    %p39 = scmp.ne.s32.totalorder %s31, %s34
    %p40 = scmp.eq.s32.totalorder %s9, 0
    %p41 = por %p39, %p40
    %p42 = scmp.ne.s32.totalorder %s31, %s34
    %p43 = scmp.eq.s32.totalorder %s14, 1
    %p44 = por %p42, %p43
    %p45 = scmp.ne.s32.totalorder %s34, %s35
    %p46 = scmp.eq.s32.totalorder %s14, 0
    %p47 = por %p45, %p46
    %p48 = scmp.ne.s32.totalorder %s34, %s35
    %p49 = scmp.eq.s32.totalorder %s15, 1
    %p50 = por %p48, %p49
    %p52 = scmp.ne.s32.totalorder %s35, %s51
    %p53 = scmp.eq.s32.totalorder %s15, 0
    %p54 = por %p52, %p53
    %s55 = ssub.s32 %s17, %s24
    %p56 = scmp.eq.s32.totalorder %s55, 0
    %s58 = sadd.s32 %s57, 1
    %s59 = scalar_select %p56, %s57, %s58
    %p62 = pneg %p56
    %p63 = scmp.eq.s32.totalorder %s9, 1
    %p64 = por %p62, %p63
    %p65 = scmp.ne.s32.totalorder %s57, %s60
    %p66 = scmp.eq.s32.totalorder %s9, 0
    %p67 = por %p65, %p66
    %p68 = scmp.ne.s32.totalorder %s57, %s60
    %p69 = scmp.eq.s32.totalorder %s14, 1
    %p70 = por %p68, %p69
    %p71 = scmp.ne.s32.totalorder %s60, %s61
    %p72 = scmp.eq.s32.totalorder %s14, 0
    %p73 = por %p71, %p72
    %p74 = scmp.ne.s32.totalorder %s60, %s61
    %p75 = scmp.eq.s32.totalorder %s15, 1
    %p76 = por %p74, %p75
    %p78 = scmp.ne.s32.totalorder %s61, %s77
    %p79 = scmp.eq.s32.totalorder %s15, 0
    %p80 = por %p78, %p79
    %s81 = ssub.s32 %s17, %s24
    %p82 = scmp.eq.s32.totalorder %s81, 0
    %s84 = sadd.s32 %s83, 1
    %s85 = scalar_select %p82, %s83, %s84
    %p88 = pneg %p82
    %p89 = scmp.eq.s32.totalorder %s9, 1
    %p90 = por %p88, %p89
    %p91 = scmp.ne.s32.totalorder %s83, %s86
    %p92 = scmp.eq.s32.totalorder %s9, 0
    %p93 = por %p91, %p92
    %p94 = scmp.ne.s32.totalorder %s83, %s86
    %p95 = scmp.eq.s32.totalorder %s14, 1
    %p96 = por %p94, %p95
    %p97 = scmp.ne.s32.totalorder %s86, %s87
    %p98 = scmp.eq.s32.totalorder %s14, 0
    %p99 = por %p97, %p98
    %p100 = scmp.ne.s32.totalorder %s86, %s87
    %p101 = scmp.eq.s32.totalorder %s15, 1
    %p102 = por %p100, %p101
    %p104 = scmp.ne.s32.totalorder %s87, %s103
    %p105 = scmp.eq.s32.totalorder %s15, 0
    %p106 = por %p104, %p105
    %s107 = ssub.s32 %s16, %s28
    %s108 = ssub.s32 %s17, %s24
    %s109 = sor.u32 %s107, %s108
    %p110 = scmp.eq.s32.totalorder %s109, 0
    %s112 = sadd.s32 %s111, 1
    %s113 = scalar_select %p110, %s111, %s112
    %p116 = pneg %p110
    %p117 = scmp.eq.s32.totalorder %s9, 1
    %p118 = por %p116, %p117
    %p119 = scmp.ne.s32.totalorder %s111, %s114
    %p120 = scmp.eq.s32.totalorder %s9, 0
    %p121 = por %p119, %p120
    %p122 = scmp.ne.s32.totalorder %s111, %s114
    %p123 = scmp.eq.s32.totalorder %s14, 1
    %p124 = por %p122, %p123
    %p125 = scmp.ne.s32.totalorder %s114, %s115
    %p126 = scmp.eq.s32.totalorder %s14, 0
    %p127 = por %p125, %p126
    %p128 = scmp.ne.s32.totalorder %s114, %s115
    %p129 = scmp.eq.s32.totalorder %s15, 1
    %p130 = por %p128, %p129
    %p132 = scmp.ne.s32.totalorder %s115, %s131
    %p133 = scmp.eq.s32.totalorder %s15, 0
    %p134 = por %p132, %p133
    %p135 = scmp.le.s32.totalorder 1, %s9
    %p136 = scmp.lt.s32.totalorder %s9, 3
    %p137 = pnand %p135, %p136
    %p138 = pneg %p137
    // Predicated region
    $region9: #{bottleneck_forward.5} parent=5 // pred_check
      _
    $region10: #{bottleneck_forward.5} parent=5 // pred_check_branch
      %140 = sbr.rel (%p137) target = $region12
    $region11: #{bottleneck_forward.5} parent=5 // pred_region
      %s141 = ssub.s32 %s9, 1
      // Predicated region
      $region13: #{bottleneck_forward.5} parent=11 // pred_check
        %p142 = pneg %p73
      $region14: #{bottleneck_forward.5} parent=11 // pred_check_branch
        %144 = sbr.rel (%p142) target = $region16
      $region15: #{bottleneck_forward.5} parent=11 // pred_region
        %p145 = scmp.lt.s32.totalorder %s19, 0
        %s146 = scalar_select %p145, %s19, 0
        %s147 = smul.addr %s146, 4
        %s148 = scalar_lea.vmem %s1, %s147
      $region16: #{bottleneck_forward.5} parent=11 // pred_fallthru
        _
      // Predicated region
      $region17: #{bottleneck_forward.5} parent=11 // pred_check
        %p149 = pneg %p99
      $region18: #{bottleneck_forward.5} parent=11 // pred_check_branch
        %151 = sbr.rel (%p149) target = $region20
      $region19: #{bottleneck_forward.5} parent=11 // pred_region
        %p152 = scmp.lt.s32.totalorder %s19, 0
        %s153 = scalar_select %p152, %s19, 0
        %s154 = scalar_lea.vmem %s2, %s153
      $region20: #{bottleneck_forward.5} parent=11 // pred_fallthru
        _
    $region12: #{bottleneck_forward.5} parent=5 // pred_fallthru
      _
    %p155 = scmp.lt.s32.totalorder %s9, 2
    // Predicated region
    $region21: #{bottleneck_forward.5} parent=5 // pred_check
      %p156 = pneg %p155
    $region22: #{bottleneck_forward.5} parent=5 // pred_check_branch
      %158 = sbr.rel (%p156) target = $region24
    $region23: #{bottleneck_forward.5} parent=5 // pred_region
      // Predicated region
      $region25: #{bottleneck_forward.5} parent=23 // pred_check
        %p159 = pneg %p41
      $region26: #{bottleneck_forward.5} parent=23 // pred_check_branch
        %161 = sbr.rel (%p159) target = $region28
      $region27: #{bottleneck_forward.5} parent=23 // pred_region
        %p162 = scmp.lt.s32.totalorder %s16, 1
        %s163 = scalar_select %p162, %s16, 1
        %s164 = smul.addr %s163, 36
        %s165 = smul.addr %s164, 8
        %s166 = scalar_lea.vmem %s0, %s165
      $region28: #{bottleneck_forward.5} parent=23 // pred_fallthru
        _
    $region24: #{bottleneck_forward.5} parent=5 // pred_fallthru
      _
    %p167 = scmp.le.s32.totalorder 1, %s9
    %p168 = scmp.lt.s32.totalorder %s9, 3
    %p169 = pnand %p167, %p168
    %p170 = pneg %p169
    // Predicated region
    $region29: #{bottleneck_forward.5} parent=5 // pred_check
      _
    $region30: #{bottleneck_forward.5} parent=5 // pred_check_branch
      %172 = sbr.rel (%p169) target = $region32
    $region31: #{bottleneck_forward.5} parent=5 // pred_region
      %s173 = ssub.s32 %s9, 1
      %p174 = scmp.lt.s32.totalorder %s18, 1
      %s175 = scalar_select %p174, %s18, 1
      %s176 = smul.addr %s175, 36
      %s177 = smul.addr %s176, 8
      %s178 = scalar_lea.vmem %s0, %s177
      %p179 = pneg %p47
      %p180 = pneg %p44
      %p181 = scmp.lt.s32.totalorder %s19, 0
      %s182 = scalar_select %p181, %s19, 0
      %s183 = smul.addr %s182, 4
      %s184 = scalar_lea.vmem %s1, %s183
      %p185 = pneg %p73
      %p186 = pneg %p70
      %p187 = scmp.lt.s32.totalorder %s19, 0
      %s188 = scalar_select %p187, %s19, 0
      %s189 = scalar_lea.vmem %s2, %s188
      %p190 = pneg %p99
      %p191 = pneg %p96
      %p192 = pneg %p127
      %p193 = pneg %p124
      %p194 = scmp.lt.s32.totalorder %s18, 1
      %s195 = scalar_select %p194, %s18, 1
      %p196 = scmp.lt.s32.totalorder %s19, 0
      %s197 = scalar_select %p196, %s19, 0
      %s198 = smul.addr %s195, 8
      %s199 = sadd.s32 %s197, %s198
      %s200 = smul.addr %s199, 8
      %s201 = scalar_lea.vmem %s3, %s200
      %p202 = scmp.lt.s32.totalorder %s18, 1
      %s203 = scalar_select %p202, %s18, 1
      %s204 = smul.addr %s203, 36
      %s205 = smul.addr %s204, 8
      %s206 = scalar_lea.vmem %s0, %s205
      %p207 = scmp.lt.s32.totalorder %s19, 0
      %s208 = scalar_select %p207, %s19, 0
      %s209 = smul.addr %s208, 4
      %s210 = scalar_lea.vmem %s1, %s209
      %p211 = scmp.lt.s32.totalorder %s19, 0
      %s212 = scalar_select %p211, %s19, 0
      %s213 = scalar_lea.vmem %s2, %s212
      %p214 = scmp.lt.s32.totalorder %s18, 1
      %s215 = scalar_select %p214, %s18, 1
      %p216 = scmp.lt.s32.totalorder %s19, 0
      %s217 = scalar_select %p216, %s19, 0
      %s218 = smul.addr %s215, 8
      %s219 = sadd.s32 %s217, %s218
      %s220 = smul.addr %s219, 8
      %s221 = scalar_lea.vmem %s3, %s220
      %v222 = vld [vmem:[%s206] sm:$0xff]
      %v223 = vld [vmem:[%s206 + $0x20] sm:$0xff]
      %v224 = vld [vmem:[%s206 + $0x40] sm:$0xff]
      %v225 = vld [vmem:[%s206 + $0x60] sm:$0xff]
      %v226 = vld [vmem:[%s206 + $0x80] sm:$0xff]
      %v227 = vld [vmem:[%s206 + $0xa0] sm:$0xff]
      %v228 = vld [vmem:[%s206 + $0xc0] sm:$0xff]
      %v229 = vld [vmem:[%s206 + $0xe0] sm:$0xff]
      %v230 = vld [vmem:[%s210] sm:$0xf]
      %s231 = scalar_lea.vmem %s210, 4
      %v232 = vld [vmem:[%s231] sm:$0xf]
      %241 = vrot.lane.b32.xlu0 %v222, 124
      %v242 = vpop.permute.xlu0 %241
      %243 = vrot.lane.b32.xlu0 %v223, 124
      %v244 = vpop.permute.xlu0 %243
      %245 = vrot.lane.b32.xlu0 %v224, 124
      %v246 = vpop.permute.xlu0 %245
      %247 = vrot.lane.b32.xlu0 %v225, 124
      %v248 = vpop.permute.xlu0 %247
      %249 = vrot.lane.b32.xlu0 %v226, 124
      %v250 = vpop.permute.xlu0 %249
      %251 = vrot.lane.b32.xlu0 %v227, 124
      %v252 = vpop.permute.xlu0 %251
      %253 = vrot.lane.b32.xlu0 %v228, 124
      %v254 = vpop.permute.xlu0 %253
      %255 = vrot.lane.b32.xlu0 %v229, 124
      %v256 = vpop.permute.xlu0 %255
      %vm257 = vcmask 31744
      %v258 = vsel %vm257, %v242, 0
      %v260 = vsel %vm257, %v244, 0
      %v262 = vsel %vm257, %v246, 0
      %v264 = vsel %vm257, %v248, 0
      %v266 = vsel %vm257, %v250, 0
      %v268 = vsel %vm257, %v252, 0
      %v270 = vsel %vm257, %v254, 0
      %v272 = vsel %vm257, %v256, 0
      %vm274 = vcmask 1043456
      %v276 = vsel %vm274, %v232, 0
      %278 = vmatprep.subr.mxu0 0.0
      %279 = vmatpush1.msra.mxu0 %v276
      %280 = vmatprep.subr.mxu0 0.0
      %281 = vmatpush1.msra.mxu0 0.0
      %282 = vmatprep.subr.mxu0 0.0
      %283 = vmatpush1.msra.mxu0 0.0
      %284 = vmatprep.subr.mxu0 0.0
      %285 = vmatpush1.msra.mxu0 0.0
      %286 = vmatprep.subr.mxu0 0.0
      %287 = vmatpush1.msra.mxu0 0.0
      %288 = vmatprep.subr.mxu0 0.0
      %289 = vmatpush1.msra.mxu0 0.0
      %290 = vmatprep.subr.mxu0 0.0
      %291 = vmatpush1.msra.mxu0 0.0
      %292 = vmatprep.subr.mxu0 0.0
      %293 = vmatpush1.msra.mxu0 0.0
      %294 = vmatprep.subr.mxu0 0.0
      %295 = vmatpush1.msra.mxu0 0.0
      %296 = vmatprep.subr.mxu0 0.0
      %297 = vmatpush1.msra.mxu0 0.0
      %298 = vmatprep.subr.mxu0 0.0
      %299 = vmatpush1.msra.mxu0 0.0
      %300 = vmatprep.subr.mxu0 0.0
      %301 = vmatpush1.msra.mxu0 0.0
      %302 = vmatprep.subr.mxu0 0.0
      %303 = vmatpush1.msra.mxu0 0.0
      %304 = vmatprep.subr.mxu0 0.0
      %305 = vmatpush1.msra.mxu0 0.0
      %306 = vmatprep.subr.mxu0 0.0
      %307 = vmatpush1.msra.mxu0 0.0
      %308 = vmatprep.subr.mxu0 0.0
      %309 = vmatpush1.msra.mxu0 0.0
      %310 = vmatprep.subr.mxu0 0.0
      %311 = vmatpush1.msra.mxu0 0.0
      %312 = vmatprep.subr.mxu0 0.0
      %313 = vmatpush1.msra.mxu0 0.0
      %314 = vmatprep.subr.mxu0 0.0
      %315 = vmatpush1.msra.mxu0 0.0
      %316 = vmatprep.subr.mxu0 0.0
      %317 = vmatpush1.msra.mxu0 0.0
      %318 = vmatprep.subr.mxu0 0.0
      %319 = vmatpush1.msra.mxu0 0.0
      %320 = vmatprep.subr.mxu0 0.0
      %321 = vmatpush1.msra.mxu0 0.0
      %322 = vmatprep.subr.mxu0 0.0
      %323 = vmatpush1.msra.mxu0 0.0
      %324 = vmatprep.subr.mxu0 0.0
      %325 = vmatpush1.msra.mxu0 0.0
      %326 = vmatprep.subr.mxu0 0.0
      %327 = vmatpush1.msra.mxu0 0.0
      %328 = vmatprep.subr.mxu0 0.0
      %329 = vmatpush1.msra.mxu0 0.0
      %330 = vmatprep.subr.mxu0 0.0
      %331 = vmatpush1.msra.mxu0 0.0
      %332 = vmatprep.subr.mxu0 0.0
      %333 = vmatpush1.msra.mxu0 0.0
      %334 = vmatprep.subr.mxu0 0.0
      %335 = vmatpush1.msra.mxu0 0.0
      %336 = vmatprep.subr.mxu0 0.0
      %337 = vmatpush1.msra.mxu0 0.0
      %338 = vmatprep.subr.mxu0 0.0
      %339 = vmatpush1.msra.mxu0 0.0
      %340 = vmatprep.subr.mxu0 0.0
      %341 = vmatpush1.msra.mxu0 0.0
      %342 = vmatprep.mubr.f32.mxu0 0.0
      %343 = vmatmul.mubr.f32.gmra.mrb[0].mxu0 %v258
      %v344 = vpop.f32.mrb[0].mxu0
      %v345 = vadd.f32 0.0, %v344
      %v346 = vpop.f32.mrb[0].mxu0
      %347 = vmatprep.mubr.f32.mxu0 0.0
      %348 = vmatmul.mubr.f32.gmra.mrb[0].mxu0 %v260
      %v349 = vpop.f32.mrb[0].mxu0
      %v350 = vadd.f32 0.0, %v349
      %v351 = vpop.f32.mrb[0].mxu0
      %352 = vmatprep.mubr.f32.mxu0 0.0
      %353 = vmatmul.mubr.f32.gmra.mrb[0].mxu0 %v262
      %v354 = vpop.f32.mrb[0].mxu0
      %v355 = vadd.f32 0.0, %v354
      %v356 = vpop.f32.mrb[0].mxu0
      %357 = vmatprep.mubr.f32.mxu0 0.0
      %358 = vmatmul.mubr.f32.gmra.mrb[0].mxu0 %v264
      %v359 = vpop.f32.mrb[0].mxu0
      %v360 = vadd.f32 0.0, %v359
      %v361 = vpop.f32.mrb[0].mxu0
      %362 = vmatprep.mubr.f32.mxu0 0.0
      %363 = vmatmul.mubr.f32.gmra.mrb[0].mxu0 %v266
      %v364 = vpop.f32.mrb[0].mxu0
      %v365 = vadd.f32 0.0, %v364
      %v366 = vpop.f32.mrb[0].mxu0
      %367 = vmatprep.mubr.f32.mxu0 0.0
      %368 = vmatmul.mubr.f32.gmra.mrb[0].mxu0 %v268
      %v369 = vpop.f32.mrb[0].mxu0
      %v370 = vadd.f32 0.0, %v369
      %v371 = vpop.f32.mrb[0].mxu0
      %372 = vmatprep.mubr.f32.mxu0 0.0
      %373 = vmatmul.mubr.f32.gmra.mrb[0].mxu0 %v270
      %v374 = vpop.f32.mrb[0].mxu0
      %v375 = vadd.f32 0.0, %v374
      %v376 = vpop.f32.mrb[0].mxu0
      %377 = vmatprep.mubr.f32.mxu0 0.0
      %378 = vmatmul.mubr.f32.gmra.mrb[0].mxu0 %v272
      %v379 = vpop.f32.mrb[0].mxu0
      %v380 = vadd.f32 0.0, %v379
      %v381 = vpop.f32.mrb[0].mxu0
      %382 = vdwg.mxu0
      %v383 = vsel %vm257, %v222, 0
      %v385 = vsel %vm257, %v223, 0
      %v387 = vsel %vm257, %v224, 0
      %v389 = vsel %vm257, %v225, 0
      %v391 = vsel %vm257, %v226, 0
      %v393 = vsel %vm257, %v227, 0
      %v395 = vsel %vm257, %v228, 0
      %v397 = vsel %vm257, %v229, 0
      %v400 = vsel %vm274, %v230, 0
      %402 = vmatprep.subr.mxu0 0.0
      %403 = vmatpush1.msra.mxu0 %v400
      %404 = vmatprep.subr.mxu0 0.0
      %405 = vmatpush1.msra.mxu0 0.0
      %406 = vmatprep.subr.mxu0 0.0
      %407 = vmatpush1.msra.mxu0 0.0
      %408 = vmatprep.subr.mxu0 0.0
      %409 = vmatpush1.msra.mxu0 0.0
      %410 = vmatprep.subr.mxu0 0.0
      %411 = vmatpush1.msra.mxu0 0.0
      %412 = vmatprep.subr.mxu0 0.0
      %413 = vmatpush1.msra.mxu0 0.0
      %414 = vmatprep.subr.mxu0 0.0
      %415 = vmatpush1.msra.mxu0 0.0
      %416 = vmatprep.subr.mxu0 0.0
      %417 = vmatpush1.msra.mxu0 0.0
      %418 = vmatprep.subr.mxu0 0.0
      %419 = vmatpush1.msra.mxu0 0.0
      %420 = vmatprep.subr.mxu0 0.0
      %421 = vmatpush1.msra.mxu0 0.0
      %422 = vmatprep.subr.mxu0 0.0
      %423 = vmatpush1.msra.mxu0 0.0
      %424 = vmatprep.subr.mxu0 0.0
      %425 = vmatpush1.msra.mxu0 0.0
      %426 = vmatprep.subr.mxu0 0.0
      %427 = vmatpush1.msra.mxu0 0.0
      %428 = vmatprep.subr.mxu0 0.0
      %429 = vmatpush1.msra.mxu0 0.0
      %430 = vmatprep.subr.mxu0 0.0
      %431 = vmatpush1.msra.mxu0 0.0
      %432 = vmatprep.subr.mxu0 0.0
      %433 = vmatpush1.msra.mxu0 0.0
      %434 = vmatprep.subr.mxu0 0.0
      %435 = vmatpush1.msra.mxu0 0.0
      %436 = vmatprep.subr.mxu0 0.0
      %437 = vmatpush1.msra.mxu0 0.0
      %438 = vmatprep.subr.mxu0 0.0
      %439 = vmatpush1.msra.mxu0 0.0
      %440 = vmatprep.subr.mxu0 0.0
      %441 = vmatpush1.msra.mxu0 0.0
      %442 = vmatprep.subr.mxu0 0.0
      %443 = vmatpush1.msra.mxu0 0.0
      %444 = vmatprep.subr.mxu0 0.0
      %445 = vmatpush1.msra.mxu0 0.0
      %446 = vmatprep.subr.mxu0 0.0
      %447 = vmatpush1.msra.mxu0 0.0
      %448 = vmatprep.subr.mxu0 0.0
      %449 = vmatpush1.msra.mxu0 0.0
      %450 = vmatprep.subr.mxu0 0.0
      %451 = vmatpush1.msra.mxu0 0.0
      %452 = vmatprep.subr.mxu0 0.0
      %453 = vmatpush1.msra.mxu0 0.0
      %454 = vmatprep.subr.mxu0 0.0
      %455 = vmatpush1.msra.mxu0 0.0
      %456 = vmatprep.subr.mxu0 0.0
      %457 = vmatpush1.msra.mxu0 0.0
      %458 = vmatprep.subr.mxu0 0.0
      %459 = vmatpush1.msra.mxu0 0.0
      %460 = vmatprep.subr.mxu0 0.0
      %461 = vmatpush1.msra.mxu0 0.0
      %462 = vmatprep.subr.mxu0 0.0
      %463 = vmatpush1.msra.mxu0 0.0
      %464 = vmatprep.subr.mxu0 0.0
      %465 = vmatpush1.msra.mxu0 0.0
      %466 = vmatprep.mubr.f32.mxu0 0.0
      %467 = vmatmul.mubr.f32.gmra.mrb[0].mxu0 %v383
      %v468 = vpop.f32.mrb[0].mxu0
      %v469 = vadd.f32 %v345, %v468
      %v470 = vpop.f32.mrb[0].mxu0
      %471 = vmatprep.mubr.f32.mxu0 0.0
      %472 = vmatmul.mubr.f32.gmra.mrb[0].mxu0 %v385
      %v473 = vpop.f32.mrb[0].mxu0
      %v474 = vadd.f32 %v350, %v473
      %v475 = vpop.f32.mrb[0].mxu0
      %476 = vmatprep.mubr.f32.mxu0 0.0
      %477 = vmatmul.mubr.f32.gmra.mrb[0].mxu0 %v387
      %v478 = vpop.f32.mrb[0].mxu0
      %v479 = vadd.f32 %v355, %v478
      %v480 = vpop.f32.mrb[0].mxu0
      %481 = vmatprep.mubr.f32.mxu0 0.0
      %482 = vmatmul.mubr.f32.gmra.mrb[0].mxu0 %v389
      %v483 = vpop.f32.mrb[0].mxu0
      %v484 = vadd.f32 %v360, %v483
      %v485 = vpop.f32.mrb[0].mxu0
      %486 = vmatprep.mubr.f32.mxu0 0.0
      %487 = vmatmul.mubr.f32.gmra.mrb[0].mxu0 %v391
      %v488 = vpop.f32.mrb[0].mxu0
      %v489 = vadd.f32 %v365, %v488
      %v490 = vpop.f32.mrb[0].mxu0
      %491 = vmatprep.mubr.f32.mxu0 0.0
      %492 = vmatmul.mubr.f32.gmra.mrb[0].mxu0 %v393
      %v493 = vpop.f32.mrb[0].mxu0
      %v494 = vadd.f32 %v370, %v493
      %v495 = vpop.f32.mrb[0].mxu0
      %496 = vmatprep.mubr.f32.mxu0 0.0
      %497 = vmatmul.mubr.f32.gmra.mrb[0].mxu0 %v395
      %v498 = vpop.f32.mrb[0].mxu0
      %v499 = vadd.f32 %v375, %v498
      %v500 = vpop.f32.mrb[0].mxu0
      %501 = vmatprep.mubr.f32.mxu0 0.0
      %502 = vmatmul.mubr.f32.gmra.mrb[0].mxu0 %v397
      %v503 = vpop.f32.mrb[0].mxu0
      %v504 = vadd.f32 %v380, %v503
      %v505 = vpop.f32.mrb[0].mxu0
      %506 = vdwg.mxu0
      %v507 = vld [vmem:[%s206 + $0x1] sm:$0xff]
      %v508 = vld [vmem:[%s206 + $0x21] sm:$0xff]
      %v509 = vld [vmem:[%s206 + $0x41] sm:$0xff]
      %v510 = vld [vmem:[%s206 + $0x61] sm:$0xff]
      %v511 = vld [vmem:[%s206 + $0x81] sm:$0xff]
      %v512 = vld [vmem:[%s206 + $0xa1] sm:$0xff]
      %v513 = vld [vmem:[%s206 + $0xc1] sm:$0xff]
      %v514 = vld [vmem:[%s206 + $0xe1] sm:$0xff]
      %s515 = scalar_lea.vmem %s210, 8
      %v516 = vld [vmem:[%s515] sm:$0xf]
      %v518 = vsel %vm257, %v507, 0
      %v521 = vsel %vm257, %v508, 0
      %v524 = vsel %vm257, %v509, 0
      %v527 = vsel %vm257, %v510, 0
      %v530 = vsel %vm257, %v511, 0
      %v533 = vsel %vm257, %v512, 0
      %v536 = vsel %vm257, %v513, 0
      %v539 = vsel %vm257, %v514, 0
      %v542 = vsel %vm274, %v516, 0
      %544 = vmatprep.subr.mxu0 0.0
      %545 = vmatpush1.msra.mxu0 %v542
      %546 = vmatprep.subr.mxu0 0.0
      %547 = vmatpush1.msra.mxu0 0.0
      %548 = vmatprep.subr.mxu0 0.0
      %549 = vmatpush1.msra.mxu0 0.0
      %550 = vmatprep.subr.mxu0 0.0
      %551 = vmatpush1.msra.mxu0 0.0
      %552 = vmatprep.subr.mxu0 0.0
      %553 = vmatpush1.msra.mxu0 0.0
      %554 = vmatprep.subr.mxu0 0.0
      %555 = vmatpush1.msra.mxu0 0.0
      %556 = vmatprep.subr.mxu0 0.0
      %557 = vmatpush1.msra.mxu0 0.0
      %558 = vmatprep.subr.mxu0 0.0
      %559 = vmatpush1.msra.mxu0 0.0
      %560 = vmatprep.subr.mxu0 0.0
      %561 = vmatpush1.msra.mxu0 0.0
      %562 = vmatprep.subr.mxu0 0.0
      %563 = vmatpush1.msra.mxu0 0.0
      %564 = vmatprep.subr.mxu0 0.0
      %565 = vmatpush1.msra.mxu0 0.0
      %566 = vmatprep.subr.mxu0 0.0
      %567 = vmatpush1.msra.mxu0 0.0
      %568 = vmatprep.subr.mxu0 0.0
      %569 = vmatpush1.msra.mxu0 0.0
      %570 = vmatprep.subr.mxu0 0.0
      %571 = vmatpush1.msra.mxu0 0.0
      %572 = vmatprep.subr.mxu0 0.0
      %573 = vmatpush1.msra.mxu0 0.0
      %574 = vmatprep.subr.mxu0 0.0
      %575 = vmatpush1.msra.mxu0 0.0
      %576 = vmatprep.subr.mxu0 0.0
      %577 = vmatpush1.msra.mxu0 0.0
      %578 = vmatprep.subr.mxu0 0.0
      %579 = vmatpush1.msra.mxu0 0.0
      %580 = vmatprep.subr.mxu0 0.0
      %581 = vmatpush1.msra.mxu0 0.0
      %582 = vmatprep.subr.mxu0 0.0
      %583 = vmatpush1.msra.mxu0 0.0
      %584 = vmatprep.subr.mxu0 0.0
      %585 = vmatpush1.msra.mxu0 0.0
      %586 = vmatprep.subr.mxu0 0.0
      %587 = vmatpush1.msra.mxu0 0.0
      %588 = vmatprep.subr.mxu0 0.0
      %589 = vmatpush1.msra.mxu0 0.0
      %590 = vmatprep.subr.mxu0 0.0
      %591 = vmatpush1.msra.mxu0 0.0
      %592 = vmatprep.subr.mxu0 0.0
      %593 = vmatpush1.msra.mxu0 0.0
      %594 = vmatprep.subr.mxu0 0.0
      %595 = vmatpush1.msra.mxu0 0.0
      %596 = vmatprep.subr.mxu0 0.0
      %597 = vmatpush1.msra.mxu0 0.0
      %598 = vmatprep.subr.mxu0 0.0
      %599 = vmatpush1.msra.mxu0 0.0
      %600 = vmatprep.subr.mxu0 0.0
      %601 = vmatpush1.msra.mxu0 0.0
      %602 = vmatprep.subr.mxu0 0.0
      %603 = vmatpush1.msra.mxu0 0.0
      %604 = vmatprep.subr.mxu0 0.0
      %605 = vmatpush1.msra.mxu0 0.0
      %606 = vmatprep.subr.mxu0 0.0
      %607 = vmatpush1.msra.mxu0 0.0
      %608 = vmatprep.mubr.f32.mxu0 0.0
      %609 = vmatmul.mubr.f32.gmra.mrb[0].mxu0 %v518
      %v610 = vpop.f32.mrb[0].mxu0
      %v611 = vadd.f32 0.0, %v610
      %v612 = vpop.f32.mrb[0].mxu0
      %613 = vmatprep.mubr.f32.mxu0 0.0
      %614 = vmatmul.mubr.f32.gmra.mrb[0].mxu0 %v521
      %v615 = vpop.f32.mrb[0].mxu0
      %v616 = vadd.f32 0.0, %v615
      %v617 = vpop.f32.mrb[0].mxu0
      %618 = vmatprep.mubr.f32.mxu0 0.0
      %619 = vmatmul.mubr.f32.gmra.mrb[0].mxu0 %v524
      %v620 = vpop.f32.mrb[0].mxu0
      %v621 = vadd.f32 0.0, %v620
      %v622 = vpop.f32.mrb[0].mxu0
      %623 = vmatprep.mubr.f32.mxu0 0.0
      %624 = vmatmul.mubr.f32.gmra.mrb[0].mxu0 %v527
      %v625 = vpop.f32.mrb[0].mxu0
      %v626 = vadd.f32 0.0, %v625
      %v627 = vpop.f32.mrb[0].mxu0
      %628 = vmatprep.mubr.f32.mxu0 0.0
      %629 = vmatmul.mubr.f32.gmra.mrb[0].mxu0 %v530
      %v630 = vpop.f32.mrb[0].mxu0
      %v631 = vadd.f32 0.0, %v630
      %v632 = vpop.f32.mrb[0].mxu0
      %633 = vmatprep.mubr.f32.mxu0 0.0
      %634 = vmatmul.mubr.f32.gmra.mrb[0].mxu0 %v533
      %v635 = vpop.f32.mrb[0].mxu0
      %v636 = vadd.f32 0.0, %v635
      %v637 = vpop.f32.mrb[0].mxu0
      %638 = vmatprep.mubr.f32.mxu0 0.0
      %639 = vmatmul.mubr.f32.gmra.mrb[0].mxu0 %v536
      %v640 = vpop.f32.mrb[0].mxu0
      %v641 = vadd.f32 0.0, %v640
      %v642 = vpop.f32.mrb[0].mxu0
      %643 = vmatprep.mubr.f32.mxu0 0.0
      %644 = vmatmul.mubr.f32.gmra.mrb[0].mxu0 %v539
      %v645 = vpop.f32.mrb[0].mxu0
      %v646 = vadd.f32 0.0, %v645
      %v647 = vpop.f32.mrb[0].mxu0
      %648 = vdwg.mxu0
      %v649 = vadd.f32 %v469, %v611
      %v650 = vadd.f32 %v474, %v616
      %v651 = vadd.f32 %v479, %v621
      %v652 = vadd.f32 %v484, %v626
      %v653 = vadd.f32 %v489, %v631
      %v654 = vadd.f32 %v494, %v636
      %v655 = vadd.f32 %v499, %v641
      %v656 = vadd.f32 %v504, %v646
      %s657 = scalar_lea.vmem %s206, 16
      %v658 = vld [vmem:[%s657] sm:$0xff]
      %v659 = vld [vmem:[%s657 + $0x20] sm:$0xff]
      %v660 = vld [vmem:[%s657 + $0x40] sm:$0xff]
      %v661 = vld [vmem:[%s657 + $0x60] sm:$0xff]
      %v662 = vld [vmem:[%s657 + $0x80] sm:$0xff]
      %v663 = vld [vmem:[%s657 + $0xa0] sm:$0xff]
      %v664 = vld [vmem:[%s657 + $0xc0] sm:$0xff]
      %v665 = vld [vmem:[%s657 + $0xe0] sm:$0xff]
      %s666 = scalar_lea.vmem %s210, 12
      %v667 = vld [vmem:[%s666] sm:$0xf]
      %v669 = vsel %vm257, %v658, 0
      %v672 = vsel %vm257, %v659, 0
      %v675 = vsel %vm257, %v660, 0
      %v678 = vsel %vm257, %v661, 0
      %v681 = vsel %vm257, %v662, 0
      %v684 = vsel %vm257, %v663, 0
      %v687 = vsel %vm257, %v664, 0
      %v690 = vsel %vm257, %v665, 0
      %v693 = vsel %vm274, %v667, 0
      %695 = vmatprep.subr.mxu0 0.0
      %696 = vmatpush1.msra.mxu0 %v693
      %697 = vmatprep.subr.mxu0 0.0
      %698 = vmatpush1.msra.mxu0 0.0
      %699 = vmatprep.subr.mxu0 0.0
      %700 = vmatpush1.msra.mxu0 0.0
      %701 = vmatprep.subr.mxu0 0.0
      %702 = vmatpush1.msra.mxu0 0.0
      %703 = vmatprep.subr.mxu0 0.0
      %704 = vmatpush1.msra.mxu0 0.0
      %705 = vmatprep.subr.mxu0 0.0
      %706 = vmatpush1.msra.mxu0 0.0
      %707 = vmatprep.subr.mxu0 0.0
      %708 = vmatpush1.msra.mxu0 0.0
      %709 = vmatprep.subr.mxu0 0.0
      %710 = vmatpush1.msra.mxu0 0.0
      %711 = vmatprep.subr.mxu0 0.0
      %712 = vmatpush1.msra.mxu0 0.0
      %713 = vmatprep.subr.mxu0 0.0
      %714 = vmatpush1.msra.mxu0 0.0
      %715 = vmatprep.subr.mxu0 0.0
      %716 = vmatpush1.msra.mxu0 0.0
      %717 = vmatprep.subr.mxu0 0.0
      %718 = vmatpush1.msra.mxu0 0.0
      %719 = vmatprep.subr.mxu0 0.0
      %720 = vmatpush1.msra.mxu0 0.0
      %721 = vmatprep.subr.mxu0 0.0
      %722 = vmatpush1.msra.mxu0 0.0
      %723 = vmatprep.subr.mxu0 0.0
      %724 = vmatpush1.msra.mxu0 0.0
      %725 = vmatprep.subr.mxu0 0.0
      %726 = vmatpush1.msra.mxu0 0.0
      %727 = vmatprep.subr.mxu0 0.0
      %728 = vmatpush1.msra.mxu0 0.0
      %729 = vmatprep.subr.mxu0 0.0
      %730 = vmatpush1.msra.mxu0 0.0
      %731 = vmatprep.subr.mxu0 0.0
      %732 = vmatpush1.msra.mxu0 0.0
      %733 = vmatprep.subr.mxu0 0.0
      %734 = vmatpush1.msra.mxu0 0.0
      %735 = vmatprep.subr.mxu0 0.0
      %736 = vmatpush1.msra.mxu0 0.0
      %737 = vmatprep.subr.mxu0 0.0
      %738 = vmatpush1.msra.mxu0 0.0
      %739 = vmatprep.subr.mxu0 0.0
      %740 = vmatpush1.msra.mxu0 0.0
      %741 = vmatprep.subr.mxu0 0.0
      %742 = vmatpush1.msra.mxu0 0.0
      %743 = vmatprep.subr.mxu0 0.0
      %744 = vmatpush1.msra.mxu0 0.0
      %745 = vmatprep.subr.mxu0 0.0
      %746 = vmatpush1.msra.mxu0 0.0
      %747 = vmatprep.subr.mxu0 0.0
      %748 = vmatpush1.msra.mxu0 0.0
      %749 = vmatprep.subr.mxu0 0.0
      %750 = vmatpush1.msra.mxu0 0.0
      %751 = vmatprep.subr.mxu0 0.0
      %752 = vmatpush1.msra.mxu0 0.0
      %753 = vmatprep.subr.mxu0 0.0
      %754 = vmatpush1.msra.mxu0 0.0
      %755 = vmatprep.subr.mxu0 0.0
      %756 = vmatpush1.msra.mxu0 0.0
      %757 = vmatprep.subr.mxu0 0.0
      %758 = vmatpush1.msra.mxu0 0.0
      %759 = vmatprep.mubr.f32.mxu0 0.0
      %760 = vmatmul.mubr.f32.gmra.mrb[0].mxu0 %v669
      %v761 = vpop.f32.mrb[0].mxu0
      %v762 = vadd.f32 0.0, %v761
      %v763 = vpop.f32.mrb[0].mxu0
      %764 = vmatprep.mubr.f32.mxu0 0.0
      %765 = vmatmul.mubr.f32.gmra.mrb[0].mxu0 %v672
      %v766 = vpop.f32.mrb[0].mxu0
      %v767 = vadd.f32 0.0, %v766
      %v768 = vpop.f32.mrb[0].mxu0
      %769 = vmatprep.mubr.f32.mxu0 0.0
      %770 = vmatmul.mubr.f32.gmra.mrb[0].mxu0 %v675
      %v771 = vpop.f32.mrb[0].mxu0
      %v772 = vadd.f32 0.0, %v771
      %v773 = vpop.f32.mrb[0].mxu0
      %774 = vmatprep.mubr.f32.mxu0 0.0
      %775 = vmatmul.mubr.f32.gmra.mrb[0].mxu0 %v678
      %v776 = vpop.f32.mrb[0].mxu0
      %v777 = vadd.f32 0.0, %v776
      %v778 = vpop.f32.mrb[0].mxu0
      %779 = vmatprep.mubr.f32.mxu0 0.0
      %780 = vmatmul.mubr.f32.gmra.mrb[0].mxu0 %v681
      %v781 = vpop.f32.mrb[0].mxu0
      %v782 = vadd.f32 0.0, %v781
      %v783 = vpop.f32.mrb[0].mxu0
      %784 = vmatprep.mubr.f32.mxu0 0.0
      %785 = vmatmul.mubr.f32.gmra.mrb[0].mxu0 %v684
      %v786 = vpop.f32.mrb[0].mxu0
      %v787 = vadd.f32 0.0, %v786
      %v788 = vpop.f32.mrb[0].mxu0
      %789 = vmatprep.mubr.f32.mxu0 0.0
      %790 = vmatmul.mubr.f32.gmra.mrb[0].mxu0 %v687
      %v791 = vpop.f32.mrb[0].mxu0
      %v792 = vadd.f32 0.0, %v791
      %v793 = vpop.f32.mrb[0].mxu0
      %794 = vmatprep.mubr.f32.mxu0 0.0
      %795 = vmatmul.mubr.f32.gmra.mrb[0].mxu0 %v690
      %v796 = vpop.f32.mrb[0].mxu0
      %v797 = vadd.f32 0.0, %v796
      %v798 = vpop.f32.mrb[0].mxu0
      %799 = vdwg.mxu0
      %v800 = vadd.f32 %v649, %v762
      %v801 = vadd.f32 %v650, %v767
      %v802 = vadd.f32 %v651, %v772
      %v803 = vadd.f32 %v652, %v777
      %v804 = vadd.f32 %v653, %v782
      %v805 = vadd.f32 %v654, %v787
      %v806 = vadd.f32 %v655, %v792
      %v807 = vadd.f32 %v656, %v797
      %s808 = scalar_lea.vmem %s210, 16
      %v809 = vld [vmem:[%s808] sm:$0xf]
      %810 = vrot.lane.b32.xlu0 %v658, 124
      %v811 = vpop.permute.xlu0 %810
      %812 = vrot.lane.b32.xlu0 %v659, 124
      %v813 = vpop.permute.xlu0 %812
      %814 = vrot.lane.b32.xlu0 %v660, 124
      %v815 = vpop.permute.xlu0 %814
      %816 = vrot.lane.b32.xlu0 %v661, 124
      %v817 = vpop.permute.xlu0 %816
      %818 = vrot.lane.b32.xlu0 %v662, 124
      %v819 = vpop.permute.xlu0 %818
      %820 = vrot.lane.b32.xlu0 %v663, 124
      %v821 = vpop.permute.xlu0 %820
      %822 = vrot.lane.b32.xlu0 %v664, 124
      %v823 = vpop.permute.xlu0 %822
      %824 = vrot.lane.b32.xlu0 %v665, 124
      %v825 = vpop.permute.xlu0 %824
      %v826 = vsel %vm257, %v811, 0
      %v828 = vsel %vm257, %v813, 0
      %v830 = vsel %vm257, %v815, 0
      %v832 = vsel %vm257, %v817, 0
      %v834 = vsel %vm257, %v819, 0
      %v836 = vsel %vm257, %v821, 0
      %v838 = vsel %vm257, %v823, 0
      %v840 = vsel %vm257, %v825, 0
      %v843 = vsel %vm274, %v809, 0
      %845 = vmatprep.subr.mxu0 0.0
      %846 = vmatpush1.msra.mxu0 %v843
      %847 = vmatprep.subr.mxu0 0.0
      %848 = vmatpush1.msra.mxu0 0.0
      %849 = vmatprep.subr.mxu0 0.0
      %850 = vmatpush1.msra.mxu0 0.0
      %851 = vmatprep.subr.mxu0 0.0
      %852 = vmatpush1.msra.mxu0 0.0
      %853 = vmatprep.subr.mxu0 0.0
      %854 = vmatpush1.msra.mxu0 0.0
      %855 = vmatprep.subr.mxu0 0.0
      %856 = vmatpush1.msra.mxu0 0.0
      %857 = vmatprep.subr.mxu0 0.0
      %858 = vmatpush1.msra.mxu0 0.0
      %859 = vmatprep.subr.mxu0 0.0
      %860 = vmatpush1.msra.mxu0 0.0
      %861 = vmatprep.subr.mxu0 0.0
      %862 = vmatpush1.msra.mxu0 0.0
      %863 = vmatprep.subr.mxu0 0.0
      %864 = vmatpush1.msra.mxu0 0.0
      %865 = vmatprep.subr.mxu0 0.0
      %866 = vmatpush1.msra.mxu0 0.0
      %867 = vmatprep.subr.mxu0 0.0
      %868 = vmatpush1.msra.mxu0 0.0
      %869 = vmatprep.subr.mxu0 0.0
      %870 = vmatpush1.msra.mxu0 0.0
      %871 = vmatprep.subr.mxu0 0.0
      %872 = vmatpush1.msra.mxu0 0.0
      %873 = vmatprep.subr.mxu0 0.0
      %874 = vmatpush1.msra.mxu0 0.0
      %875 = vmatprep.subr.mxu0 0.0
      %876 = vmatpush1.msra.mxu0 0.0
      %877 = vmatprep.subr.mxu0 0.0
      %878 = vmatpush1.msra.mxu0 0.0
      %879 = vmatprep.subr.mxu0 0.0
      %880 = vmatpush1.msra.mxu0 0.0
      %881 = vmatprep.subr.mxu0 0.0
      %882 = vmatpush1.msra.mxu0 0.0
      %883 = vmatprep.subr.mxu0 0.0
      %884 = vmatpush1.msra.mxu0 0.0
      %885 = vmatprep.subr.mxu0 0.0
      %886 = vmatpush1.msra.mxu0 0.0
      %887 = vmatprep.subr.mxu0 0.0
      %888 = vmatpush1.msra.mxu0 0.0
      %889 = vmatprep.subr.mxu0 0.0
      %890 = vmatpush1.msra.mxu0 0.0
      %891 = vmatprep.subr.mxu0 0.0
      %892 = vmatpush1.msra.mxu0 0.0
      %893 = vmatprep.subr.mxu0 0.0
      %894 = vmatpush1.msra.mxu0 0.0
      %895 = vmatprep.subr.mxu0 0.0
      %896 = vmatpush1.msra.mxu0 0.0
      %897 = vmatprep.subr.mxu0 0.0
      %898 = vmatpush1.msra.mxu0 0.0
      %899 = vmatprep.subr.mxu0 0.0
      %900 = vmatpush1.msra.mxu0 0.0
      %901 = vmatprep.subr.mxu0 0.0
      %902 = vmatpush1.msra.mxu0 0.0
      %903 = vmatprep.subr.mxu0 0.0
      %904 = vmatpush1.msra.mxu0 0.0
      %905 = vmatprep.subr.mxu0 0.0
      %906 = vmatpush1.msra.mxu0 0.0
      %907 = vmatprep.subr.mxu0 0.0
      %908 = vmatpush1.msra.mxu0 0.0
      %909 = vmatprep.mubr.f32.mxu0 0.0
      %910 = vmatmul.mubr.f32.gmra.mrb[0].mxu0 %v826
      %v911 = vpop.f32.mrb[0].mxu0
      %v912 = vadd.f32 0.0, %v911
      %v913 = vpop.f32.mrb[0].mxu0
      %914 = vmatprep.mubr.f32.mxu0 0.0
      %915 = vmatmul.mubr.f32.gmra.mrb[0].mxu0 %v828
      %v916 = vpop.f32.mrb[0].mxu0
      %v917 = vadd.f32 0.0, %v916
      %v918 = vpop.f32.mrb[0].mxu0
      %919 = vmatprep.mubr.f32.mxu0 0.0
      %920 = vmatmul.mubr.f32.gmra.mrb[0].mxu0 %v830
      %v921 = vpop.f32.mrb[0].mxu0
      %v922 = vadd.f32 0.0, %v921
      %v923 = vpop.f32.mrb[0].mxu0
      %924 = vmatprep.mubr.f32.mxu0 0.0
      %925 = vmatmul.mubr.f32.gmra.mrb[0].mxu0 %v832
      %v926 = vpop.f32.mrb[0].mxu0
      %v927 = vadd.f32 0.0, %v926
      %v928 = vpop.f32.mrb[0].mxu0
      %929 = vmatprep.mubr.f32.mxu0 0.0
      %930 = vmatmul.mubr.f32.gmra.mrb[0].mxu0 %v834
      %v931 = vpop.f32.mrb[0].mxu0
      %v932 = vadd.f32 0.0, %v931
      %v933 = vpop.f32.mrb[0].mxu0
      %934 = vmatprep.mubr.f32.mxu0 0.0
      %935 = vmatmul.mubr.f32.gmra.mrb[0].mxu0 %v836
      %v936 = vpop.f32.mrb[0].mxu0
      %v937 = vadd.f32 0.0, %v936
      %v938 = vpop.f32.mrb[0].mxu0
      %939 = vmatprep.mubr.f32.mxu0 0.0
      %940 = vmatmul.mubr.f32.gmra.mrb[0].mxu0 %v838
      %v941 = vpop.f32.mrb[0].mxu0
      %v942 = vadd.f32 0.0, %v941
      %v943 = vpop.f32.mrb[0].mxu0
      %944 = vmatprep.mubr.f32.mxu0 0.0
      %945 = vmatmul.mubr.f32.gmra.mrb[0].mxu0 %v840
      %v946 = vpop.f32.mrb[0].mxu0
      %v947 = vadd.f32 0.0, %v946
      %v948 = vpop.f32.mrb[0].mxu0
      %949 = vdwg.mxu0
      %v950 = vadd.f32 %v800, %v912
      %v951 = vadd.f32 %v801, %v917
      %v952 = vadd.f32 %v802, %v922
      %v953 = vadd.f32 %v803, %v927
      %v954 = vadd.f32 %v804, %v932
      %v955 = vadd.f32 %v805, %v937
      %v956 = vadd.f32 %v806, %v942
      %v957 = vadd.f32 %v807, %v947
      %v958 = vld [vmem:[%s657 + $0x1] sm:$0xff]
      %v959 = vld [vmem:[%s657 + $0x21] sm:$0xff]
      %v960 = vld [vmem:[%s657 + $0x41] sm:$0xff]
      %v961 = vld [vmem:[%s657 + $0x61] sm:$0xff]
      %v962 = vld [vmem:[%s657 + $0x81] sm:$0xff]
      %v963 = vld [vmem:[%s657 + $0xa1] sm:$0xff]
      %v964 = vld [vmem:[%s657 + $0xc1] sm:$0xff]
      %v965 = vld [vmem:[%s657 + $0xe1] sm:$0xff]
      %s966 = scalar_lea.vmem %s210, 20
      %v967 = vld [vmem:[%s966] sm:$0xf]
      %v969 = vsel %vm257, %v958, 0
      %v972 = vsel %vm257, %v959, 0
      %v975 = vsel %vm257, %v960, 0
      %v978 = vsel %vm257, %v961, 0
      %v981 = vsel %vm257, %v962, 0
      %v984 = vsel %vm257, %v963, 0
      %v987 = vsel %vm257, %v964, 0
      %v990 = vsel %vm257, %v965, 0
      %v993 = vsel %vm274, %v967, 0
      %995 = vmatprep.subr.mxu0 0.0
      %996 = vmatpush1.msra.mxu0 %v993
      %997 = vmatprep.subr.mxu0 0.0
      %998 = vmatpush1.msra.mxu0 0.0
      %999 = vmatprep.subr.mxu0 0.0
      %1000 = vmatpush1.msra.mxu0 0.0
      %1001 = vmatprep.subr.mxu0 0.0
      %1002 = vmatpush1.msra.mxu0 0.0
      %1003 = vmatprep.subr.mxu0 0.0
      %1004 = vmatpush1.msra.mxu0 0.0
      %1005 = vmatprep.subr.mxu0 0.0
      %1006 = vmatpush1.msra.mxu0 0.0
      %1007 = vmatprep.subr.mxu0 0.0
      %1008 = vmatpush1.msra.mxu0 0.0
      %1009 = vmatprep.subr.mxu0 0.0
      %1010 = vmatpush1.msra.mxu0 0.0
      %1011 = vmatprep.subr.mxu0 0.0
      %1012 = vmatpush1.msra.mxu0 0.0
      %1013 = vmatprep.subr.mxu0 0.0
      %1014 = vmatpush1.msra.mxu0 0.0
      %1015 = vmatprep.subr.mxu0 0.0
      %1016 = vmatpush1.msra.mxu0 0.0
      %1017 = vmatprep.subr.mxu0 0.0
      %1018 = vmatpush1.msra.mxu0 0.0
      %1019 = vmatprep.subr.mxu0 0.0
      %1020 = vmatpush1.msra.mxu0 0.0
      %1021 = vmatprep.subr.mxu0 0.0
      %1022 = vmatpush1.msra.mxu0 0.0
      %1023 = vmatprep.subr.mxu0 0.0
      %1024 = vmatpush1.msra.mxu0 0.0
      %1025 = vmatprep.subr.mxu0 0.0
      %1026 = vmatpush1.msra.mxu0 0.0
      %1027 = vmatprep.subr.mxu0 0.0
      %1028 = vmatpush1.msra.mxu0 0.0
      %1029 = vmatprep.subr.mxu0 0.0
      %1030 = vmatpush1.msra.mxu0 0.0
      %1031 = vmatprep.subr.mxu0 0.0
      %1032 = vmatpush1.msra.mxu0 0.0
      %1033 = vmatprep.subr.mxu0 0.0
      %1034 = vmatpush1.msra.mxu0 0.0
      %1035 = vmatprep.subr.mxu0 0.0
      %1036 = vmatpush1.msra.mxu0 0.0
      %1037 = vmatprep.subr.mxu0 0.0
      %1038 = vmatpush1.msra.mxu0 0.0
      %1039 = vmatprep.subr.mxu0 0.0
      %1040 = vmatpush1.msra.mxu0 0.0
      %1041 = vmatprep.subr.mxu0 0.0
      %1042 = vmatpush1.msra.mxu0 0.0
      %1043 = vmatprep.subr.mxu0 0.0
      %1044 = vmatpush1.msra.mxu0 0.0
      %1045 = vmatprep.subr.mxu0 0.0
      %1046 = vmatpush1.msra.mxu0 0.0
      %1047 = vmatprep.subr.mxu0 0.0
      %1048 = vmatpush1.msra.mxu0 0.0
      %1049 = vmatprep.subr.mxu0 0.0
      %1050 = vmatpush1.msra.mxu0 0.0
      %1051 = vmatprep.subr.mxu0 0.0
      %1052 = vmatpush1.msra.mxu0 0.0
      %1053 = vmatprep.subr.mxu0 0.0
      %1054 = vmatpush1.msra.mxu0 0.0
      %1055 = vmatprep.subr.mxu0 0.0
      %1056 = vmatpush1.msra.mxu0 0.0
      %1057 = vmatprep.subr.mxu0 0.0
      %1058 = vmatpush1.msra.mxu0 0.0
      %1059 = vmatprep.mubr.f32.mxu0 0.0
      %1060 = vmatmul.mubr.f32.gmra.mrb[0].mxu0 %v969
      %v1061 = vpop.f32.mrb[0].mxu0
      %v1062 = vadd.f32 0.0, %v1061
      %v1063 = vpop.f32.mrb[0].mxu0
      %1064 = vmatprep.mubr.f32.mxu0 0.0
      %1065 = vmatmul.mubr.f32.gmra.mrb[0].mxu0 %v972
      %v1066 = vpop.f32.mrb[0].mxu0
      %v1067 = vadd.f32 0.0, %v1066
      %v1068 = vpop.f32.mrb[0].mxu0
      %1069 = vmatprep.mubr.f32.mxu0 0.0
      %1070 = vmatmul.mubr.f32.gmra.mrb[0].mxu0 %v975
      %v1071 = vpop.f32.mrb[0].mxu0
      %v1072 = vadd.f32 0.0, %v1071
      %v1073 = vpop.f32.mrb[0].mxu0
      %1074 = vmatprep.mubr.f32.mxu0 0.0
      %1075 = vmatmul.mubr.f32.gmra.mrb[0].mxu0 %v978
      %v1076 = vpop.f32.mrb[0].mxu0
      %v1077 = vadd.f32 0.0, %v1076
      %v1078 = vpop.f32.mrb[0].mxu0
      %1079 = vmatprep.mubr.f32.mxu0 0.0
      %1080 = vmatmul.mubr.f32.gmra.mrb[0].mxu0 %v981
      %v1081 = vpop.f32.mrb[0].mxu0
      %v1082 = vadd.f32 0.0, %v1081
      %v1083 = vpop.f32.mrb[0].mxu0
      %1084 = vmatprep.mubr.f32.mxu0 0.0
      %1085 = vmatmul.mubr.f32.gmra.mrb[0].mxu0 %v984
      %v1086 = vpop.f32.mrb[0].mxu0
      %v1087 = vadd.f32 0.0, %v1086
      %v1088 = vpop.f32.mrb[0].mxu0
      %1089 = vmatprep.mubr.f32.mxu0 0.0
      %1090 = vmatmul.mubr.f32.gmra.mrb[0].mxu0 %v987
      %v1091 = vpop.f32.mrb[0].mxu0
      %v1092 = vadd.f32 0.0, %v1091
      %v1093 = vpop.f32.mrb[0].mxu0
      %1094 = vmatprep.mubr.f32.mxu0 0.0
      %1095 = vmatmul.mubr.f32.gmra.mrb[0].mxu0 %v990
      %v1096 = vpop.f32.mrb[0].mxu0
      %v1097 = vadd.f32 0.0, %v1096
      %v1098 = vpop.f32.mrb[0].mxu0
      %1099 = vdwg.mxu0
      %v1100 = vadd.f32 %v950, %v1062
      %v1101 = vadd.f32 %v951, %v1067
      %v1102 = vadd.f32 %v952, %v1072
      %v1103 = vadd.f32 %v953, %v1077
      %v1104 = vadd.f32 %v954, %v1082
      %v1105 = vadd.f32 %v955, %v1087
      %v1106 = vadd.f32 %v956, %v1092
      %v1107 = vadd.f32 %v957, %v1097
      %s1108 = scalar_lea.vmem %s206, 32
      %v1109 = vld [vmem:[%s1108] sm:$0xff]
      %v1110 = vld [vmem:[%s1108 + $0x20] sm:$0xff]
      %v1111 = vld [vmem:[%s1108 + $0x40] sm:$0xff]
      %v1112 = vld [vmem:[%s1108 + $0x60] sm:$0xff]
      %v1113 = vld [vmem:[%s1108 + $0x80] sm:$0xff]
      %v1114 = vld [vmem:[%s1108 + $0xa0] sm:$0xff]
      %v1115 = vld [vmem:[%s1108 + $0xc0] sm:$0xff]
      %v1116 = vld [vmem:[%s1108 + $0xe0] sm:$0xff]
      %s1117 = scalar_lea.vmem %s210, 24
      %v1118 = vld [vmem:[%s1117] sm:$0xf]
      %v1120 = vsel %vm257, %v1109, 0
      %v1123 = vsel %vm257, %v1110, 0
      %v1126 = vsel %vm257, %v1111, 0
      %v1129 = vsel %vm257, %v1112, 0
      %v1132 = vsel %vm257, %v1113, 0
      %v1135 = vsel %vm257, %v1114, 0
      %v1138 = vsel %vm257, %v1115, 0
      %v1141 = vsel %vm257, %v1116, 0
      %v1144 = vsel %vm274, %v1118, 0
      %1146 = vmatprep.subr.mxu0 0.0
      %1147 = vmatpush1.msra.mxu0 %v1144
      %1148 = vmatprep.subr.mxu0 0.0
      %1149 = vmatpush1.msra.mxu0 0.0
      %1150 = vmatprep.subr.mxu0 0.0
      %1151 = vmatpush1.msra.mxu0 0.0
      %1152 = vmatprep.subr.mxu0 0.0
      %1153 = vmatpush1.msra.mxu0 0.0
      %1154 = vmatprep.subr.mxu0 0.0
      %1155 = vmatpush1.msra.mxu0 0.0
      %1156 = vmatprep.subr.mxu0 0.0
      %1157 = vmatpush1.msra.mxu0 0.0
      %1158 = vmatprep.subr.mxu0 0.0
      %1159 = vmatpush1.msra.mxu0 0.0
      %1160 = vmatprep.subr.mxu0 0.0
      %1161 = vmatpush1.msra.mxu0 0.0
      %1162 = vmatprep.subr.mxu0 0.0
      %1163 = vmatpush1.msra.mxu0 0.0
      %1164 = vmatprep.subr.mxu0 0.0
      %1165 = vmatpush1.msra.mxu0 0.0
      %1166 = vmatprep.subr.mxu0 0.0
      %1167 = vmatpush1.msra.mxu0 0.0
      %1168 = vmatprep.subr.mxu0 0.0
      %1169 = vmatpush1.msra.mxu0 0.0
      %1170 = vmatprep.subr.mxu0 0.0
      %1171 = vmatpush1.msra.mxu0 0.0
      %1172 = vmatprep.subr.mxu0 0.0
      %1173 = vmatpush1.msra.mxu0 0.0
      %1174 = vmatprep.subr.mxu0 0.0
      %1175 = vmatpush1.msra.mxu0 0.0
      %1176 = vmatprep.subr.mxu0 0.0
      %1177 = vmatpush1.msra.mxu0 0.0
      %1178 = vmatprep.subr.mxu0 0.0
      %1179 = vmatpush1.msra.mxu0 0.0
      %1180 = vmatprep.subr.mxu0 0.0
      %1181 = vmatpush1.msra.mxu0 0.0
      %1182 = vmatprep.subr.mxu0 0.0
      %1183 = vmatpush1.msra.mxu0 0.0
      %1184 = vmatprep.subr.mxu0 0.0
      %1185 = vmatpush1.msra.mxu0 0.0
      %1186 = vmatprep.subr.mxu0 0.0
      %1187 = vmatpush1.msra.mxu0 0.0
      %1188 = vmatprep.subr.mxu0 0.0
      %1189 = vmatpush1.msra.mxu0 0.0
      %1190 = vmatprep.subr.mxu0 0.0
      %1191 = vmatpush1.msra.mxu0 0.0
      %1192 = vmatprep.subr.mxu0 0.0
      %1193 = vmatpush1.msra.mxu0 0.0
      %1194 = vmatprep.subr.mxu0 0.0
      %1195 = vmatpush1.msra.mxu0 0.0
      %1196 = vmatprep.subr.mxu0 0.0
      %1197 = vmatpush1.msra.mxu0 0.0
      %1198 = vmatprep.subr.mxu0 0.0
      %1199 = vmatpush1.msra.mxu0 0.0
      %1200 = vmatprep.subr.mxu0 0.0
      %1201 = vmatpush1.msra.mxu0 0.0
      %1202 = vmatprep.subr.mxu0 0.0
      %1203 = vmatpush1.msra.mxu0 0.0
      %1204 = vmatprep.subr.mxu0 0.0
      %1205 = vmatpush1.msra.mxu0 0.0
      %1206 = vmatprep.subr.mxu0 0.0
      %1207 = vmatpush1.msra.mxu0 0.0
      %1208 = vmatprep.subr.mxu0 0.0
      %1209 = vmatpush1.msra.mxu0 0.0
      %1210 = vmatprep.mubr.f32.mxu0 0.0
      %1211 = vmatmul.mubr.f32.gmra.mrb[0].mxu0 %v1120
      %v1212 = vpop.f32.mrb[0].mxu0
      %v1213 = vadd.f32 0.0, %v1212
      %v1214 = vpop.f32.mrb[0].mxu0
      %1215 = vmatprep.mubr.f32.mxu0 0.0
      %1216 = vmatmul.mubr.f32.gmra.mrb[0].mxu0 %v1123
      %v1217 = vpop.f32.mrb[0].mxu0
      %v1218 = vadd.f32 0.0, %v1217
      %v1219 = vpop.f32.mrb[0].mxu0
      %1220 = vmatprep.mubr.f32.mxu0 0.0
      %1221 = vmatmul.mubr.f32.gmra.mrb[0].mxu0 %v1126
      %v1222 = vpop.f32.mrb[0].mxu0
      %v1223 = vadd.f32 0.0, %v1222
      %v1224 = vpop.f32.mrb[0].mxu0
      %1225 = vmatprep.mubr.f32.mxu0 0.0
      %1226 = vmatmul.mubr.f32.gmra.mrb[0].mxu0 %v1129
      %v1227 = vpop.f32.mrb[0].mxu0
      %v1228 = vadd.f32 0.0, %v1227
      %v1229 = vpop.f32.mrb[0].mxu0
      %1230 = vmatprep.mubr.f32.mxu0 0.0
      %1231 = vmatmul.mubr.f32.gmra.mrb[0].mxu0 %v1132
      %v1232 = vpop.f32.mrb[0].mxu0
      %v1233 = vadd.f32 0.0, %v1232
      %v1234 = vpop.f32.mrb[0].mxu0
      %1235 = vmatprep.mubr.f32.mxu0 0.0
      %1236 = vmatmul.mubr.f32.gmra.mrb[0].mxu0 %v1135
      %v1237 = vpop.f32.mrb[0].mxu0
      %v1238 = vadd.f32 0.0, %v1237
      %v1239 = vpop.f32.mrb[0].mxu0
      %1240 = vmatprep.mubr.f32.mxu0 0.0
      %1241 = vmatmul.mubr.f32.gmra.mrb[0].mxu0 %v1138
      %v1242 = vpop.f32.mrb[0].mxu0
      %v1243 = vadd.f32 0.0, %v1242
      %v1244 = vpop.f32.mrb[0].mxu0
      %1245 = vmatprep.mubr.f32.mxu0 0.0
      %1246 = vmatmul.mubr.f32.gmra.mrb[0].mxu0 %v1141
      %v1247 = vpop.f32.mrb[0].mxu0
      %v1248 = vadd.f32 0.0, %v1247
      %v1249 = vpop.f32.mrb[0].mxu0
      %1250 = vdwg.mxu0
      %v1251 = vadd.f32 %v1100, %v1213
      %v1252 = vadd.f32 %v1101, %v1218
      %v1253 = vadd.f32 %v1102, %v1223
      %v1254 = vadd.f32 %v1103, %v1228
      %v1255 = vadd.f32 %v1104, %v1233
      %v1256 = vadd.f32 %v1105, %v1238
      %v1257 = vadd.f32 %v1106, %v1243
      %v1258 = vadd.f32 %v1107, %v1248
      %s1259 = scalar_lea.vmem %s210, 28
      %v1260 = vld [vmem:[%s1259] sm:$0xf]
      %1261 = vrot.lane.b32.xlu0 %v1109, 124
      %v1262 = vpop.permute.xlu0 %1261
      %1263 = vrot.lane.b32.xlu0 %v1110, 124
      %v1264 = vpop.permute.xlu0 %1263
      %1265 = vrot.lane.b32.xlu0 %v1111, 124
      %v1266 = vpop.permute.xlu0 %1265
      %1267 = vrot.lane.b32.xlu0 %v1112, 124
      %v1268 = vpop.permute.xlu0 %1267
      %1269 = vrot.lane.b32.xlu0 %v1113, 124
      %v1270 = vpop.permute.xlu0 %1269
      %1271 = vrot.lane.b32.xlu0 %v1114, 124
      %v1272 = vpop.permute.xlu0 %1271
      %1273 = vrot.lane.b32.xlu0 %v1115, 124
      %v1274 = vpop.permute.xlu0 %1273
      %1275 = vrot.lane.b32.xlu0 %v1116, 124
      %v1276 = vpop.permute.xlu0 %1275
      %v1277 = vsel %vm257, %v1262, 0
      %v1279 = vsel %vm257, %v1264, 0
      %v1281 = vsel %vm257, %v1266, 0
      %v1283 = vsel %vm257, %v1268, 0
      %v1285 = vsel %vm257, %v1270, 0
      %v1287 = vsel %vm257, %v1272, 0
      %v1289 = vsel %vm257, %v1274, 0
      %v1291 = vsel %vm257, %v1276, 0
      %v1294 = vsel %vm274, %v1260, 0
      %1296 = vmatprep.subr.mxu0 0.0
      %1297 = vmatpush1.msra.mxu0 %v1294
      %1298 = vmatprep.subr.mxu0 0.0
      %1299 = vmatpush1.msra.mxu0 0.0
      %1300 = vmatprep.subr.mxu0 0.0
      %1301 = vmatpush1.msra.mxu0 0.0
      %1302 = vmatprep.subr.mxu0 0.0
      %1303 = vmatpush1.msra.mxu0 0.0
      %1304 = vmatprep.subr.mxu0 0.0
      %1305 = vmatpush1.msra.mxu0 0.0
      %1306 = vmatprep.subr.mxu0 0.0
      %1307 = vmatpush1.msra.mxu0 0.0
      %1308 = vmatprep.subr.mxu0 0.0
      %1309 = vmatpush1.msra.mxu0 0.0
      %1310 = vmatprep.subr.mxu0 0.0
      %1311 = vmatpush1.msra.mxu0 0.0
      %1312 = vmatprep.subr.mxu0 0.0
      %1313 = vmatpush1.msra.mxu0 0.0
      %1314 = vmatprep.subr.mxu0 0.0
      %1315 = vmatpush1.msra.mxu0 0.0
      %1316 = vmatprep.subr.mxu0 0.0
      %1317 = vmatpush1.msra.mxu0 0.0
      %1318 = vmatprep.subr.mxu0 0.0
      %1319 = vmatpush1.msra.mxu0 0.0
      %1320 = vmatprep.subr.mxu0 0.0
      %1321 = vmatpush1.msra.mxu0 0.0
      %1322 = vmatprep.subr.mxu0 0.0
      %1323 = vmatpush1.msra.mxu0 0.0
      %1324 = vmatprep.subr.mxu0 0.0
      %1325 = vmatpush1.msra.mxu0 0.0
      %1326 = vmatprep.subr.mxu0 0.0
      %1327 = vmatpush1.msra.mxu0 0.0
      %1328 = vmatprep.subr.mxu0 0.0
      %1329 = vmatpush1.msra.mxu0 0.0
      %1330 = vmatprep.subr.mxu0 0.0
      %1331 = vmatpush1.msra.mxu0 0.0
      %1332 = vmatprep.subr.mxu0 0.0
      %1333 = vmatpush1.msra.mxu0 0.0
      %1334 = vmatprep.subr.mxu0 0.0
      %1335 = vmatpush1.msra.mxu0 0.0
      %1336 = vmatprep.subr.mxu0 0.0
      %1337 = vmatpush1.msra.mxu0 0.0
      %1338 = vmatprep.subr.mxu0 0.0
      %1339 = vmatpush1.msra.mxu0 0.0
      %1340 = vmatprep.subr.mxu0 0.0
      %1341 = vmatpush1.msra.mxu0 0.0
      %1342 = vmatprep.subr.mxu0 0.0
      %1343 = vmatpush1.msra.mxu0 0.0
      %1344 = vmatprep.subr.mxu0 0.0
      %1345 = vmatpush1.msra.mxu0 0.0
      %1346 = vmatprep.subr.mxu0 0.0
      %1347 = vmatpush1.msra.mxu0 0.0
      %1348 = vmatprep.subr.mxu0 0.0
      %1349 = vmatpush1.msra.mxu0 0.0
      %1350 = vmatprep.subr.mxu0 0.0
      %1351 = vmatpush1.msra.mxu0 0.0
      %1352 = vmatprep.subr.mxu0 0.0
      %1353 = vmatpush1.msra.mxu0 0.0
      %1354 = vmatprep.subr.mxu0 0.0
      %1355 = vmatpush1.msra.mxu0 0.0
      %1356 = vmatprep.subr.mxu0 0.0
      %1357 = vmatpush1.msra.mxu0 0.0
      %1358 = vmatprep.subr.mxu0 0.0
      %1359 = vmatpush1.msra.mxu0 0.0
      %1360 = vmatprep.mubr.f32.mxu0 0.0
      %1361 = vmatmul.mubr.f32.gmra.mrb[0].mxu0 %v1277
      %v1362 = vpop.f32.mrb[0].mxu0
      %v1363 = vadd.f32 0.0, %v1362
      %v1364 = vpop.f32.mrb[0].mxu0
      %1365 = vmatprep.mubr.f32.mxu0 0.0
      %1366 = vmatmul.mubr.f32.gmra.mrb[0].mxu0 %v1279
      %v1367 = vpop.f32.mrb[0].mxu0
      %v1368 = vadd.f32 0.0, %v1367
      %v1369 = vpop.f32.mrb[0].mxu0
      %1370 = vmatprep.mubr.f32.mxu0 0.0
      %1371 = vmatmul.mubr.f32.gmra.mrb[0].mxu0 %v1281
      %v1372 = vpop.f32.mrb[0].mxu0
      %v1373 = vadd.f32 0.0, %v1372
      %v1374 = vpop.f32.mrb[0].mxu0
      %1375 = vmatprep.mubr.f32.mxu0 0.0
      %1376 = vmatmul.mubr.f32.gmra.mrb[0].mxu0 %v1283
      %v1377 = vpop.f32.mrb[0].mxu0
      %v1378 = vadd.f32 0.0, %v1377
      %v1379 = vpop.f32.mrb[0].mxu0
      %1380 = vmatprep.mubr.f32.mxu0 0.0
      %1381 = vmatmul.mubr.f32.gmra.mrb[0].mxu0 %v1285
      %v1382 = vpop.f32.mrb[0].mxu0
      %v1383 = vadd.f32 0.0, %v1382
      %v1384 = vpop.f32.mrb[0].mxu0
      %1385 = vmatprep.mubr.f32.mxu0 0.0
      %1386 = vmatmul.mubr.f32.gmra.mrb[0].mxu0 %v1287
      %v1387 = vpop.f32.mrb[0].mxu0
      %v1388 = vadd.f32 0.0, %v1387
      %v1389 = vpop.f32.mrb[0].mxu0
      %1390 = vmatprep.mubr.f32.mxu0 0.0
      %1391 = vmatmul.mubr.f32.gmra.mrb[0].mxu0 %v1289
      %v1392 = vpop.f32.mrb[0].mxu0
      %v1393 = vadd.f32 0.0, %v1392
      %v1394 = vpop.f32.mrb[0].mxu0
      %1395 = vmatprep.mubr.f32.mxu0 0.0
      %1396 = vmatmul.mubr.f32.gmra.mrb[0].mxu0 %v1291
      %v1397 = vpop.f32.mrb[0].mxu0
      %v1398 = vadd.f32 0.0, %v1397
      %v1399 = vpop.f32.mrb[0].mxu0
      %1400 = vdwg.mxu0
      %v1401 = vadd.f32 %v1251, %v1363
      %v1402 = vadd.f32 %v1252, %v1368
      %v1403 = vadd.f32 %v1253, %v1373
      %v1404 = vadd.f32 %v1254, %v1378
      %v1405 = vadd.f32 %v1255, %v1383
      %v1406 = vadd.f32 %v1256, %v1388
      %v1407 = vadd.f32 %v1257, %v1393
      %v1408 = vadd.f32 %v1258, %v1398
      %v1409 = vld [vmem:[%s1108 + $0x1] sm:$0xff]
      %v1410 = vld [vmem:[%s1108 + $0x21] sm:$0xff]
      %v1411 = vld [vmem:[%s1108 + $0x41] sm:$0xff]
      %v1412 = vld [vmem:[%s1108 + $0x61] sm:$0xff]
      %v1413 = vld [vmem:[%s1108 + $0x81] sm:$0xff]
      %v1414 = vld [vmem:[%s1108 + $0xa1] sm:$0xff]
      %v1415 = vld [vmem:[%s1108 + $0xc1] sm:$0xff]
      %v1416 = vld [vmem:[%s1108 + $0xe1] sm:$0xff]
      %s1417 = scalar_lea.vmem %s210, 32
      %v1418 = vld [vmem:[%s1417] sm:$0xf]
      %v1420 = vsel %vm257, %v1409, 0
      %v1423 = vsel %vm257, %v1410, 0
      %v1426 = vsel %vm257, %v1411, 0
      %v1429 = vsel %vm257, %v1412, 0
      %v1432 = vsel %vm257, %v1413, 0
      %v1435 = vsel %vm257, %v1414, 0
      %v1438 = vsel %vm257, %v1415, 0
      %v1441 = vsel %vm257, %v1416, 0
      %v1444 = vsel %vm274, %v1418, 0
      %1446 = vmatprep.subr.mxu0 0.0
      %1447 = vmatpush1.msra.mxu0 %v1444
      %1448 = vmatprep.subr.mxu0 0.0
      %1449 = vmatpush1.msra.mxu0 0.0
      %1450 = vmatprep.subr.mxu0 0.0
      %1451 = vmatpush1.msra.mxu0 0.0
      %1452 = vmatprep.subr.mxu0 0.0
      %1453 = vmatpush1.msra.mxu0 0.0
      %1454 = vmatprep.subr.mxu0 0.0
      %1455 = vmatpush1.msra.mxu0 0.0
      %1456 = vmatprep.subr.mxu0 0.0
      %1457 = vmatpush1.msra.mxu0 0.0
      %1458 = vmatprep.subr.mxu0 0.0
      %1459 = vmatpush1.msra.mxu0 0.0
      %1460 = vmatprep.subr.mxu0 0.0
      %1461 = vmatpush1.msra.mxu0 0.0
      %1462 = vmatprep.subr.mxu0 0.0
      %1463 = vmatpush1.msra.mxu0 0.0
      %1464 = vmatprep.subr.mxu0 0.0
      %1465 = vmatpush1.msra.mxu0 0.0
      %1466 = vmatprep.subr.mxu0 0.0
      %1467 = vmatpush1.msra.mxu0 0.0
      %1468 = vmatprep.subr.mxu0 0.0
      %1469 = vmatpush1.msra.mxu0 0.0
      %1470 = vmatprep.subr.mxu0 0.0
      %1471 = vmatpush1.msra.mxu0 0.0
      %1472 = vmatprep.subr.mxu0 0.0
      %1473 = vmatpush1.msra.mxu0 0.0
      %1474 = vmatprep.subr.mxu0 0.0
      %1475 = vmatpush1.msra.mxu0 0.0
      %1476 = vmatprep.subr.mxu0 0.0
      %1477 = vmatpush1.msra.mxu0 0.0
      %1478 = vmatprep.subr.mxu0 0.0
      %1479 = vmatpush1.msra.mxu0 0.0
      %1480 = vmatprep.subr.mxu0 0.0
      %1481 = vmatpush1.msra.mxu0 0.0
      %1482 = vmatprep.subr.mxu0 0.0
      %1483 = vmatpush1.msra.mxu0 0.0
      %1484 = vmatprep.subr.mxu0 0.0
      %1485 = vmatpush1.msra.mxu0 0.0
      %1486 = vmatprep.subr.mxu0 0.0
      %1487 = vmatpush1.msra.mxu0 0.0
      %1488 = vmatprep.subr.mxu0 0.0
      %1489 = vmatpush1.msra.mxu0 0.0
      %1490 = vmatprep.subr.mxu0 0.0
      %1491 = vmatpush1.msra.mxu0 0.0
      %1492 = vmatprep.subr.mxu0 0.0
      %1493 = vmatpush1.msra.mxu0 0.0
      %1494 = vmatprep.subr.mxu0 0.0
      %1495 = vmatpush1.msra.mxu0 0.0
      %1496 = vmatprep.subr.mxu0 0.0
      %1497 = vmatpush1.msra.mxu0 0.0
      %1498 = vmatprep.subr.mxu0 0.0
      %1499 = vmatpush1.msra.mxu0 0.0
      %1500 = vmatprep.subr.mxu0 0.0
      %1501 = vmatpush1.msra.mxu0 0.0
      %1502 = vmatprep.subr.mxu0 0.0
      %1503 = vmatpush1.msra.mxu0 0.0
      %1504 = vmatprep.subr.mxu0 0.0
      %1505 = vmatpush1.msra.mxu0 0.0
      %1506 = vmatprep.subr.mxu0 0.0
      %1507 = vmatpush1.msra.mxu0 0.0
      %1508 = vmatprep.subr.mxu0 0.0
      %1509 = vmatpush1.msra.mxu0 0.0
      %1510 = vmatprep.mubr.f32.mxu0 0.0
      %1511 = vmatmul.mubr.f32.gmra.mrb[0].mxu0 %v1420
      %v1512 = vpop.f32.mrb[0].mxu0
      %v1513 = vadd.f32 0.0, %v1512
      %v1514 = vpop.f32.mrb[0].mxu0
      %1515 = vmatprep.mubr.f32.mxu0 0.0
      %1516 = vmatmul.mubr.f32.gmra.mrb[0].mxu0 %v1423
      %v1517 = vpop.f32.mrb[0].mxu0
      %v1518 = vadd.f32 0.0, %v1517
      %v1519 = vpop.f32.mrb[0].mxu0
      %1520 = vmatprep.mubr.f32.mxu0 0.0
      %1521 = vmatmul.mubr.f32.gmra.mrb[0].mxu0 %v1426
      %v1522 = vpop.f32.mrb[0].mxu0
      %v1523 = vadd.f32 0.0, %v1522
      %v1524 = vpop.f32.mrb[0].mxu0
      %1525 = vmatprep.mubr.f32.mxu0 0.0
      %1526 = vmatmul.mubr.f32.gmra.mrb[0].mxu0 %v1429
      %v1527 = vpop.f32.mrb[0].mxu0
      %v1528 = vadd.f32 0.0, %v1527
      %v1529 = vpop.f32.mrb[0].mxu0
      %1530 = vmatprep.mubr.f32.mxu0 0.0
      %1531 = vmatmul.mubr.f32.gmra.mrb[0].mxu0 %v1432
      %v1532 = vpop.f32.mrb[0].mxu0
      %v1533 = vadd.f32 0.0, %v1532
      %v1534 = vpop.f32.mrb[0].mxu0
      %1535 = vmatprep.mubr.f32.mxu0 0.0
      %1536 = vmatmul.mubr.f32.gmra.mrb[0].mxu0 %v1435
      %v1537 = vpop.f32.mrb[0].mxu0
      %v1538 = vadd.f32 0.0, %v1537
      %v1539 = vpop.f32.mrb[0].mxu0
      %1540 = vmatprep.mubr.f32.mxu0 0.0
      %1541 = vmatmul.mubr.f32.gmra.mrb[0].mxu0 %v1438
      %v1542 = vpop.f32.mrb[0].mxu0
      %v1543 = vadd.f32 0.0, %v1542
      %v1544 = vpop.f32.mrb[0].mxu0
      %1545 = vmatprep.mubr.f32.mxu0 0.0
      %1546 = vmatmul.mubr.f32.gmra.mrb[0].mxu0 %v1441
      %v1547 = vpop.f32.mrb[0].mxu0
      %v1548 = vadd.f32 0.0, %v1547
      %v1549 = vpop.f32.mrb[0].mxu0
      %1550 = vdwg.mxu0
      %v1551 = vadd.f32 %v1401, %v1513
      %v1552 = vadd.f32 %v1402, %v1518
      %v1553 = vadd.f32 %v1403, %v1523
      %v1554 = vadd.f32 %v1404, %v1528
      %v1555 = vadd.f32 %v1405, %v1533
      %v1556 = vadd.f32 %v1406, %v1538
      %v1557 = vadd.f32 %v1407, %v1543
      %v1558 = vadd.f32 %v1408, %v1548
      %v1559 = vld [vmem:[%s213] sm:$0x1]
      %v1561 = vlaneseq
      %v1562 = vshrl.u32 %v1561, 7
      %v1563 = vsub.s32 0, %v1562
      %v1564 = vrot.slane %v1559, %v1563
      %v1566 = vadd.f32 %v1551, %v1564
      %v1567 = vadd.f32 %v1552, %v1564
      %v1568 = vadd.f32 %v1553, %v1564
      %v1569 = vadd.f32 %v1554, %v1564
      %v1570 = vadd.f32 %v1555, %v1564
      %v1571 = vadd.f32 %v1556, %v1564
      %v1572 = vadd.f32 %v1557, %v1564
      %v1573 = vadd.f32 %v1558, %v1564
      %v1574 = vmax.f32 %v1566, 0.0
      %v1575 = vmax.f32 %v1567, 0.0
      %v1576 = vmax.f32 %v1568, 0.0
      %v1577 = vmax.f32 %v1569, 0.0
      %v1578 = vmax.f32 %v1570, 0.0
      %v1579 = vmax.f32 %v1571, 0.0
      %v1580 = vmax.f32 %v1572, 0.0
      %v1581 = vmax.f32 %v1573, 0.0
      %1582 = vst.msk [vmem:[%s221] sm:$0xff] %vm257, %v1574
      %1583 = vst.msk [vmem:[%s221 + $0x8] sm:$0xff] %vm257, %v1575
      %1584 = vst.msk [vmem:[%s221 + $0x10] sm:$0xff] %vm257, %v1576
      %1585 = vst.msk [vmem:[%s221 + $0x18] sm:$0xff] %vm257, %v1577
      %1586 = vst.msk [vmem:[%s221 + $0x20] sm:$0xff] %vm257, %v1578
      %1587 = vst.msk [vmem:[%s221 + $0x28] sm:$0xff] %vm257, %v1579
      %1588 = vst.msk [vmem:[%s221 + $0x30] sm:$0xff] %vm257, %v1580
      %1589 = vst.msk [vmem:[%s221 + $0x38] sm:$0xff] %vm257, %v1581
      %p1590 = scmp.lt.s32.totalorder %s18, 1
      %s1591 = scalar_select %p1590, %s18, 1
      %p1592 = scmp.lt.s32.totalorder %s19, 0
      %s1593 = scalar_select %p1592, %s19, 0
      %s1594 = smul.addr %s1591, 8
      %s1595 = sadd.s32 %s1593, %s1594
      %s1596 = smul.addr %s1595, 8
      %s1597 = scalar_lea.vmem %s3, %s1596
      // Predicated region
      $region33: #{bottleneck_forward.5} parent=31 // pred_check
        %p1598 = pneg %p124
      $region34: #{bottleneck_forward.5} parent=31 // pred_check_branch
        %1600 = sbr.rel (%p1598) target = $region36
      $region35: #{bottleneck_forward.5} parent=31 // pred_region
        _
      $region36: #{bottleneck_forward.5} parent=31 // pred_fallthru
        _
    $region32: #{bottleneck_forward.5} parent=5 // pred_fallthru
      _
    %p1601 = scmp.le.s32.totalorder 2, %s9
    // Predicated region
    $region37: #{bottleneck_forward.5} parent=5 // pred_check
      %p1602 = pneg %p1601
    $region38: #{bottleneck_forward.5} parent=5 // pred_check_branch
      %1604 = sbr.rel (%p1602) target = $region40
    $region39: #{bottleneck_forward.5} parent=5 // pred_region
      %s1605 = ssub.s32 %s9, 2
      // Predicated region
      $region41: #{bottleneck_forward.5} parent=39 // pred_check
        %p1606 = pneg %p130
      $region42: #{bottleneck_forward.5} parent=39 // pred_check_branch
        %1608 = sbr.rel (%p1606) target = $region44
      $region43: #{bottleneck_forward.5} parent=39 // pred_region
        %p1609 = scmp.lt.s32.totalorder %s20, 1
        %s1610 = scalar_select %p1609, %s20, 1
        %p1611 = scmp.lt.s32.totalorder %s21, 0
        %s1612 = scalar_select %p1611, %s21, 0
        %s1613 = smul.addr %s1610, 8
        %s1614 = sadd.s32 %s1612, %s1613
        %s1615 = smul.addr %s1614, 8
        %s1616 = scalar_lea.vmem %s3, %s1615
      $region44: #{bottleneck_forward.5} parent=39 // pred_fallthru
        _
    $region40: #{bottleneck_forward.5} parent=5 // pred_fallthru
      _
  $region6: #{bottleneck_forward.5} parent=0 // loop_footer
    %s13 = sadd.s32 1, %s9
  $region7: #{bottleneck_forward.5} parent=0 // loop_footer_branch
    %8 = sbr.rel target = $region3
  $region8: #{bottleneck_forward.5} parent=0 // loop_exit
    _

</llo_original>
